<compile_context>
chip_gen: v5e
topology: v5e:2x2
jax: 0.10.0
libtpu: 0.0.40
codegen_flags: <defaults>
</compile_context>

<pallas_src>
import functools

import jax
import jax.numpy as jnp
from jax import lax
from jax.experimental import pallas as pl
from jax.experimental.pallas import tpu as pltpu


# Column origin of the context inside the padded VMEM scratch.  8 keeps the
# per-patch stores sublane-aligned (f32 tile = (8, 128)); the zeroed columns
# PADW-1 and PADW+W act as the 3x3-conv left/right halo.
_CONV_COL_ORIGIN = 8


def _ceil_to(v, m):
    return ((v + m - 1) // m) * m


def _vmem_limit_bytes(H, W, C, scale):
    """Explicit VMEM budget (double-buffered image blocks + halo scratch +
    attention temporaries), with 2x headroom, clamped to sane bounds."""
    lane_c = _ceil_to(C, 128)
    n = (H // scale) * (W // scale)
    img = _ceil_to(H * W, 8) * lane_c * 4
    pad = _ceil_to((H + 2) * (W + 2 * _CONV_COL_ORIGIN), 8) * lane_c * 4
    attn = _ceil_to(n, 8) * _ceil_to(n, 128) * 4
    est = 2 * (2 * img) + pad + 3 * attn + 2 * img
    return int(min(max(2 * est, 16 * 2 ** 20), 96 * 2 ** 20))


# -----------------------------------------------------------------------------
# Fused AGCB_Patch kernel: one grid step == one image.
# -----------------------------------------------------------------------------
def _agcb_fused_kernel(x_ref,
                       gqkv_w_ref, gqkv_b_ref,      # GCA non-local, packed qkv
                       nqkv_w_ref, nqkv_b_ref,      # patch non-local, packed qkv
                       cw_ref, cb_ref,              # folded 3x3 conv (bf16 w, f32 b)
                       gam_ref,                     # [gca_gamma, nl_gamma] (SMEM)
                       o_ref, pad_ref, *, scale):
    H, W, C = x_ref.shape
    ph, pw = H // scale, W // scale
    n = ph * pw
    PADW = _CONV_COL_ORIGIN
    Wp = W + 2 * PADW

    g_gca = gam_ref[0]          # GCA_Channel.non_local_att.gamma
    g_nl = gam_ref[1]           # AGCB_Patch.non_local.gamma

    def non_local(feat, wqkv_ref, bqkv_ref, gamma):
        # feat: [N, C] f32.  One fused qkv matmul, bf16 operands, f32 accum.
        ci = (wqkv_ref.shape[1] - C) // 2
        fb = feat.astype(jnp.bfloat16)
        qkv = jnp.dot(fb, wqkv_ref[...], preferred_element_type=jnp.float32)
        qkv = qkv + bqkv_ref[...]
        q = qkv[:, :ci].astype(jnp.bfloat16)
        k = qkv[:, ci:2 * ci].astype(jnp.bfloat16)
        v = qkv[:, 2 * ci:].astype(jnp.bfloat16)
        # energy[i, j] = q_i . k_j
        energy = lax.dot_general(q, k, (((1,), (1,)), ((), ())),
                                 preferred_element_type=jnp.float32)   # [N, N]
        energy = energy - jnp.max(energy, axis=-1, keepdims=True)
        p = jnp.exp(energy)
        denom = jnp.sum(p, axis=-1, keepdims=True)
        r = pl.reciprocal(denom, approx=True)      # EUP slot
        r = r * (2.0 - denom * r)                  # one Newton step -> ~exact
        attn = (p * r).astype(jnp.bfloat16)
        out = jnp.dot(attn, v, preferred_element_type=jnp.float32)     # [N, C]
        return gamma * out + feat

    # --- GCA_Channel ('origin'): adaptive max pool -> non-local -> sigmoid ---
    pooled_rows = []
    for i in range(scale):
        for j in range(scale):
            xp = x_ref[i * ph:(i + 1) * ph, j * pw:(j + 1) * pw, :]
            pooled_rows.append(jnp.max(xp.reshape(n, C), axis=0, keepdims=True))
    pooled = jnp.concatenate(pooled_rows, axis=0)                      # [s*s, C]
    gca = jax.nn.sigmoid(non_local(pooled, gqkv_w_ref, gqkv_b_ref, g_gca))

    # --- zero ONLY the conv halo of the scratch (interior fully overwritten) ---
    zrow = jnp.zeros((1, Wp, C), jnp.float32)
    pad_ref[0:1, :, :] = zrow
    pad_ref[H + 1:H + 2, :, :] = zrow
    zcol = jnp.zeros((H, PADW, C), jnp.float32)
    pad_ref[1:H + 1, 0:PADW, :] = zcol
    pad_ref[1:H + 1, PADW + W:Wp, :] = zcol

    # --- patch-wise non-local scaled by gca[i, j]; store straight into the
    #     halo-carrying scratch at sublane-aligned offsets.
    for i in range(scale):
        for j in range(scale):
            xp = x_ref[i * ph:(i + 1) * ph, j * pw:(j + 1) * pw, :].reshape(n, C)
            ctx = non_local(xp, nqkv_w_ref, nqkv_b_ref, g_nl)
            ctx = ctx * gca[i * scale + j:i * scale + j + 1, :]        # [n, C]
            pad_ref[1 + i * ph:1 + (i + 1) * ph,
                    PADW + j * pw:PADW + (j + 1) * pw, :] = ctx.reshape(ph, pw, C)

    # --- 3x3 conv (BN + output gamma folded into weights) + residual + ReLU ---
    # W-axis (sublane) shifts via pltpu.roll so every window slice is aligned;
    # each rolled slab is reused for 3 dh taps (dh slices are free).
    acc = None
    for dw in range(3):
        if dw == 1:
            src = pad_ref                                   # aligned, no shift
        else:
            src = pltpu.roll(pad_ref[...], shift=(1 - dw) % Wp, axis=1)
        for dh in range(3):
            win = src[dh:dh + H, PADW:PADW + W, :].reshape(H * W, C)
            t = jnp.dot(win.astype(jnp.bfloat16), cw_ref[dh * 3 + dw],
                        preferred_element_type=jnp.float32)
            acc = t if acc is None else acc + t

    resid = x_ref[...].reshape(H * W, C)
    out = jnp.maximum(acc + cb_ref[...] + resid, 0.0)
    o_ref[...] = out.reshape(H, W, C)


# -----------------------------------------------------------------------------
# Public wrapper: NCHW in / NCHW out, one fused pallas_call.
# -----------------------------------------------------------------------------
def agcb_patch_forward(x_nchw, params, scale):
    x = jnp.transpose(x_nchw, (0, 2, 3, 1)).astype(jnp.float32)        # NHWC
    B, H, W, C = x.shape
    assert H % scale == 0 and W % scale == 0
    # NOTE: if (W // scale) % 8 != 0 the kernel is still correct but the ctx
    # stores / reshapes become sublane-misaligned (slower).

    gca_p, nl_p = params['gca_nl'], params['nl']

    def pack_qkv(p):                       # [wq|wk|wv] -> one [C, 2*Ci+C] matmul
        w = jnp.concatenate([p['wq'], p['wk'], p['wv']], axis=1).astype(jnp.bfloat16)
        b = jnp.concatenate([p['bq'], p['bk'], p['bv']], axis=1).astype(jnp.float32)
        return w, b

    gqkv_w, gqkv_b = pack_qkv(gca_p)
    nqkv_w, nqkv_b = pack_qkv(nl_p)

    # Fold BatchNorm (eval-mode affine) + the output gamma into the conv:
    #   gamma*(bn_s*(conv(ctx)+cb) + bn_b) + x
    #     = conv(ctx) @ (W*bn_s*gamma) + gamma*(cb*bn_s + bn_b) + x
    g_out = params['gamma'][0]
    bn_s = params['bn_scale'][0]                                       # (C,)
    conv_w_f = (params['conv_w'] * (bn_s * g_out)[None, None, :]).astype(jnp.bfloat16)
    conv_b_f = ((params['conv_b'] * params['bn_scale'] + params['bn_shift'])
                * g_out).astype(jnp.float32)                           # (1, C)

    gammas = jnp.concatenate([gca_p['gamma'], nl_p['gamma']]).astype(jnp.float32)  # [2]

    def full(shape):
        return pl.BlockSpec(shape, lambda b: (0,) * len(shape))

    kern = functools.partial(_agcb_fused_kernel, scale=scale)
    out = pl.pallas_call(
        kern,
        out_shape=jax.ShapeDtypeStruct((B, H, W, C), jnp.float32),
        grid=(B,),
        in_specs=[
            pl.BlockSpec((pl.Squeezed(), H, W, C), lambda b: (b, 0, 0, 0)),
            full(gqkv_w.shape), full(gqkv_b.shape),
            full(nqkv_w.shape), full(nqkv_b.shape),
            full(conv_w_f.shape), full(conv_b_f.shape),
            pl.BlockSpec(memory_space=pltpu.MemorySpace.SMEM),
        ],
        out_specs=pl.BlockSpec((pl.Squeezed(), H, W, C), lambda b: (b, 0, 0, 0)),
        scratch_shapes=[
            pltpu.VMEM((H + 2, W + 2 * _CONV_COL_ORIGIN, C), jnp.float32)],
        compiler_params=pltpu.CompilerParams(
            dimension_semantics=("parallel",),
            vmem_limit_bytes=_vmem_limit_bytes(H, W, C, scale)),
    )(x, gqkv_w, gqkv_b, nqkv_w, nqkv_b, conv_w_f, conv_b_f, gammas)
    return jnp.transpose(out, (0, 3, 1, 2))                            # back to NCHW


# -----------------------------------------------------------------------------
# Pure-JAX f32 reference (for correctness check).
# -----------------------------------------------------------------------------
def _nonlocal_ref(x, p):
    q = x @ p['wq'] + p['bq']
    k = x @ p['wk'] + p['bk']
    v = x @ p['wv'] + p['bv']
    attn = jax.nn.softmax(jnp.einsum('bic,bjc->bij', q, k), axis=-1)
    out = jnp.einsum('bij,bjc->bic', attn, v)
    return p['gamma'][0] * out + x


def agcb_ref(x_nchw, params, scale):
    x = jnp.transpose(x_nchw, (0, 2, 3, 1)).astype(jnp.float32)
    B, H, W, C = x.shape
    ph, pw = H // scale, W // scale
    pooled = jnp.max(x.reshape(B, scale, ph, scale, pw, C), axis=(2, 4))
    gca = jax.nn.sigmoid(_nonlocal_ref(pooled.reshape(B, scale * scale, C),
                                       params['gca_nl']))
    xp = x.reshape(B, scale, ph, scale, pw, C)
    xp = jnp.transpose(xp, (0, 1, 3, 2, 4, 5)).reshape(B * scale * scale, ph * pw, C)
    ctx = _nonlocal_ref(xp, params['nl']) * gca.reshape(B * scale * scale, 1, C)
    ctx = ctx.reshape(B, scale, scale, ph, pw, C)
    ctx = jnp.transpose(ctx, (0, 1, 3, 2, 4, 5)).reshape(B, H, W, C)
    xpad = jnp.pad(ctx, ((0, 0), (1, 1), (1, 1), (0, 0)))
    conv = jnp.zeros((B, H, W, C), jnp.float32)
    for dh in range(3):
        for dw in range(3):
            conv = conv + jnp.einsum('bhwc,cd->bhwd',
                                     xpad[:, dh:dh + H, dw:dw + W, :],
                                     params['conv_w'][dh * 3 + dw])
    conv = conv + params['conv_b'].reshape(1, 1, 1, C)
    bn = conv * params['bn_scale'].reshape(1, 1, 1, C) + params['bn_shift'].reshape(1, 1, 1, C)
    out = jnp.maximum(params['gamma'][0] * bn + x, 0.0)
    return jnp.transpose(out, (0, 3, 1, 2))


# -----------------------------------------------------------------------------
# Deterministic parameter init (shapes from the PyTorch __init__).
# gamma params are set nonzero (PyTorch inits them to 0) so the non-local /
# conv paths are actually exercised.
# -----------------------------------------------------------------------------
def init_params(key, C, reduce_ratio_nl):
    Ci = max(C // reduce_ratio_nl, 1)
    ks = list(jax.random.split(key, 16))

    def rn(k, shape, s=0.2):
        return (s * jax.random.normal(k, shape)).astype(jnp.float32)

    def nl_params(keys, gamma_val):
        return dict(
            wq=rn(keys[0], (C, Ci)), bq=rn(keys[1], (1, Ci)),
            wk=rn(keys[2], (C, Ci)), bk=rn(keys[3], (1, Ci)),
            wv=rn(keys[4], (C, C)), bv=rn(keys[5], (1, C)),
            gamma=jnp.array([gamma_val], jnp.float32),
        )

    return dict(
        nl=nl_params(ks[0:6], 0.7),        # AGCB_Patch.non_local
        gca_nl=nl_params(ks[6:12], 0.6),   # GCA_Channel.non_local_att
        conv_w=rn(ks[12], (9, C, C)),      # 3x3 conv, laid out as [dh*3+dw, Cin, Cout]
        conv_b=rn(ks[13], (1, C)),
        bn_scale=(1.0 + rn(ks[14], (1, C), 0.1)).astype(jnp.float32),
        bn_shift=rn(ks[15], (1, C), 0.1),
        gamma=jnp.array([0.5], jnp.float32),  # AGCB_Patch.gamma
    )


if __name__ == "__main__":
    key = jax.random.PRNGKey(0)
    kx, kp = jax.random.split(key)
    B, C, H, W = 2, 4, 16, 16
    scale, reduce_ratio_nl = 2, 2
    x = jax.random.normal(kx, (B, C, H, W), dtype=jnp.float32)
    params = init_params(kp, C, reduce_ratio_nl)

    fwd = jax.jit(agcb_patch_forward, static_argnames=("scale",))
    out = jax.block_until_ready(fwd(x, params, scale=scale))
    ref = agcb_ref(x, params, scale)
    assert out.shape == (B, C, H, W)
    # bf16 MXU operands (f32 accumulation) -> relaxed tolerance vs f32 reference
    err = float(jnp.max(jnp.abs(out - ref)))
    assert jnp.allclose(out, ref, atol=5e-2, rtol=5e-2), err
    print("KERNEL_OK")
</pallas_src>

<mosaic_0001>
module attributes {stable_mosaic.version = 11 : i64} {
  func.func @_agcb_fused_kernel(%arg0: i32, %arg1: memref<1x16x16x4xf32, #tpu.memory_space<vmem>>, %arg2: memref<4x8xbf16, #tpu.memory_space<vmem>>, %arg3: memref<1x8xf32, #tpu.memory_space<vmem>>, %arg4: memref<4x8xbf16, #tpu.memory_space<vmem>>, %arg5: memref<1x8xf32, #tpu.memory_space<vmem>>, %arg6: memref<9x4x4xbf16, #tpu.memory_space<vmem>>, %arg7: memref<1x4xf32, #tpu.memory_space<vmem>>, %arg8: memref<2xf32, #tpu.memory_space<smem>>, %arg9: memref<1x16x16x4xf32, #tpu.memory_space<vmem>>, %arg10: memref<18x32x4xf32, #tpu.memory_space<vmem>>) attributes {dimension_semantics = [#tpu.dimension_semantics<parallel>], iteration_bounds = array<i64: 2>, scalar_prefetch = 0 : i64, scratch_operands = 1 : i64, tpu.core_type = #tpu.core_type<tc>, window_params = [{transform_indices = @transform_0, window_bounds = array<i64: 1, 16, 16, 4>}, {pipeline_mode = #tpu.pipeline_mode<synchronous>, transform_indices = @transform_1, window_bounds = array<i64: 4, 8>}, {pipeline_mode = #tpu.pipeline_mode<synchronous>, transform_indices = @transform_2, window_bounds = array<i64: 1, 8>}, {pipeline_mode = #tpu.pipeline_mode<synchronous>, transform_indices = @transform_3, window_bounds = array<i64: 4, 8>}, {pipeline_mode = #tpu.pipeline_mode<synchronous>, transform_indices = @transform_4, window_bounds = array<i64: 1, 8>}, {pipeline_mode = #tpu.pipeline_mode<synchronous>, transform_indices = @transform_5, window_bounds = array<i64: 9, 4, 4>}, {pipeline_mode = #tpu.pipeline_mode<synchronous>, transform_indices = @transform_6, window_bounds = array<i64: 1, 4>}, {transform_indices = @transform_7, window_bounds = array<i64: 2>}, {transform_indices = @transform_8, window_bounds = array<i64: 1, 16, 16, 4>}]} {
    %c0 = arith.constant 0 : index
    %0 = memref.load %arg8[%c0] : memref<2xf32, #tpu.memory_space<smem>>
    %c1 = arith.constant 1 : index
    %1 = memref.load %arg8[%c1] : memref<2xf32, #tpu.memory_space<smem>>
    %c0_0 = arith.constant 0 : index
    %c0_1 = arith.constant 0 : index
    %c0_2 = arith.constant 0 : index
    %c0_3 = arith.constant 0 : index
    %2 = vector.load %arg1[%c0_0, %c0_1, %c0_2, %c0_3] : memref<1x16x16x4xf32, #tpu.memory_space<vmem>>, vector<1x8x8x4xf32>
    %3 = vector.shape_cast %2 : vector<1x8x8x4xf32> to vector<8x8x4xf32>
    %4 = vector.shape_cast %3 : vector<8x8x4xf32> to vector<64x4xf32>
    %cst = arith.constant dense<0xFF800000> : vector<4xf32>
    %5 = vector.multi_reduction <maximumf>, %4, %cst [0] : vector<64x4xf32> to vector<4xf32>
    %6 = vector.shape_cast %5 : vector<4xf32> to vector<1x4xf32>
    %c0_4 = arith.constant 0 : index
    %c0_5 = arith.constant 0 : index
    %c8 = arith.constant 8 : index
    %c0_6 = arith.constant 0 : index
    %7 = vector.load %arg1[%c0_4, %c0_5, %c8, %c0_6] : memref<1x16x16x4xf32, #tpu.memory_space<vmem>>, vector<1x8x8x4xf32>
    %8 = vector.shape_cast %7 : vector<1x8x8x4xf32> to vector<8x8x4xf32>
    %9 = vector.shape_cast %8 : vector<8x8x4xf32> to vector<64x4xf32>
    %cst_7 = arith.constant dense<0xFF800000> : vector<4xf32>
    %10 = vector.multi_reduction <maximumf>, %9, %cst_7 [0] : vector<64x4xf32> to vector<4xf32>
    %11 = vector.shape_cast %10 : vector<4xf32> to vector<1x4xf32>
    %c0_8 = arith.constant 0 : index
    %c8_9 = arith.constant 8 : index
    %c0_10 = arith.constant 0 : index
    %c0_11 = arith.constant 0 : index
    %12 = vector.load %arg1[%c0_8, %c8_9, %c0_10, %c0_11] : memref<1x16x16x4xf32, #tpu.memory_space<vmem>>, vector<1x8x8x4xf32>
    %13 = vector.shape_cast %12 : vector<1x8x8x4xf32> to vector<8x8x4xf32>
    %14 = vector.shape_cast %13 : vector<8x8x4xf32> to vector<64x4xf32>
    %cst_12 = arith.constant dense<0xFF800000> : vector<4xf32>
    %15 = vector.multi_reduction <maximumf>, %14, %cst_12 [0] : vector<64x4xf32> to vector<4xf32>
    %16 = vector.shape_cast %15 : vector<4xf32> to vector<1x4xf32>
    %c0_13 = arith.constant 0 : index
    %c8_14 = arith.constant 8 : index
    %c8_15 = arith.constant 8 : index
    %c0_16 = arith.constant 0 : index
    %17 = vector.load %arg1[%c0_13, %c8_14, %c8_15, %c0_16] : memref<1x16x16x4xf32, #tpu.memory_space<vmem>>, vector<1x8x8x4xf32>
    %18 = vector.shape_cast %17 : vector<1x8x8x4xf32> to vector<8x8x4xf32>
    %19 = vector.shape_cast %18 : vector<8x8x4xf32> to vector<64x4xf32>
    %cst_17 = arith.constant dense<0xFF800000> : vector<4xf32>
    %20 = vector.multi_reduction <maximumf>, %19, %cst_17 [0] : vector<64x4xf32> to vector<4xf32>
    %21 = vector.shape_cast %20 : vector<4xf32> to vector<1x4xf32>
    %22 = tpu.concatenate %6, %11, %16, %21 in 0 : vector<1x4xf32>, vector<1x4xf32>, vector<1x4xf32>, vector<1x4xf32> -> vector<4x4xf32>
    %23 = arith.truncf %22 : vector<4x4xf32> to vector<4x4xbf16>
    %c0_18 = arith.constant 0 : index
    %c0_19 = arith.constant 0 : index
    %24 = vector.load %arg2[%c0_18, %c0_19] : memref<4x8xbf16, #tpu.memory_space<vmem>>, vector<4x8xbf16>
    %cst_20 = arith.constant dense<0.000000e+00> : vector<4x8xf32>
    %25 = tpu.matmul %23, %24, %cst_20 {dimension_numbers = #tpu.dot_dimension_numbers<[1], [0], [0], [1], [0, 0, 1, 1], [], []>} : vector<4x4xbf16>, vector<4x8xbf16>, vector<4x8xf32> -> vector<4x8xf32>
    %c0_21 = arith.constant 0 : index
    %c0_22 = arith.constant 0 : index
    %26 = vector.load %arg3[%c0_21, %c0_22] : memref<1x8xf32, #tpu.memory_space<vmem>>, vector<1x8xf32>
    %27 = vector.broadcast %26 : vector<1x8xf32> to vector<4x8xf32>
    %28 = arith.addf %25, %27 : vector<4x8xf32>
    %29 = vector.extract_strided_slice %28 {offsets = [0, 0], sizes = [4, 2], strides = [1, 1]} : vector<4x8xf32> to vector<4x2xf32>
    %30 = arith.truncf %29 : vector<4x2xf32> to vector<4x2xbf16>
    %31 = vector.extract_strided_slice %28 {offsets = [0, 2], sizes = [4, 2], strides = [1, 1]} : vector<4x8xf32> to vector<4x2xf32>
    %32 = arith.truncf %31 : vector<4x2xf32> to vector<4x2xbf16>
    %33 = vector.extract_strided_slice %28 {offsets = [0, 4], sizes = [4, 4], strides = [1, 1]} : vector<4x8xf32> to vector<4x4xf32>
    %34 = arith.truncf %33 : vector<4x4xf32> to vector<4x4xbf16>
    %cst_23 = arith.constant dense<0.000000e+00> : vector<4x4xf32>
    %35 = tpu.matmul %30, %32, %cst_23 {dimension_numbers = #tpu.dot_dimension_numbers<[1], [1], [0], [0], [0, 0, 1, 0], [], []>} : vector<4x2xbf16>, vector<4x2xbf16>, vector<4x4xf32> -> vector<4x4xf32>
    %cst_24 = arith.constant dense<0xFF800000> : vector<4xf32>
    %36 = vector.multi_reduction <maximumf>, %35, %cst_24 [1] : vector<4x4xf32> to vector<4xf32>
    %37 = vector.shape_cast %36 : vector<4xf32> to vector<4x1xf32>
    %38 = vector.broadcast %37 : vector<4x1xf32> to vector<4x4xf32>
    %39 = arith.subf %35, %38 : vector<4x4xf32>
    %40 = math.exp %39 : vector<4x4xf32>
    %cst_25 = arith.constant dense<0.000000e+00> : vector<4xf32>
    %41 = vector.multi_reduction <add>, %40, %cst_25 [1] : vector<4x4xf32> to vector<4xf32>
    %42 = vector.shape_cast %41 : vector<4xf32> to vector<4x1xf32>
    %43 = tpu.reciprocal %42 {approx = true} : vector<4x1xf32> -> vector<4x1xf32>
    %44 = arith.mulf %42, %43 : vector<4x1xf32>
    %cst_26 = arith.constant 2.000000e+00 : f32
    %45 = vector.broadcast %cst_26 : f32 to vector<4x1xf32>
    %46 = arith.subf %45, %44 : vector<4x1xf32>
    %47 = arith.mulf %43, %46 : vector<4x1xf32>
    %48 = vector.broadcast %47 : vector<4x1xf32> to vector<4x4xf32>
    %49 = arith.mulf %40, %48 : vector<4x4xf32>
    %50 = arith.truncf %49 : vector<4x4xf32> to vector<4x4xbf16>
    %cst_27 = arith.constant dense<0.000000e+00> : vector<4x4xf32>
    %51 = tpu.matmul %50, %34, %cst_27 {dimension_numbers = #tpu.dot_dimension_numbers<[1], [0], [0], [1], [0, 0, 1, 1], [], []>} : vector<4x4xbf16>, vector<4x4xbf16>, vector<4x4xf32> -> vector<4x4xf32>
    %52 = vector.broadcast %0 : f32 to vector<4x4xf32>
    %53 = arith.mulf %52, %51 : vector<4x4xf32>
    %54 = arith.addf %53, %22 : vector<4x4xf32>
    %55 = arith.negf %54 : vector<4x4xf32>
    %56 = math.exp %55 : vector<4x4xf32>
    %cst_28 = arith.constant 1.000000e+00 : f32
    %57 = vector.broadcast %cst_28 : f32 to vector<4x4xf32>
    %58 = arith.addf %57, %56 : vector<4x4xf32>
    %59 = arith.divf %57, %58 : vector<4x4xf32>
    %cst_29 = arith.constant 0.000000e+00 : f32
    %60 = vector.broadcast %cst_29 : f32 to vector<1x32x4xf32>
    %c0_30 = arith.constant 0 : index
    %c0_31 = arith.constant 0 : index
    %c0_32 = arith.constant 0 : index
    %61 = vector.load %arg10[%c0_30, %c0_31, %c0_32] : memref<18x32x4xf32, #tpu.memory_space<vmem>>, vector<1x32x4xf32>
    tpu.vector_store %arg10[%c0_30, %c0_31, %c0_32], %60 {strides = array<i32>} : memref<18x32x4xf32, #tpu.memory_space<vmem>>, vector<1x32x4xf32>,
    %c17 = arith.constant 17 : index
    %c0_33 = arith.constant 0 : index
    %c0_34 = arith.constant 0 : index
    %62 = vector.load %arg10[%c17, %c0_33, %c0_34] : memref<18x32x4xf32, #tpu.memory_space<vmem>>, vector<1x32x4xf32>
    tpu.vector_store %arg10[%c17, %c0_33, %c0_34], %60 {strides = array<i32>} : memref<18x32x4xf32, #tpu.memory_space<vmem>>, vector<1x32x4xf32>,
    %cst_35 = arith.constant 0.000000e+00 : f32
    %63 = vector.broadcast %cst_35 : f32 to vector<16x8x4xf32>
    %c1_36 = arith.constant 1 : index
    %c0_37 = arith.constant 0 : index
    %c0_38 = arith.constant 0 : index
    %64 = vector.load %arg10[%c1_36, %c0_37, %c0_38] : memref<18x32x4xf32, #tpu.memory_space<vmem>>, vector<16x8x4xf32>
    tpu.vector_store %arg10[%c1_36, %c0_37, %c0_38], %63 {strides = array<i32>} : memref<18x32x4xf32, #tpu.memory_space<vmem>>, vector<16x8x4xf32>,
    %c1_39 = arith.constant 1 : index
    %c24 = arith.constant 24 : index
    %c0_40 = arith.constant 0 : index
    %65 = vector.load %arg10[%c1_39, %c24, %c0_40] : memref<18x32x4xf32, #tpu.memory_space<vmem>>, vector<16x8x4xf32>
    tpu.vector_store %arg10[%c1_39, %c24, %c0_40], %63 {strides = array<i32>} : memref<18x32x4xf32, #tpu.memory_space<vmem>>, vector<16x8x4xf32>,
    %c0_41 = arith.constant 0 : index
    %c0_42 = arith.constant 0 : index
    %c0_43 = arith.constant 0 : index
    %c0_44 = arith.constant 0 : index
    %66 = vector.load %arg1[%c0_41, %c0_42, %c0_43, %c0_44] : memref<1x16x16x4xf32, #tpu.memory_space<vmem>>, vector<1x8x8x4xf32>
    %67 = vector.shape_cast %66 : vector<1x8x8x4xf32> to vector<8x8x4xf32>
    %68 = vector.shape_cast %67 : vector<8x8x4xf32> to vector<64x4xf32>
    %69 = arith.truncf %68 : vector<64x4xf32> to vector<64x4xbf16>
    %c0_45 = arith.constant 0 : index
    %c0_46 = arith.constant 0 : index
    %70 = vector.load %arg4[%c0_45, %c0_46] : memref<4x8xbf16, #tpu.memory_space<vmem>>, vector<4x8xbf16>
    %cst_47 = arith.constant dense<0.000000e+00> : vector<64x8xf32>
    %71 = tpu.matmul %69, %70, %cst_47 {dimension_numbers = #tpu.dot_dimension_numbers<[1], [0], [0], [1], [0, 0, 1, 1], [], []>} : vector<64x4xbf16>, vector<4x8xbf16>, vector<64x8xf32> -> vector<64x8xf32>
    %c0_48 = arith.constant 0 : index
    %c0_49 = arith.constant 0 : index
    %72 = vector.load %arg5[%c0_48, %c0_49] : memref<1x8xf32, #tpu.memory_space<vmem>>, vector<1x8xf32>
    %73 = vector.broadcast %72 : vector<1x8xf32> to vector<64x8xf32>
    %74 = arith.addf %71, %73 : vector<64x8xf32>
    %75 = vector.extract_strided_slice %74 {offsets = [0, 0], sizes = [64, 2], strides = [1, 1]} : vector<64x8xf32> to vector<64x2xf32>
    %76 = arith.truncf %75 : vector<64x2xf32> to vector<64x2xbf16>
    %77 = vector.extract_strided_slice %74 {offsets = [0, 2], sizes = [64, 2], strides = [1, 1]} : vector<64x8xf32> to vector<64x2xf32>
    %78 = arith.truncf %77 : vector<64x2xf32> to vector<64x2xbf16>
    %79 = vector.extract_strided_slice %74 {offsets = [0, 4], sizes = [64, 4], strides = [1, 1]} : vector<64x8xf32> to vector<64x4xf32>
    %80 = arith.truncf %79 : vector<64x4xf32> to vector<64x4xbf16>
    %cst_50 = arith.constant dense<0.000000e+00> : vector<64x64xf32>
    %81 = tpu.matmul %76, %78, %cst_50 {dimension_numbers = #tpu.dot_dimension_numbers<[1], [1], [0], [0], [0, 0, 1, 0], [], []>} : vector<64x2xbf16>, vector<64x2xbf16>, vector<64x64xf32> -> vector<64x64xf32>
    %cst_51 = arith.constant dense<0xFF800000> : vector<64xf32>
    %82 = vector.multi_reduction <maximumf>, %81, %cst_51 [1] : vector<64x64xf32> to vector<64xf32>
    %83 = vector.shape_cast %82 : vector<64xf32> to vector<64x1xf32>
    %84 = vector.broadcast %83 : vector<64x1xf32> to vector<64x64xf32>
    %85 = arith.subf %81, %84 : vector<64x64xf32>
    %86 = math.exp %85 : vector<64x64xf32>
    %cst_52 = arith.constant dense<0.000000e+00> : vector<64xf32>
    %87 = vector.multi_reduction <add>, %86, %cst_52 [1] : vector<64x64xf32> to vector<64xf32>
    %88 = vector.shape_cast %87 : vector<64xf32> to vector<64x1xf32>
    %89 = tpu.reciprocal %88 {approx = true} : vector<64x1xf32> -> vector<64x1xf32>
    %90 = arith.mulf %88, %89 : vector<64x1xf32>
    %cst_53 = arith.constant 2.000000e+00 : f32
    %91 = vector.broadcast %cst_53 : f32 to vector<64x1xf32>
    %92 = arith.subf %91, %90 : vector<64x1xf32>
    %93 = arith.mulf %89, %92 : vector<64x1xf32>
    %94 = vector.broadcast %93 : vector<64x1xf32> to vector<64x64xf32>
    %95 = arith.mulf %86, %94 : vector<64x64xf32>
    %96 = arith.truncf %95 : vector<64x64xf32> to vector<64x64xbf16>
    %cst_54 = arith.constant dense<0.000000e+00> : vector<64x4xf32>
    %97 = tpu.matmul %96, %80, %cst_54 {dimension_numbers = #tpu.dot_dimension_numbers<[1], [0], [0], [1], [0, 0, 1, 1], [], []>} : vector<64x64xbf16>, vector<64x4xbf16>, vector<64x4xf32> -> vector<64x4xf32>
    %98 = vector.broadcast %1 : f32 to vector<64x4xf32>
    %99 = arith.mulf %98, %97 : vector<64x4xf32>
    %100 = arith.addf %99, %68 : vector<64x4xf32>
    %101 = vector.extract_strided_slice %59 {offsets = [0, 0], sizes = [1, 4], strides = [1, 1]} : vector<4x4xf32> to vector<1x4xf32>
    %102 = vector.broadcast %101 : vector<1x4xf32> to vector<64x4xf32>
    %103 = arith.mulf %100, %102 : vector<64x4xf32>
    %104 = vector.shape_cast %103 : vector<64x4xf32> to vector<8x8x4xf32>
    %c1_55 = arith.constant 1 : index
    %c8_56 = arith.constant 8 : index
    %c0_57 = arith.constant 0 : index
    %105 = vector.load %arg10[%c1_55, %c8_56, %c0_57] : memref<18x32x4xf32, #tpu.memory_space<vmem>>, vector<8x8x4xf32>
    tpu.vector_store %arg10[%c1_55, %c8_56, %c0_57], %104 {strides = array<i32>} : memref<18x32x4xf32, #tpu.memory_space<vmem>>, vector<8x8x4xf32>,
    %c0_58 = arith.constant 0 : index
    %c0_59 = arith.constant 0 : index
    %c8_60 = arith.constant 8 : index
    %c0_61 = arith.constant 0 : index
    %106 = vector.load %arg1[%c0_58, %c0_59, %c8_60, %c0_61] : memref<1x16x16x4xf32, #tpu.memory_space<vmem>>, vector<1x8x8x4xf32>
    %107 = vector.shape_cast %106 : vector<1x8x8x4xf32> to vector<8x8x4xf32>
    %108 = vector.shape_cast %107 : vector<8x8x4xf32> to vector<64x4xf32>
    %109 = arith.truncf %108 : vector<64x4xf32> to vector<64x4xbf16>
    %c0_62 = arith.constant 0 : index
    %c0_63 = arith.constant 0 : index
    %110 = vector.load %arg4[%c0_62, %c0_63] : memref<4x8xbf16, #tpu.memory_space<vmem>>, vector<4x8xbf16>
    %cst_64 = arith.constant dense<0.000000e+00> : vector<64x8xf32>
    %111 = tpu.matmul %109, %110, %cst_64 {dimension_numbers = #tpu.dot_dimension_numbers<[1], [0], [0], [1], [0, 0, 1, 1], [], []>} : vector<64x4xbf16>, vector<4x8xbf16>, vector<64x8xf32> -> vector<64x8xf32>
    %c0_65 = arith.constant 0 : index
    %c0_66 = arith.constant 0 : index
    %112 = vector.load %arg5[%c0_65, %c0_66] : memref<1x8xf32, #tpu.memory_space<vmem>>, vector<1x8xf32>
    %113 = vector.broadcast %112 : vector<1x8xf32> to vector<64x8xf32>
    %114 = arith.addf %111, %113 : vector<64x8xf32>
    %115 = vector.extract_strided_slice %114 {offsets = [0, 0], sizes = [64, 2], strides = [1, 1]} : vector<64x8xf32> to vector<64x2xf32>
    %116 = arith.truncf %115 : vector<64x2xf32> to vector<64x2xbf16>
    %117 = vector.extract_strided_slice %114 {offsets = [0, 2], sizes = [64, 2], strides = [1, 1]} : vector<64x8xf32> to vector<64x2xf32>
    %118 = arith.truncf %117 : vector<64x2xf32> to vector<64x2xbf16>
    %119 = vector.extract_strided_slice %114 {offsets = [0, 4], sizes = [64, 4], strides = [1, 1]} : vector<64x8xf32> to vector<64x4xf32>
    %120 = arith.truncf %119 : vector<64x4xf32> to vector<64x4xbf16>
    %cst_67 = arith.constant dense<0.000000e+00> : vector<64x64xf32>
    %121 = tpu.matmul %116, %118, %cst_67 {dimension_numbers = #tpu.dot_dimension_numbers<[1], [1], [0], [0], [0, 0, 1, 0], [], []>} : vector<64x2xbf16>, vector<64x2xbf16>, vector<64x64xf32> -> vector<64x64xf32>
    %cst_68 = arith.constant dense<0xFF800000> : vector<64xf32>
    %122 = vector.multi_reduction <maximumf>, %121, %cst_68 [1] : vector<64x64xf32> to vector<64xf32>
    %123 = vector.shape_cast %122 : vector<64xf32> to vector<64x1xf32>
    %124 = vector.broadcast %123 : vector<64x1xf32> to vector<64x64xf32>
    %125 = arith.subf %121, %124 : vector<64x64xf32>
    %126 = math.exp %125 : vector<64x64xf32>
    %cst_69 = arith.constant dense<0.000000e+00> : vector<64xf32>
    %127 = vector.multi_reduction <add>, %126, %cst_69 [1] : vector<64x64xf32> to vector<64xf32>
    %128 = vector.shape_cast %127 : vector<64xf32> to vector<64x1xf32>
    %129 = tpu.reciprocal %128 {approx = true} : vector<64x1xf32> -> vector<64x1xf32>
    %130 = arith.mulf %128, %129 : vector<64x1xf32>
    %cst_70 = arith.constant 2.000000e+00 : f32
    %131 = vector.broadcast %cst_70 : f32 to vector<64x1xf32>
    %132 = arith.subf %131, %130 : vector<64x1xf32>
    %133 = arith.mulf %129, %132 : vector<64x1xf32>
    %134 = vector.broadcast %133 : vector<64x1xf32> to vector<64x64xf32>
    %135 = arith.mulf %126, %134 : vector<64x64xf32>
    %136 = arith.truncf %135 : vector<64x64xf32> to vector<64x64xbf16>
    %cst_71 = arith.constant dense<0.000000e+00> : vector<64x4xf32>
    %137 = tpu.matmul %136, %120, %cst_71 {dimension_numbers = #tpu.dot_dimension_numbers<[1], [0], [0], [1], [0, 0, 1, 1], [], []>} : vector<64x64xbf16>, vector<64x4xbf16>, vector<64x4xf32> -> vector<64x4xf32>
    %138 = vector.broadcast %1 : f32 to vector<64x4xf32>
    %139 = arith.mulf %138, %137 : vector<64x4xf32>
    %140 = arith.addf %139, %108 : vector<64x4xf32>
    %141 = vector.extract_strided_slice %59 {offsets = [1, 0], sizes = [1, 4], strides = [1, 1]} : vector<4x4xf32> to vector<1x4xf32>
    %142 = vector.broadcast %141 : vector<1x4xf32> to vector<64x4xf32>
    %143 = arith.mulf %140, %142 : vector<64x4xf32>
    %144 = vector.shape_cast %143 : vector<64x4xf32> to vector<8x8x4xf32>
    %c1_72 = arith.constant 1 : index
    %c16 = arith.constant 16 : index
    %c0_73 = arith.constant 0 : index
    %145 = vector.load %arg10[%c1_72, %c16, %c0_73] : memref<18x32x4xf32, #tpu.memory_space<vmem>>, vector<8x8x4xf32>
    tpu.vector_store %arg10[%c1_72, %c16, %c0_73], %144 {strides = array<i32>} : memref<18x32x4xf32, #tpu.memory_space<vmem>>, vector<8x8x4xf32>,
    %c0_74 = arith.constant 0 : index
    %c8_75 = arith.constant 8 : index
    %c0_76 = arith.constant 0 : index
    %c0_77 = arith.constant 0 : index
    %146 = vector.load %arg1[%c0_74, %c8_75, %c0_76, %c0_77] : memref<1x16x16x4xf32, #tpu.memory_space<vmem>>, vector<1x8x8x4xf32>
    %147 = vector.shape_cast %146 : vector<1x8x8x4xf32> to vector<8x8x4xf32>
    %148 = vector.shape_cast %147 : vector<8x8x4xf32> to vector<64x4xf32>
    %149 = arith.truncf %148 : vector<64x4xf32> to vector<64x4xbf16>
    %c0_78 = arith.constant 0 : index
    %c0_79 = arith.constant 0 : index
    %150 = vector.load %arg4[%c0_78, %c0_79] : memref<4x8xbf16, #tpu.memory_space<vmem>>, vector<4x8xbf16>
    %cst_80 = arith.constant dense<0.000000e+00> : vector<64x8xf32>
    %151 = tpu.matmul %149, %150, %cst_80 {dimension_numbers = #tpu.dot_dimension_numbers<[1], [0], [0], [1], [0, 0, 1, 1], [], []>} : vector<64x4xbf16>, vector<4x8xbf16>, vector<64x8xf32> -> vector<64x8xf32>
    %c0_81 = arith.constant 0 : index
    %c0_82 = arith.constant 0 : index
    %152 = vector.load %arg5[%c0_81, %c0_82] : memref<1x8xf32, #tpu.memory_space<vmem>>, vector<1x8xf32>
    %153 = vector.broadcast %152 : vector<1x8xf32> to vector<64x8xf32>
    %154 = arith.addf %151, %153 : vector<64x8xf32>
    %155 = vector.extract_strided_slice %154 {offsets = [0, 0], sizes = [64, 2], strides = [1, 1]} : vector<64x8xf32> to vector<64x2xf32>
    %156 = arith.truncf %155 : vector<64x2xf32> to vector<64x2xbf16>
    %157 = vector.extract_strided_slice %154 {offsets = [0, 2], sizes = [64, 2], strides = [1, 1]} : vector<64x8xf32> to vector<64x2xf32>
    %158 = arith.truncf %157 : vector<64x2xf32> to vector<64x2xbf16>
    %159 = vector.extract_strided_slice %154 {offsets = [0, 4], sizes = [64, 4], strides = [1, 1]} : vector<64x8xf32> to vector<64x4xf32>
    %160 = arith.truncf %159 : vector<64x4xf32> to vector<64x4xbf16>
    %cst_83 = arith.constant dense<0.000000e+00> : vector<64x64xf32>
    %161 = tpu.matmul %156, %158, %cst_83 {dimension_numbers = #tpu.dot_dimension_numbers<[1], [1], [0], [0], [0, 0, 1, 0], [], []>} : vector<64x2xbf16>, vector<64x2xbf16>, vector<64x64xf32> -> vector<64x64xf32>
    %cst_84 = arith.constant dense<0xFF800000> : vector<64xf32>
    %162 = vector.multi_reduction <maximumf>, %161, %cst_84 [1] : vector<64x64xf32> to vector<64xf32>
    %163 = vector.shape_cast %162 : vector<64xf32> to vector<64x1xf32>
    %164 = vector.broadcast %163 : vector<64x1xf32> to vector<64x64xf32>
    %165 = arith.subf %161, %164 : vector<64x64xf32>
    %166 = math.exp %165 : vector<64x64xf32>
    %cst_85 = arith.constant dense<0.000000e+00> : vector<64xf32>
    %167 = vector.multi_reduction <add>, %166, %cst_85 [1] : vector<64x64xf32> to vector<64xf32>
    %168 = vector.shape_cast %167 : vector<64xf32> to vector<64x1xf32>
    %169 = tpu.reciprocal %168 {approx = true} : vector<64x1xf32> -> vector<64x1xf32>
    %170 = arith.mulf %168, %169 : vector<64x1xf32>
    %cst_86 = arith.constant 2.000000e+00 : f32
    %171 = vector.broadcast %cst_86 : f32 to vector<64x1xf32>
    %172 = arith.subf %171, %170 : vector<64x1xf32>
    %173 = arith.mulf %169, %172 : vector<64x1xf32>
    %174 = vector.broadcast %173 : vector<64x1xf32> to vector<64x64xf32>
    %175 = arith.mulf %166, %174 : vector<64x64xf32>
    %176 = arith.truncf %175 : vector<64x64xf32> to vector<64x64xbf16>
    %cst_87 = arith.constant dense<0.000000e+00> : vector<64x4xf32>
    %177 = tpu.matmul %176, %160, %cst_87 {dimension_numbers = #tpu.dot_dimension_numbers<[1], [0], [0], [1], [0, 0, 1, 1], [], []>} : vector<64x64xbf16>, vector<64x4xbf16>, vector<64x4xf32> -> vector<64x4xf32>
    %178 = vector.broadcast %1 : f32 to vector<64x4xf32>
    %179 = arith.mulf %178, %177 : vector<64x4xf32>
    %180 = arith.addf %179, %148 : vector<64x4xf32>
    %181 = vector.extract_strided_slice %59 {offsets = [2, 0], sizes = [1, 4], strides = [1, 1]} : vector<4x4xf32> to vector<1x4xf32>
    %182 = vector.broadcast %181 : vector<1x4xf32> to vector<64x4xf32>
    %183 = arith.mulf %180, %182 : vector<64x4xf32>
    %184 = vector.shape_cast %183 : vector<64x4xf32> to vector<8x8x4xf32>
    %c9 = arith.constant 9 : index
    %c8_88 = arith.constant 8 : index
    %c0_89 = arith.constant 0 : index
    %185 = vector.load %arg10[%c9, %c8_88, %c0_89] : memref<18x32x4xf32, #tpu.memory_space<vmem>>, vector<8x8x4xf32>
    tpu.vector_store %arg10[%c9, %c8_88, %c0_89], %184 {strides = array<i32>} : memref<18x32x4xf32, #tpu.memory_space<vmem>>, vector<8x8x4xf32>,
    %c0_90 = arith.constant 0 : index
    %c8_91 = arith.constant 8 : index
    %c8_92 = arith.constant 8 : index
    %c0_93 = arith.constant 0 : index
    %186 = vector.load %arg1[%c0_90, %c8_91, %c8_92, %c0_93] : memref<1x16x16x4xf32, #tpu.memory_space<vmem>>, vector<1x8x8x4xf32>
    %187 = vector.shape_cast %186 : vector<1x8x8x4xf32> to vector<8x8x4xf32>
    %188 = vector.shape_cast %187 : vector<8x8x4xf32> to vector<64x4xf32>
    %189 = arith.truncf %188 : vector<64x4xf32> to vector<64x4xbf16>
    %c0_94 = arith.constant 0 : index
    %c0_95 = arith.constant 0 : index
    %190 = vector.load %arg4[%c0_94, %c0_95] : memref<4x8xbf16, #tpu.memory_space<vmem>>, vector<4x8xbf16>
    %cst_96 = arith.constant dense<0.000000e+00> : vector<64x8xf32>
    %191 = tpu.matmul %189, %190, %cst_96 {dimension_numbers = #tpu.dot_dimension_numbers<[1], [0], [0], [1], [0, 0, 1, 1], [], []>} : vector<64x4xbf16>, vector<4x8xbf16>, vector<64x8xf32> -> vector<64x8xf32>
    %c0_97 = arith.constant 0 : index
    %c0_98 = arith.constant 0 : index
    %192 = vector.load %arg5[%c0_97, %c0_98] : memref<1x8xf32, #tpu.memory_space<vmem>>, vector<1x8xf32>
    %193 = vector.broadcast %192 : vector<1x8xf32> to vector<64x8xf32>
    %194 = arith.addf %191, %193 : vector<64x8xf32>
    %195 = vector.extract_strided_slice %194 {offsets = [0, 0], sizes = [64, 2], strides = [1, 1]} : vector<64x8xf32> to vector<64x2xf32>
    %196 = arith.truncf %195 : vector<64x2xf32> to vector<64x2xbf16>
    %197 = vector.extract_strided_slice %194 {offsets = [0, 2], sizes = [64, 2], strides = [1, 1]} : vector<64x8xf32> to vector<64x2xf32>
    %198 = arith.truncf %197 : vector<64x2xf32> to vector<64x2xbf16>
    %199 = vector.extract_strided_slice %194 {offsets = [0, 4], sizes = [64, 4], strides = [1, 1]} : vector<64x8xf32> to vector<64x4xf32>
    %200 = arith.truncf %199 : vector<64x4xf32> to vector<64x4xbf16>
    %cst_99 = arith.constant dense<0.000000e+00> : vector<64x64xf32>
    %201 = tpu.matmul %196, %198, %cst_99 {dimension_numbers = #tpu.dot_dimension_numbers<[1], [1], [0], [0], [0, 0, 1, 0], [], []>} : vector<64x2xbf16>, vector<64x2xbf16>, vector<64x64xf32> -> vector<64x64xf32>
    %cst_100 = arith.constant dense<0xFF800000> : vector<64xf32>
    %202 = vector.multi_reduction <maximumf>, %201, %cst_100 [1] : vector<64x64xf32> to vector<64xf32>
    %203 = vector.shape_cast %202 : vector<64xf32> to vector<64x1xf32>
    %204 = vector.broadcast %203 : vector<64x1xf32> to vector<64x64xf32>
    %205 = arith.subf %201, %204 : vector<64x64xf32>
    %206 = math.exp %205 : vector<64x64xf32>
    %cst_101 = arith.constant dense<0.000000e+00> : vector<64xf32>
    %207 = vector.multi_reduction <add>, %206, %cst_101 [1] : vector<64x64xf32> to vector<64xf32>
    %208 = vector.shape_cast %207 : vector<64xf32> to vector<64x1xf32>
    %209 = tpu.reciprocal %208 {approx = true} : vector<64x1xf32> -> vector<64x1xf32>
    %210 = arith.mulf %208, %209 : vector<64x1xf32>
    %cst_102 = arith.constant 2.000000e+00 : f32
    %211 = vector.broadcast %cst_102 : f32 to vector<64x1xf32>
    %212 = arith.subf %211, %210 : vector<64x1xf32>
    %213 = arith.mulf %209, %212 : vector<64x1xf32>
    %214 = vector.broadcast %213 : vector<64x1xf32> to vector<64x64xf32>
    %215 = arith.mulf %206, %214 : vector<64x64xf32>
    %216 = arith.truncf %215 : vector<64x64xf32> to vector<64x64xbf16>
    %cst_103 = arith.constant dense<0.000000e+00> : vector<64x4xf32>
    %217 = tpu.matmul %216, %200, %cst_103 {dimension_numbers = #tpu.dot_dimension_numbers<[1], [0], [0], [1], [0, 0, 1, 1], [], []>} : vector<64x64xbf16>, vector<64x4xbf16>, vector<64x4xf32> -> vector<64x4xf32>
    %218 = vector.broadcast %1 : f32 to vector<64x4xf32>
    %219 = arith.mulf %218, %217 : vector<64x4xf32>
    %220 = arith.addf %219, %188 : vector<64x4xf32>
    %221 = vector.extract_strided_slice %59 {offsets = [3, 0], sizes = [1, 4], strides = [1, 1]} : vector<4x4xf32> to vector<1x4xf32>
    %222 = vector.broadcast %221 : vector<1x4xf32> to vector<64x4xf32>
    %223 = arith.mulf %220, %222 : vector<64x4xf32>
    %224 = vector.shape_cast %223 : vector<64x4xf32> to vector<8x8x4xf32>
    %c9_104 = arith.constant 9 : index
    %c16_105 = arith.constant 16 : index
    %c0_106 = arith.constant 0 : index
    %225 = vector.load %arg10[%c9_104, %c16_105, %c0_106] : memref<18x32x4xf32, #tpu.memory_space<vmem>>, vector<8x8x4xf32>
    tpu.vector_store %arg10[%c9_104, %c16_105, %c0_106], %224 {strides = array<i32>} : memref<18x32x4xf32, #tpu.memory_space<vmem>>, vector<8x8x4xf32>,
    %c0_107 = arith.constant 0 : index
    %c0_108 = arith.constant 0 : index
    %c0_109 = arith.constant 0 : index
    %226 = vector.load %arg10[%c0_107, %c0_108, %c0_109] : memref<18x32x4xf32, #tpu.memory_space<vmem>>, vector<18x32x4xf32>
    %c1_i32 = arith.constant 1 : i32
    %227 = tpu.dynamic_rotate %226 by %c1_i32 dim 1 : vector<18x32x4xf32>, i32 -> vector<18x32x4xf32>
    %228 = vector.extract_strided_slice %227 {offsets = [0, 8, 0], sizes = [16, 16, 4], strides = [1, 1, 1]} : vector<18x32x4xf32> to vector<16x16x4xf32>
    %229 = vector.shape_cast %228 : vector<16x16x4xf32> to vector<256x4xf32>
    %230 = arith.truncf %229 : vector<256x4xf32> to vector<256x4xbf16>
    %c0_110 = arith.constant 0 : index
    %c0_111 = arith.constant 0 : index
    %c0_112 = arith.constant 0 : index
    %231 = vector.load %arg6[%c0_110, %c0_111, %c0_112] : memref<9x4x4xbf16, #tpu.memory_space<vmem>>, vector<1x4x4xbf16>
    %232 = vector.shape_cast %231 : vector<1x4x4xbf16> to vector<4x4xbf16>
    %cst_113 = arith.constant dense<0.000000e+00> : vector<256x4xf32>
    %233 = tpu.matmul %230, %232, %cst_113 {dimension_numbers = #tpu.dot_dimension_numbers<[1], [0], [0], [1], [0, 0, 1, 1], [], []>} : vector<256x4xbf16>, vector<4x4xbf16>, vector<256x4xf32> -> vector<256x4xf32>
    %234 = vector.extract_strided_slice %227 {offsets = [1, 8, 0], sizes = [16, 16, 4], strides = [1, 1, 1]} : vector<18x32x4xf32> to vector<16x16x4xf32>
    %235 = vector.shape_cast %234 : vector<16x16x4xf32> to vector<256x4xf32>
    %236 = arith.truncf %235 : vector<256x4xf32> to vector<256x4xbf16>
    %c3 = arith.constant 3 : index
    %c0_114 = arith.constant 0 : index
    %c0_115 = arith.constant 0 : index
    %237 = vector.load %arg6[%c3, %c0_114, %c0_115] : memref<9x4x4xbf16, #tpu.memory_space<vmem>>, vector<1x4x4xbf16>
    %238 = vector.shape_cast %237 : vector<1x4x4xbf16> to vector<4x4xbf16>
    %cst_116 = arith.constant dense<0.000000e+00> : vector<256x4xf32>
    %239 = tpu.matmul %236, %238, %cst_116 {dimension_numbers = #tpu.dot_dimension_numbers<[1], [0], [0], [1], [0, 0, 1, 1], [], []>} : vector<256x4xbf16>, vector<4x4xbf16>, vector<256x4xf32> -> vector<256x4xf32>
    %240 = arith.addf %233, %239 : vector<256x4xf32>
    %241 = vector.extract_strided_slice %227 {offsets = [2, 8, 0], sizes = [16, 16, 4], strides = [1, 1, 1]} : vector<18x32x4xf32> to vector<16x16x4xf32>
    %242 = vector.shape_cast %241 : vector<16x16x4xf32> to vector<256x4xf32>
    %243 = arith.truncf %242 : vector<256x4xf32> to vector<256x4xbf16>
    %c6 = arith.constant 6 : index
    %c0_117 = arith.constant 0 : index
    %c0_118 = arith.constant 0 : index
    %244 = vector.load %arg6[%c6, %c0_117, %c0_118] : memref<9x4x4xbf16, #tpu.memory_space<vmem>>, vector<1x4x4xbf16>
    %245 = vector.shape_cast %244 : vector<1x4x4xbf16> to vector<4x4xbf16>
    %cst_119 = arith.constant dense<0.000000e+00> : vector<256x4xf32>
    %246 = tpu.matmul %243, %245, %cst_119 {dimension_numbers = #tpu.dot_dimension_numbers<[1], [0], [0], [1], [0, 0, 1, 1], [], []>} : vector<256x4xbf16>, vector<4x4xbf16>, vector<256x4xf32> -> vector<256x4xf32>
    %247 = arith.addf %240, %246 : vector<256x4xf32>
    %c0_120 = arith.constant 0 : index
    %c8_121 = arith.constant 8 : index
    %c0_122 = arith.constant 0 : index
    %248 = vector.load %arg10[%c0_120, %c8_121, %c0_122] : memref<18x32x4xf32, #tpu.memory_space<vmem>>, vector<16x16x4xf32>
    %249 = vector.shape_cast %248 : vector<16x16x4xf32> to vector<256x4xf32>
    %250 = arith.truncf %249 : vector<256x4xf32> to vector<256x4xbf16>
    %c1_123 = arith.constant 1 : index
    %c0_124 = arith.constant 0 : index
    %c0_125 = arith.constant 0 : index
    %251 = vector.load %arg6[%c1_123, %c0_124, %c0_125] : memref<9x4x4xbf16, #tpu.memory_space<vmem>>, vector<1x4x4xbf16>
    %252 = vector.shape_cast %251 : vector<1x4x4xbf16> to vector<4x4xbf16>
    %cst_126 = arith.constant dense<0.000000e+00> : vector<256x4xf32>
    %253 = tpu.matmul %250, %252, %cst_126 {dimension_numbers = #tpu.dot_dimension_numbers<[1], [0], [0], [1], [0, 0, 1, 1], [], []>} : vector<256x4xbf16>, vector<4x4xbf16>, vector<256x4xf32> -> vector<256x4xf32>
    %254 = arith.addf %247, %253 : vector<256x4xf32>
    %c1_127 = arith.constant 1 : index
    %c8_128 = arith.constant 8 : index
    %c0_129 = arith.constant 0 : index
    %255 = vector.load %arg10[%c1_127, %c8_128, %c0_129] : memref<18x32x4xf32, #tpu.memory_space<vmem>>, vector<16x16x4xf32>
    %256 = vector.shape_cast %255 : vector<16x16x4xf32> to vector<256x4xf32>
    %257 = arith.truncf %256 : vector<256x4xf32> to vector<256x4xbf16>
    %c4 = arith.constant 4 : index
    %c0_130 = arith.constant 0 : index
    %c0_131 = arith.constant 0 : index
    %258 = vector.load %arg6[%c4, %c0_130, %c0_131] : memref<9x4x4xbf16, #tpu.memory_space<vmem>>, vector<1x4x4xbf16>
    %259 = vector.shape_cast %258 : vector<1x4x4xbf16> to vector<4x4xbf16>
    %cst_132 = arith.constant dense<0.000000e+00> : vector<256x4xf32>
    %260 = tpu.matmul %257, %259, %cst_132 {dimension_numbers = #tpu.dot_dimension_numbers<[1], [0], [0], [1], [0, 0, 1, 1], [], []>} : vector<256x4xbf16>, vector<4x4xbf16>, vector<256x4xf32> -> vector<256x4xf32>
    %261 = arith.addf %254, %260 : vector<256x4xf32>
    %c2 = arith.constant 2 : index
    %c8_133 = arith.constant 8 : index
    %c0_134 = arith.constant 0 : index
    %262 = vector.load %arg10[%c2, %c8_133, %c0_134] : memref<18x32x4xf32, #tpu.memory_space<vmem>>, vector<16x16x4xf32>
    %263 = vector.shape_cast %262 : vector<16x16x4xf32> to vector<256x4xf32>
    %264 = arith.truncf %263 : vector<256x4xf32> to vector<256x4xbf16>
    %c7 = arith.constant 7 : index
    %c0_135 = arith.constant 0 : index
    %c0_136 = arith.constant 0 : index
    %265 = vector.load %arg6[%c7, %c0_135, %c0_136] : memref<9x4x4xbf16, #tpu.memory_space<vmem>>, vector<1x4x4xbf16>
    %266 = vector.shape_cast %265 : vector<1x4x4xbf16> to vector<4x4xbf16>
    %cst_137 = arith.constant dense<0.000000e+00> : vector<256x4xf32>
    %267 = tpu.matmul %264, %266, %cst_137 {dimension_numbers = #tpu.dot_dimension_numbers<[1], [0], [0], [1], [0, 0, 1, 1], [], []>} : vector<256x4xbf16>, vector<4x4xbf16>, vector<256x4xf32> -> vector<256x4xf32>
    %268 = arith.addf %261, %267 : vector<256x4xf32>
    %c0_138 = arith.constant 0 : index
    %c0_139 = arith.constant 0 : index
    %c0_140 = arith.constant 0 : index
    %269 = vector.load %arg10[%c0_138, %c0_139, %c0_140] : memref<18x32x4xf32, #tpu.memory_space<vmem>>, vector<18x32x4xf32>
    %c31_i32 = arith.constant 31 : i32
    %270 = tpu.dynamic_rotate %269 by %c31_i32 dim 1 : vector<18x32x4xf32>, i32 -> vector<18x32x4xf32>
    %271 = vector.extract_strided_slice %270 {offsets = [0, 8, 0], sizes = [16, 16, 4], strides = [1, 1, 1]} : vector<18x32x4xf32> to vector<16x16x4xf32>
    %272 = vector.shape_cast %271 : vector<16x16x4xf32> to vector<256x4xf32>
    %273 = arith.truncf %272 : vector<256x4xf32> to vector<256x4xbf16>
    %c2_141 = arith.constant 2 : index
    %c0_142 = arith.constant 0 : index
    %c0_143 = arith.constant 0 : index
    %274 = vector.load %arg6[%c2_141, %c0_142, %c0_143] : memref<9x4x4xbf16, #tpu.memory_space<vmem>>, vector<1x4x4xbf16>
    %275 = vector.shape_cast %274 : vector<1x4x4xbf16> to vector<4x4xbf16>
    %cst_144 = arith.constant dense<0.000000e+00> : vector<256x4xf32>
    %276 = tpu.matmul %273, %275, %cst_144 {dimension_numbers = #tpu.dot_dimension_numbers<[1], [0], [0], [1], [0, 0, 1, 1], [], []>} : vector<256x4xbf16>, vector<4x4xbf16>, vector<256x4xf32> -> vector<256x4xf32>
    %277 = arith.addf %268, %276 : vector<256x4xf32>
    %278 = vector.extract_strided_slice %270 {offsets = [1, 8, 0], sizes = [16, 16, 4], strides = [1, 1, 1]} : vector<18x32x4xf32> to vector<16x16x4xf32>
    %279 = vector.shape_cast %278 : vector<16x16x4xf32> to vector<256x4xf32>
    %280 = arith.truncf %279 : vector<256x4xf32> to vector<256x4xbf16>
    %c5 = arith.constant 5 : index
    %c0_145 = arith.constant 0 : index
    %c0_146 = arith.constant 0 : index
    %281 = vector.load %arg6[%c5, %c0_145, %c0_146] : memref<9x4x4xbf16, #tpu.memory_space<vmem>>, vector<1x4x4xbf16>
    %282 = vector.shape_cast %281 : vector<1x4x4xbf16> to vector<4x4xbf16>
    %cst_147 = arith.constant dense<0.000000e+00> : vector<256x4xf32>
    %283 = tpu.matmul %280, %282, %cst_147 {dimension_numbers = #tpu.dot_dimension_numbers<[1], [0], [0], [1], [0, 0, 1, 1], [], []>} : vector<256x4xbf16>, vector<4x4xbf16>, vector<256x4xf32> -> vector<256x4xf32>
    %284 = arith.addf %277, %283 : vector<256x4xf32>
    %285 = vector.extract_strided_slice %270 {offsets = [2, 8, 0], sizes = [16, 16, 4], strides = [1, 1, 1]} : vector<18x32x4xf32> to vector<16x16x4xf32>
    %286 = vector.shape_cast %285 : vector<16x16x4xf32> to vector<256x4xf32>
    %287 = arith.truncf %286 : vector<256x4xf32> to vector<256x4xbf16>
    %c8_148 = arith.constant 8 : index
    %c0_149 = arith.constant 0 : index
    %c0_150 = arith.constant 0 : index
    %288 = vector.load %arg6[%c8_148, %c0_149, %c0_150] : memref<9x4x4xbf16, #tpu.memory_space<vmem>>, vector<1x4x4xbf16>
    %289 = vector.shape_cast %288 : vector<1x4x4xbf16> to vector<4x4xbf16>
    %cst_151 = arith.constant dense<0.000000e+00> : vector<256x4xf32>
    %290 = tpu.matmul %287, %289, %cst_151 {dimension_numbers = #tpu.dot_dimension_numbers<[1], [0], [0], [1], [0, 0, 1, 1], [], []>} : vector<256x4xbf16>, vector<4x4xbf16>, vector<256x4xf32> -> vector<256x4xf32>
    %291 = arith.addf %284, %290 : vector<256x4xf32>
    %c0_152 = arith.constant 0 : index
    %c0_153 = arith.constant 0 : index
    %c0_154 = arith.constant 0 : index
    %c0_155 = arith.constant 0 : index
    %292 = vector.load %arg1[%c0_152, %c0_153, %c0_154, %c0_155] : memref<1x16x16x4xf32, #tpu.memory_space<vmem>>, vector<1x16x16x4xf32>
    %293 = vector.shape_cast %292 : vector<1x16x16x4xf32> to vector<16x16x4xf32>
    %294 = vector.shape_cast %293 : vector<16x16x4xf32> to vector<256x4xf32>
    %c0_156 = arith.constant 0 : index
    %c0_157 = arith.constant 0 : index
    %295 = vector.load %arg7[%c0_156, %c0_157] : memref<1x4xf32, #tpu.memory_space<vmem>>, vector<1x4xf32>
    %296 = vector.broadcast %295 : vector<1x4xf32> to vector<256x4xf32>
    %297 = arith.addf %291, %296 : vector<256x4xf32>
    %298 = arith.addf %297, %294 : vector<256x4xf32>
    %cst_158 = arith.constant 0.000000e+00 : f32
    %299 = vector.broadcast %cst_158 : f32 to vector<256x4xf32>
    %300 = arith.maximumf %298, %299 : vector<256x4xf32>
    %301 = vector.shape_cast %300 : vector<256x4xf32> to vector<16x16x4xf32>
    %c0_159 = arith.constant 0 : index
    %c0_160 = arith.constant 0 : index
    %c0_161 = arith.constant 0 : index
    %c0_162 = arith.constant 0 : index
    %302 = vector.load %arg9[%c0_159, %c0_160, %c0_161, %c0_162] : memref<1x16x16x4xf32, #tpu.memory_space<vmem>>, vector<1x16x16x4xf32>
    %303 = vector.shape_cast %302 : vector<1x16x16x4xf32> to vector<16x16x4xf32>
    %304 = vector.shape_cast %301 : vector<16x16x4xf32> to vector<1x16x16x4xf32>
    tpu.vector_store %arg9[%c0_159, %c0_160, %c0_161, %c0_162], %304 {strides = array<i32>} : memref<1x16x16x4xf32, #tpu.memory_space<vmem>>, vector<1x16x16x4xf32>,
    return
  }
  func.func @transform_0(%arg0: i32) -> (i32, i32, i32, i32) {
    %c0_i32 = arith.constant 0 : i32
    %c0_i32_0 = arith.constant 0 : i32
    %c0_i32_1 = arith.constant 0 : i32
    %c0_i32_2 = arith.constant 0 : i32
    return %arg0, %c0_i32, %c0_i32_0, %c0_i32_1 : i32, i32, i32, i32
  }
  func.func @transform_1(%arg0: i32) -> (i32, i32) {
    %c0_i32 = arith.constant 0 : i32
    %c0_i32_0 = arith.constant 0 : i32
    %c0_i32_1 = arith.constant 0 : i32
    return %c0_i32, %c0_i32_0 : i32, i32
  }
  func.func @transform_2(%arg0: i32) -> (i32, i32) {
    %c0_i32 = arith.constant 0 : i32
    %c0_i32_0 = arith.constant 0 : i32
    %c0_i32_1 = arith.constant 0 : i32
    return %c0_i32, %c0_i32_0 : i32, i32
  }
  func.func @transform_3(%arg0: i32) -> (i32, i32) {
    %c0_i32 = arith.constant 0 : i32
    %c0_i32_0 = arith.constant 0 : i32
    %c0_i32_1 = arith.constant 0 : i32
    return %c0_i32, %c0_i32_0 : i32, i32
  }
  func.func @transform_4(%arg0: i32) -> (i32, i32) {
    %c0_i32 = arith.constant 0 : i32
    %c0_i32_0 = arith.constant 0 : i32
    %c0_i32_1 = arith.constant 0 : i32
    return %c0_i32, %c0_i32_0 : i32, i32
  }
  func.func @transform_5(%arg0: i32) -> (i32, i32, i32) {
    %c0_i32 = arith.constant 0 : i32
    %c0_i32_0 = arith.constant 0 : i32
    %c0_i32_1 = arith.constant 0 : i32
    %c0_i32_2 = arith.constant 0 : i32
    return %c0_i32, %c0_i32_0, %c0_i32_1 : i32, i32, i32
  }
  func.func @transform_6(%arg0: i32) -> (i32, i32) {
    %c0_i32 = arith.constant 0 : i32
    %c0_i32_0 = arith.constant 0 : i32
    %c0_i32_1 = arith.constant 0 : i32
    return %c0_i32, %c0_i32_0 : i32, i32
  }
  func.func @transform_7(%arg0: i32) -> i32 {
    %c0_i32 = arith.constant 0 : i32
    %c0_i32_0 = arith.constant 0 : i32
    return %c0_i32 : i32
  }
  func.func @transform_8(%arg0: i32) -> (i32, i32, i32, i32) {
    %c0_i32 = arith.constant 0 : i32
    %c0_i32_0 = arith.constant 0 : i32
    %c0_i32_1 = arith.constant 0 : i32
    %c0_i32_2 = arith.constant 0 : i32
    return %arg0, %c0_i32, %c0_i32_0, %c0_i32_1 : i32, i32, i32, i32
  }
}

</mosaic_0001>

<llo_original>
// kernel: agcb_patch_forward.1
$region0: #{agcb_patch_forward.1}
  #allocation0 [shape = 'u32[]', space=smem, size = 0x4, offset = 0x4, fixed_abs, tag = 'smem constant byte address 0x4 - core index']
  #allocation1 [shape = 'u32[72,128]{1,0:T(1,128)}', space=vmem, size = 0x9000, scoped, tag = 'internal scratch']
  #allocation2 [shape = 'f32[18,32,4]{2,1,0:T(8,128)}', space=vmem, size = 0x48000, scoped, tag = 'scratch operand']
  %s0 = inlined_call_operand.vmem [shape: f32[2,16,16,4], index: 0, kind: input, shape index: {}]
  %s1 = inlined_call_operand.vmem [shape: bf16[4,8], index: 1, kind: input, shape index: {}]
  %s2 = inlined_call_operand.vmem [shape: f32[1,8], index: 2, kind: input, shape index: {}]
  %s3 = inlined_call_operand.vmem [shape: bf16[4,8], index: 3, kind: input, shape index: {}]
  %s4 = inlined_call_operand.vmem [shape: f32[1,8], index: 4, kind: input, shape index: {}]
  %s5 = inlined_call_operand.vmem [shape: bf16[9,4,4], index: 5, kind: input, shape index: {}]
  %s6 = inlined_call_operand.vmem [shape: f32[1,4], index: 6, kind: input, shape index: {}]
  %s7 = inlined_call_operand.vmem [shape: f32[2], index: 7, kind: input, shape index: {}]
  %s8 = inlined_call_operand.vmem [shape: f32[2,16,16,4], index: 8, kind: output, shape index: {}]
  %s9 = sld [smem:[#allocation0]]
  $region69: #{agcb_patch_forward.1} parent=0
    _
  %s11 = ssub.s32 1, %s9
  %s12 = scalar_select 0, %s11, %s9
  $region1: #{agcb_patch_forward.1} parent=0
    #allocation3 [shape = 'u8[512]{0}', space=smem, size = 0x200, scoped, tag = 'input window, operand 7, single buffered']
    #allocation4 [shape = 's32[2]{0}', space=sflag, size = 0x8, scoped, tag = 'scoped memory for agcb_patch_forward.1']
    %13 = vsyncpa [#allocation4], 0
    loop: start=0, step=1, limit=4
    $region2: #{agcb_patch_forward.1} parent=1 // loop_pre_header
      _
    $region3: #{agcb_patch_forward.1} parent=1 // loop_header
      %s15 = sphi 0, %s19
      %p16 = scmp.ge.s32.totalorder %s15, 4
      %s25 = sphi 0, %s27
      %s28 = sphi 0, %s25
      %s29 = sphi 0, %s28
      %s45 = sphi 0, %s29
      %s49 = sphi 0, %s49
      %s51 = sphi 0, %s49
      %s52 = sphi 0, %s51
      %s66 = sphi 0, %s52
      %s70 = sphi 0, %s70
      %s72 = sphi 0, %s70
      %s73 = sphi 0, %s72
      %s87 = sphi 0, %s73
      %s91 = sphi 0, %s91
      %s93 = sphi 0, %s91
      %s94 = sphi 0, %s93
      %s108 = sphi 0, %s94
      %s112 = sphi 0, %s112
      %s114 = sphi 0, %s112
      %s115 = sphi 0, %s114
      %s129 = sphi 0, %s115
      %s133 = sphi 0, %s133
      %s135 = sphi 0, %s133
      %s136 = sphi 0, %s135
      %s150 = sphi 0, %s136
      %s154 = sphi 0, %s154
      %s156 = sphi 0, %s154
      %s157 = sphi 0, %s156
      %s171 = sphi 0, %s157
      %s175 = sphi 0, %s175
      %s177 = sphi 0, %s175
      %s178 = sphi 0, %s177
      %s192 = sphi 0, %s178
      %s198 = sphi 0, %s200
      %s201 = sphi 0, %s198
      %s202 = sphi 0, %s201
      %s218 = sphi 0, %s202
    $region4: #{agcb_patch_forward.1} parent=1 // loop_header_branch
      %18 = sbr.rel (%p16) target = $region8
    $region5: #{agcb_patch_forward.1} parent=1 // loop_body
      %s20 = ssub.s32 %s15, 1
      %s21 = ssub.s32 %s15, 2
      %s22 = sadd.s32 %s15, 1
      %s23 = ssub.s32 %s15, %s22
      %p24 = scmp.eq.s32.totalorder %s23, 0
      %s26 = sadd.s32 %s25, 1
      %s27 = scalar_select %p24, %s25, %s26
      %p30 = pneg %p24
      %p31 = scmp.eq.s32.totalorder %s15, 1
      %p32 = por %p30, %p31
      %p33 = scmp.ne.s32.totalorder %s25, %s28
      %p34 = scmp.eq.s32.totalorder %s15, 0
      %p35 = por %p33, %p34
      %p36 = scmp.ne.s32.totalorder %s25, %s28
      %p37 = scmp.eq.s32.totalorder %s20, 1
      %p38 = por %p36, %p37
      %p39 = scmp.ne.s32.totalorder %s28, %s29
      %p40 = scmp.eq.s32.totalorder %s20, 0
      %p41 = por %p39, %p40
      %p42 = scmp.ne.s32.totalorder %s28, %s29
      %p43 = scmp.eq.s32.totalorder %s21, 1
      %p44 = por %p42, %p43
      %p46 = scmp.ne.s32.totalorder %s29, %s45
      %p47 = scmp.eq.s32.totalorder %s21, 0
      %p48 = por %p46, %p47
      %s50 = sadd.s32 %s49, 1
      %p53 = scmp.eq.s32.totalorder %s15, 1
      %p54 = scmp.ne.s32.totalorder %s49, %s51
      %p55 = scmp.eq.s32.totalorder %s15, 0
      %p56 = por %p54, %p55
      %p57 = scmp.ne.s32.totalorder %s49, %s51
      %p58 = scmp.eq.s32.totalorder %s20, 1
      %p59 = por %p57, %p58
      %p60 = scmp.ne.s32.totalorder %s51, %s52
      %p61 = scmp.eq.s32.totalorder %s20, 0
      %p62 = por %p60, %p61
      %p63 = scmp.ne.s32.totalorder %s51, %s52
      %p64 = scmp.eq.s32.totalorder %s21, 1
      %p65 = por %p63, %p64
      %p67 = scmp.ne.s32.totalorder %s52, %s66
      %p68 = scmp.eq.s32.totalorder %s21, 0
      %p69 = por %p67, %p68
      %s71 = sadd.s32 %s70, 1
      %p74 = scmp.eq.s32.totalorder %s15, 1
      %p75 = scmp.ne.s32.totalorder %s70, %s72
      %p76 = scmp.eq.s32.totalorder %s15, 0
      %p77 = por %p75, %p76
      %p78 = scmp.ne.s32.totalorder %s70, %s72
      %p79 = scmp.eq.s32.totalorder %s20, 1
      %p80 = por %p78, %p79
      %p81 = scmp.ne.s32.totalorder %s72, %s73
      %p82 = scmp.eq.s32.totalorder %s20, 0
      %p83 = por %p81, %p82
      %p84 = scmp.ne.s32.totalorder %s72, %s73
      %p85 = scmp.eq.s32.totalorder %s21, 1
      %p86 = por %p84, %p85
      %p88 = scmp.ne.s32.totalorder %s73, %s87
      %p89 = scmp.eq.s32.totalorder %s21, 0
      %p90 = por %p88, %p89
      %s92 = sadd.s32 %s91, 1
      %p95 = scmp.eq.s32.totalorder %s15, 1
      %p96 = scmp.ne.s32.totalorder %s91, %s93
      %p97 = scmp.eq.s32.totalorder %s15, 0
      %p98 = por %p96, %p97
      %p99 = scmp.ne.s32.totalorder %s91, %s93
      %p100 = scmp.eq.s32.totalorder %s20, 1
      %p101 = por %p99, %p100
      %p102 = scmp.ne.s32.totalorder %s93, %s94
      %p103 = scmp.eq.s32.totalorder %s20, 0
      %p104 = por %p102, %p103
      %p105 = scmp.ne.s32.totalorder %s93, %s94
      %p106 = scmp.eq.s32.totalorder %s21, 1
      %p107 = por %p105, %p106
      %p109 = scmp.ne.s32.totalorder %s94, %s108
      %p110 = scmp.eq.s32.totalorder %s21, 0
      %p111 = por %p109, %p110
      %s113 = sadd.s32 %s112, 1
      %p116 = scmp.eq.s32.totalorder %s15, 1
      %p117 = scmp.ne.s32.totalorder %s112, %s114
      %p118 = scmp.eq.s32.totalorder %s15, 0
      %p119 = por %p117, %p118
      %p120 = scmp.ne.s32.totalorder %s112, %s114
      %p121 = scmp.eq.s32.totalorder %s20, 1
      %p122 = por %p120, %p121
      %p123 = scmp.ne.s32.totalorder %s114, %s115
      %p124 = scmp.eq.s32.totalorder %s20, 0
      %p125 = por %p123, %p124
      %p126 = scmp.ne.s32.totalorder %s114, %s115
      %p127 = scmp.eq.s32.totalorder %s21, 1
      %p128 = por %p126, %p127
      %p130 = scmp.ne.s32.totalorder %s115, %s129
      %p131 = scmp.eq.s32.totalorder %s21, 0
      %p132 = por %p130, %p131
      %s134 = sadd.s32 %s133, 1
      %p137 = scmp.eq.s32.totalorder %s15, 1
      %p138 = scmp.ne.s32.totalorder %s133, %s135
      %p139 = scmp.eq.s32.totalorder %s15, 0
      %p140 = por %p138, %p139
      %p141 = scmp.ne.s32.totalorder %s133, %s135
      %p142 = scmp.eq.s32.totalorder %s20, 1
      %p143 = por %p141, %p142
      %p144 = scmp.ne.s32.totalorder %s135, %s136
      %p145 = scmp.eq.s32.totalorder %s20, 0
      %p146 = por %p144, %p145
      %p147 = scmp.ne.s32.totalorder %s135, %s136
      %p148 = scmp.eq.s32.totalorder %s21, 1
      %p149 = por %p147, %p148
      %p151 = scmp.ne.s32.totalorder %s136, %s150
      %p152 = scmp.eq.s32.totalorder %s21, 0
      %p153 = por %p151, %p152
      %s155 = sadd.s32 %s154, 1
      %p158 = scmp.eq.s32.totalorder %s15, 1
      %p159 = scmp.ne.s32.totalorder %s154, %s156
      %p160 = scmp.eq.s32.totalorder %s15, 0
      %p161 = por %p159, %p160
      %p162 = scmp.ne.s32.totalorder %s154, %s156
      %p163 = scmp.eq.s32.totalorder %s20, 1
      %p164 = por %p162, %p163
      %p165 = scmp.ne.s32.totalorder %s156, %s157
      %p166 = scmp.eq.s32.totalorder %s20, 0
      %p167 = por %p165, %p166
      %p168 = scmp.ne.s32.totalorder %s156, %s157
      %p169 = scmp.eq.s32.totalorder %s21, 1
      %p170 = por %p168, %p169
      %p172 = scmp.ne.s32.totalorder %s157, %s171
      %p173 = scmp.eq.s32.totalorder %s21, 0
      %p174 = por %p172, %p173
      %s176 = sadd.s32 %s175, 1
      %p179 = scmp.eq.s32.totalorder %s15, 1
      %p180 = scmp.ne.s32.totalorder %s175, %s177
      %p181 = scmp.eq.s32.totalorder %s15, 0
      %p182 = por %p180, %p181
      %p183 = scmp.ne.s32.totalorder %s175, %s177
      %p184 = scmp.eq.s32.totalorder %s20, 1
      %p185 = por %p183, %p184
      %p186 = scmp.ne.s32.totalorder %s177, %s178
      %p187 = scmp.eq.s32.totalorder %s20, 0
      %p188 = por %p186, %p187
      %p189 = scmp.ne.s32.totalorder %s177, %s178
      %p190 = scmp.eq.s32.totalorder %s21, 1
      %p191 = por %p189, %p190
      %p193 = scmp.ne.s32.totalorder %s178, %s192
      %p194 = scmp.eq.s32.totalorder %s21, 0
      %p195 = por %p193, %p194
      %s196 = ssub.s32 %s15, %s22
      %p197 = scmp.eq.s32.totalorder %s196, 0
      %s199 = sadd.s32 %s198, 1
      %s200 = scalar_select %p197, %s198, %s199
      %p203 = pneg %p197
      %p204 = scmp.eq.s32.totalorder %s15, 1
      %p205 = por %p203, %p204
      %p206 = scmp.ne.s32.totalorder %s198, %s201
      %p207 = scmp.eq.s32.totalorder %s15, 0
      %p208 = por %p206, %p207
      %p209 = scmp.ne.s32.totalorder %s198, %s201
      %p210 = scmp.eq.s32.totalorder %s20, 1
      %p211 = por %p209, %p210
      %p212 = scmp.ne.s32.totalorder %s201, %s202
      %p213 = scmp.eq.s32.totalorder %s20, 0
      %p214 = por %p212, %p213
      %p215 = scmp.ne.s32.totalorder %s201, %s202
      %p216 = scmp.eq.s32.totalorder %s21, 1
      %p217 = por %p215, %p216
      %p219 = scmp.ne.s32.totalorder %s202, %s218
      %p220 = scmp.eq.s32.totalorder %s21, 0
      %p221 = por %p219, %p220
      %p222 = scmp.le.s32.totalorder 1, %s15
      %p223 = scmp.lt.s32.totalorder %s15, 3
      %p224 = pnand %p222, %p223
      %p225 = pneg %p224
      // Predicated region
      $region9: #{agcb_patch_forward.1} parent=5 // pred_check
        _
      $region10: #{agcb_patch_forward.1} parent=5 // pred_check_branch
        %227 = sbr.rel (%p224) target = $region12
      $region11: #{agcb_patch_forward.1} parent=5 // pred_region
        %s228 = ssub.s32 %s15, 1
        // Predicated region
        $region13: #{agcb_patch_forward.1} parent=11 // pred_check
          %p229 = pneg %p62
        $region14: #{agcb_patch_forward.1} parent=11 // pred_check_branch
          %231 = sbr.rel (%p229) target = $region16
        $region15: #{agcb_patch_forward.1} parent=11 // pred_region
          _
        $region16: #{agcb_patch_forward.1} parent=11 // pred_fallthru
          _
        // Predicated region
        $region17: #{agcb_patch_forward.1} parent=11 // pred_check
          %p232 = pneg %p83
        $region18: #{agcb_patch_forward.1} parent=11 // pred_check_branch
          %234 = sbr.rel (%p232) target = $region20
        $region19: #{agcb_patch_forward.1} parent=11 // pred_region
          _
        $region20: #{agcb_patch_forward.1} parent=11 // pred_fallthru
          _
        // Predicated region
        $region21: #{agcb_patch_forward.1} parent=11 // pred_check
          %p235 = pneg %p104
        $region22: #{agcb_patch_forward.1} parent=11 // pred_check_branch
          %237 = sbr.rel (%p235) target = $region24
        $region23: #{agcb_patch_forward.1} parent=11 // pred_region
          _
        $region24: #{agcb_patch_forward.1} parent=11 // pred_fallthru
          _
        // Predicated region
        $region25: #{agcb_patch_forward.1} parent=11 // pred_check
          %p238 = pneg %p125
        $region26: #{agcb_patch_forward.1} parent=11 // pred_check_branch
          %240 = sbr.rel (%p238) target = $region28
        $region27: #{agcb_patch_forward.1} parent=11 // pred_region
          _
        $region28: #{agcb_patch_forward.1} parent=11 // pred_fallthru
          _
        // Predicated region
        $region29: #{agcb_patch_forward.1} parent=11 // pred_check
          %p241 = pneg %p146
        $region30: #{agcb_patch_forward.1} parent=11 // pred_check_branch
          %243 = sbr.rel (%p241) target = $region32
        $region31: #{agcb_patch_forward.1} parent=11 // pred_region
          _
        $region32: #{agcb_patch_forward.1} parent=11 // pred_fallthru
          _
        // Predicated region
        $region33: #{agcb_patch_forward.1} parent=11 // pred_check
          %p244 = pneg %p167
        $region34: #{agcb_patch_forward.1} parent=11 // pred_check_branch
          %246 = sbr.rel (%p244) target = $region36
        $region35: #{agcb_patch_forward.1} parent=11 // pred_region
          _
        $region36: #{agcb_patch_forward.1} parent=11 // pred_fallthru
          _
        // Predicated region
        $region37: #{agcb_patch_forward.1} parent=11 // pred_check
          %p247 = pneg %p188
        $region38: #{agcb_patch_forward.1} parent=11 // pred_check_branch
          %249 = sbr.rel (%p247) target = $region40
        $region39: #{agcb_patch_forward.1} parent=11 // pred_region
          %251 = vsyncadd [#allocation4], 0
          %s253 = sshll.u32 %s7, 4
          %s254 = int_to_ptr.vmem [resolvable:$true] %s253
          %256 = dma.vmem_to_smem %s254, 16, [#allocation3], [#allocation4]
        $region40: #{agcb_patch_forward.1} parent=11 // pred_fallthru
          _
      $region12: #{agcb_patch_forward.1} parent=5 // pred_fallthru
        _
      %p257 = scmp.lt.s32.totalorder %s15, 2
      // Predicated region
      $region41: #{agcb_patch_forward.1} parent=5 // pred_check
        %p258 = pneg %p257
      $region42: #{agcb_patch_forward.1} parent=5 // pred_check_branch
        %260 = sbr.rel (%p258) target = $region44
      $region43: #{agcb_patch_forward.1} parent=5 // pred_region
        // Predicated region
        $region45: #{agcb_patch_forward.1} parent=43 // pred_check
          %p261 = pneg %p35
        $region46: #{agcb_patch_forward.1} parent=43 // pred_check_branch
          %263 = sbr.rel (%p261) target = $region48
        $region47: #{agcb_patch_forward.1} parent=43 // pred_region
          %p264 = scmp.lt.s32.totalorder %s15, 1
          %s265 = scalar_select %p264, %s15, 1
          %s266 = smul.addr %s265, 32
          %s267 = smul.addr %s266, 8
          %s268 = scalar_lea.vmem %s0, %s267
        $region48: #{agcb_patch_forward.1} parent=43 // pred_fallthru
          _
      $region44: #{agcb_patch_forward.1} parent=5 // pred_fallthru
        _
      %p269 = scmp.le.s32.totalorder 1, %s15
      %p270 = scmp.lt.s32.totalorder %s15, 3
      %p271 = pnand %p269, %p270
      %p272 = pneg %p271
      // Predicated region
      $region49: #{agcb_patch_forward.1} parent=5 // pred_check
        _
      $region50: #{agcb_patch_forward.1} parent=5 // pred_check_branch
        %274 = sbr.rel (%p271) target = $region52
      $region51: #{agcb_patch_forward.1} parent=5 // pred_region
        %s275 = ssub.s32 %s15, 1
        // Predicated region
        $region53: #{agcb_patch_forward.1} parent=51 // pred_check
          %p276 = pneg %p188
        $region54: #{agcb_patch_forward.1} parent=51 // pred_check_branch
          %278 = sbr.rel (%p276) target = $region56
        $region55: #{agcb_patch_forward.1} parent=51 // pred_region
          %280 = dma.done [#allocation4], 16
        $region56: #{agcb_patch_forward.1} parent=51 // pred_fallthru
          _
        %281 = sfence
        %p282 = scmp.lt.s32.totalorder %s20, 1
        %s283 = scalar_select %p282, %s20, 1
        %s284 = smul.addr %s283, 32
        %s285 = smul.addr %s284, 8
        %s286 = scalar_lea.vmem %s0, %s285
        %p287 = pneg %p41
        %p288 = pneg %p38
        %p289 = pneg %p62
        %p290 = pneg %p59
        %p291 = pneg %p83
        %p292 = pneg %p80
        %p293 = pneg %p104
        %p294 = pneg %p101
        %p295 = pneg %p125
        %p296 = pneg %p122
        %p297 = pneg %p146
        %p298 = pneg %p143
        %p299 = pneg %p167
        %p300 = pneg %p164
        %p301 = pneg %p188
        %p302 = pneg %p185
        %p303 = pneg %p214
        %p304 = pneg %p211
        %p305 = scmp.lt.s32.totalorder %s20, 1
        %s306 = scalar_select %p305, %s20, 1
        %s307 = smul.addr %s306, 32
        %s308 = smul.addr %s307, 8
        %s309 = scalar_lea.vmem %s8, %s308
        %p310 = scmp.lt.s32.totalorder %s20, 1
        %s311 = scalar_select %p310, %s20, 1
        %s312 = smul.addr %s311, 32
        %s313 = smul.addr %s312, 8
        %s314 = scalar_lea.vmem %s0, %s313
        %p315 = scmp.lt.s32.totalorder %s20, 1
        %s316 = scalar_select %p315, %s20, 1
        %s317 = smul.addr %s316, 32
        %s318 = smul.addr %s317, 8
        %s319 = scalar_lea.vmem %s8, %s318
        %s321 = sld [smem:[#allocation3]]
        %s322 = sld [smem:[#allocation3 + $0x1]]
        %v323 = vld [vmem:[%s314] sm:$0xff]
        %v324 = vld [vmem:[%s314 + $0x10] sm:$0xff]
        %v325 = vld [vmem:[%s314 + $0x20] sm:$0xff]
        %v326 = vld [vmem:[%s314 + $0x30] sm:$0xff]
        %v327 = vld [vmem:[%s314 + $0x40] sm:$0xff]
        %v328 = vld [vmem:[%s314 + $0x50] sm:$0xff]
        %v329 = vld [vmem:[%s314 + $0x60] sm:$0xff]
        %v330 = vld [vmem:[%s314 + $0x70] sm:$0xff]
        %vm331 = vcmask 31744
        %v332 = vsel %vm331, %v323, -inf
        %v333 = vsel %vm331, %v324, -inf
        %v334 = vsel %vm331, %v325, -inf
        %v335 = vsel %vm331, %v326, -inf
        %v336 = vsel %vm331, %v327, -inf
        %v337 = vmax.f32 %v332, %v336
        %v338 = vsel %vm331, %v328, -inf
        %v339 = vmax.f32 %v333, %v338
        %v340 = vsel %vm331, %v329, -inf
        %v341 = vmax.f32 %v334, %v340
        %v342 = vsel %vm331, %v330, -inf
        %v343 = vmax.f32 %v335, %v342
        %v344 = vmax.f32 %v337, %v339
        %v345 = vmax.f32 %v341, %v343
        %v346 = vmax.f32 %v344, %v345
        %v347 = vrot.slane %v346, 4
        %v348 = vmax.f32 %v346, %v347
        %v349 = vrot.slane %v348, 2
        %v350 = vmax.f32 %v348, %v349
        %v351 = vrot.slane %v350, 1
        %v352 = vmax.f32 %v350, %v351
        %v353 = vld [vmem:[%s314 + $0x8] sm:$0xff]
        %v354 = vld [vmem:[%s314 + $0x18] sm:$0xff]
        %v355 = vld [vmem:[%s314 + $0x28] sm:$0xff]
        %v356 = vld [vmem:[%s314 + $0x38] sm:$0xff]
        %v357 = vld [vmem:[%s314 + $0x48] sm:$0xff]
        %v358 = vld [vmem:[%s314 + $0x58] sm:$0xff]
        %v359 = vld [vmem:[%s314 + $0x68] sm:$0xff]
        %v360 = vld [vmem:[%s314 + $0x78] sm:$0xff]
        %v361 = vsel %vm331, %v353, -inf
        %v362 = vsel %vm331, %v354, -inf
        %v363 = vsel %vm331, %v355, -inf
        %v364 = vsel %vm331, %v356, -inf
        %v365 = vsel %vm331, %v357, -inf
        %v366 = vmax.f32 %v361, %v365
        %v367 = vsel %vm331, %v358, -inf
        %v368 = vmax.f32 %v362, %v367
        %v369 = vsel %vm331, %v359, -inf
        %v370 = vmax.f32 %v363, %v369
        %v371 = vsel %vm331, %v360, -inf
        %v372 = vmax.f32 %v364, %v371
        %v373 = vmax.f32 %v366, %v368
        %v374 = vmax.f32 %v370, %v372
        %v375 = vmax.f32 %v373, %v374
        %v376 = vrot.slane %v375, 4
        %v377 = vmax.f32 %v375, %v376
        %v378 = vrot.slane %v377, 2
        %v379 = vmax.f32 %v377, %v378
        %v380 = vrot.slane %v379, 1
        %v381 = vmax.f32 %v379, %v380
        %s382 = scalar_lea.vmem %s314, 128
        %v383 = vld [vmem:[%s382] sm:$0xff]
        %v384 = vld [vmem:[%s382 + $0x10] sm:$0xff]
        %v385 = vld [vmem:[%s382 + $0x20] sm:$0xff]
        %v386 = vld [vmem:[%s382 + $0x30] sm:$0xff]
        %v387 = vld [vmem:[%s382 + $0x40] sm:$0xff]
        %v388 = vld [vmem:[%s382 + $0x50] sm:$0xff]
        %v389 = vld [vmem:[%s382 + $0x60] sm:$0xff]
        %v390 = vld [vmem:[%s382 + $0x70] sm:$0xff]
        %v391 = vsel %vm331, %v383, -inf
        %v392 = vsel %vm331, %v384, -inf
        %v393 = vsel %vm331, %v385, -inf
        %v394 = vsel %vm331, %v386, -inf
        %v395 = vsel %vm331, %v387, -inf
        %v396 = vmax.f32 %v391, %v395
        %v397 = vsel %vm331, %v388, -inf
        %v398 = vmax.f32 %v392, %v397
        %v399 = vsel %vm331, %v389, -inf
        %v400 = vmax.f32 %v393, %v399
        %v401 = vsel %vm331, %v390, -inf
        %v402 = vmax.f32 %v394, %v401
        %v403 = vmax.f32 %v396, %v398
        %v404 = vmax.f32 %v400, %v402
        %v405 = vmax.f32 %v403, %v404
        %v406 = vrot.slane %v405, 4
        %v407 = vmax.f32 %v405, %v406
        %v408 = vrot.slane %v407, 2
        %v409 = vmax.f32 %v407, %v408
        %v410 = vrot.slane %v409, 1
        %v411 = vmax.f32 %v409, %v410
        %v412 = vld [vmem:[%s382 + $0x8] sm:$0xff]
        %v413 = vld [vmem:[%s382 + $0x18] sm:$0xff]
        %v414 = vld [vmem:[%s382 + $0x28] sm:$0xff]
        %v415 = vld [vmem:[%s382 + $0x38] sm:$0xff]
        %v416 = vld [vmem:[%s382 + $0x48] sm:$0xff]
        %v417 = vld [vmem:[%s382 + $0x58] sm:$0xff]
        %v418 = vld [vmem:[%s382 + $0x68] sm:$0xff]
        %v419 = vld [vmem:[%s382 + $0x78] sm:$0xff]
        %v420 = vsel %vm331, %v412, -inf
        %v421 = vsel %vm331, %v413, -inf
        %v422 = vsel %vm331, %v414, -inf
        %v423 = vsel %vm331, %v415, -inf
        %v424 = vsel %vm331, %v416, -inf
        %v425 = vmax.f32 %v420, %v424
        %v426 = vsel %vm331, %v417, -inf
        %v427 = vmax.f32 %v421, %v426
        %v428 = vsel %vm331, %v418, -inf
        %v429 = vmax.f32 %v422, %v428
        %v430 = vsel %vm331, %v419, -inf
        %v431 = vmax.f32 %v423, %v430
        %v432 = vmax.f32 %v425, %v427
        %v433 = vmax.f32 %v429, %v431
        %v434 = vmax.f32 %v432, %v433
        %v435 = vrot.slane %v434, 4
        %v436 = vmax.f32 %v434, %v435
        %v437 = vrot.slane %v436, 2
        %v438 = vmax.f32 %v436, %v437
        %v439 = vrot.slane %v438, 1
        %v440 = vmax.f32 %v438, %v439
        %vm441 = vcmask 1040384
        %v442 = vsel %vm441, %v352, %v381
        %vm443 = vcmask 1041408
        %v444 = vsel %vm443, %v442, %v411
        %vm445 = vcmask 1042432
        %v446 = vsel %vm445, %v444, %v440
        %v447 = vpack.c.bf16 %v446, %v446
        %v448 = vld [vmem:[%s1] sm:$0x3]
        %v449 = vld [vmem:[%s2] sm:$0x1]
        %v451 = vperm.slane %v449, 0
        %v454 = vsel %vm331, %v447, 0
        %v457 = vsel %vm443, %v448, 0
        %459 = vmatpush.bf16.msra.mxu0 0
        %460 = vmatpush.bf16.msra.mxu0 0
        %461 = vmatpush.bf16.msra.mxu0 0
        %462 = vmatpush.bf16.msra.mxu0 0
        %463 = vmatpush.bf16.msra.mxu0 0
        %464 = vmatpush.bf16.msra.mxu0 0
        %465 = vmatpush.bf16.msra.mxu0 0
        %466 = vmatpush.bf16.msra.mxu0 %v457
        %467 = vmatmul.bf16.gmra.mxu0 %v454
        %v468 = vpop.f32.mrf.mxu0
        %v469 = vadd.f32 %v451, %v468
        %v470 = vpop.f32.mrf.mxu0
        %471 = vdwg.mxu0
        %v472 = vpack.c.bf16 %v469, %v469
        %474 = vrot.lane.b32.xlu0 %v472, 126
        %v475 = vpop.permute.xlu0 %474
        %vm476 = vcmask 15360
        %v478 = vsel %vm476, %v472, 0
        %v481 = vsel %vm476, %v475, 0
        %483 = vmatpush.bf16.xpose.msra.mxu0 0
        %484 = vmatpush.bf16.xpose.msra.mxu0 0
        %485 = vmatpush.bf16.xpose.msra.mxu0 0
        %486 = vmatpush.bf16.xpose.msra.mxu0 0
        %487 = vmatpush.bf16.xpose.msra.mxu0 0
        %488 = vmatpush.bf16.xpose.msra.mxu0 0
        %489 = vmatpush.bf16.xpose.msra.mxu0 0
        %490 = vmatpush.bf16.xpose.msra.mxu0 %v481
        %491 = vmatmul.bf16.gmra.mxu0 %v478
        %v492 = vpop.f32.mrf.mxu0
        %v493 = vadd.f32 0.0, %v492
        %v494 = vpop.f32.mrf.mxu0
        %495 = vdwg.mxu0
        %vm496 = vcmask 27648
        %v497 = vsel %vm496, %v493, -inf
        %498 = vmax.xlane.f32.xlu0 %v497
        %v499 = vpop.xlane.xlu0 %498
        %v500 = vsub.f32 %v493, %v499
        %v501 = vmul.f32 %v500, 1.442695
        %v502 = vpow.pop %v501
        %v503 = vsel %vm496, %v502, 0.0
        %504 = vadd.xlane.f32.xlu0 %v503
        %v505 = vpop.xlane.xlu0 %504
        %v506 = vrcp.pop %v505
        %v507 = vmul.f32 %v505, %v506
        %v508 = vsub.f32 2.0, %v507
        %v509 = vmul.f32 %v506, %v508
        %v510 = vmul.f32 %v502, %v509
        %v511 = vpack.c.bf16 %v510, %v510
        %512 = vrot.lane.b32.xlu0 %v472, 124
        %v513 = vpop.permute.xlu0 %512
        %v515 = vsel %vm331, %v511, 0
        %v518 = vsel %vm443, %v513, 0
        %520 = vmatpush.bf16.msra.mxu0 0
        %521 = vmatpush.bf16.msra.mxu0 0
        %522 = vmatpush.bf16.msra.mxu0 0
        %523 = vmatpush.bf16.msra.mxu0 0
        %524 = vmatpush.bf16.msra.mxu0 0
        %525 = vmatpush.bf16.msra.mxu0 0
        %526 = vmatpush.bf16.msra.mxu0 0
        %527 = vmatpush.bf16.msra.mxu0 %v518
        %528 = vmatmul.bf16.gmra.mxu0 %v515
        %v529 = vpop.f32.mrf.mxu0
        %v530 = vadd.f32 0.0, %v529
        %v531 = vpop.f32.mrf.mxu0
        %532 = vdwg.mxu0
        %v533 = vstv %s321
        %v534 = vmul.f32 %v533, %v530
        %v535 = vadd.f32 %v534, %v446
        %v536 = vxor.u32 %v535, 2147483648
        %v537 = vmul.f32 %v536, 1.442695
        %v538 = vpow.pop %v537
        %v539 = vadd.f32 %v538, 1.0
        %v540 = vrcp.pop %v539
        %v541 = vmul.f32 %v539, %v540
        %v542 = vsub.f32 1.0, %v541
        %v543 = vmul.f32 %v540, %v542
        %v544 = vadd.f32 %v540, %v543
        %vm545 = vweird.f32 %v539
        %vm546 = vweird.f32 %v540
        %vm547 = vmor %vm545, %vm546
        %v548 = vsel %vm547, %v540, %v544
        %v549 = vand.u32 2147483647, %v539
        %vm550 = vcmp.eq.f32.partialorder %v549, 8.507059e+37
        %v551 = vand.u32 %v539, 2147483648
        %v552 = vor.u32 1.1754944e-38, %v551
        %v553 = vsel %vm550, %v552, %v548
        %v554 = vmul.f32 1.0, %v553
        %555 = vst.msk [vmem:[#allocation2] sm:$0xff] %vm331, 0.0
        %556 = vst.msk [vmem:[#allocation2 + $0x8] sm:$0xff] %vm331, 0.0
        %557 = vst.msk [vmem:[#allocation2 + $0x10] sm:$0xff] %vm331, 0.0
        %558 = vst.msk [vmem:[#allocation2 + $0x18] sm:$0xff] %vm331, 0.0
        %s559 = scalar_lea.vmem [#allocation2], 544
        %560 = vst.msk [vmem:[%s559] sm:$0xff] %vm331, 0.0
        %561 = vst.msk [vmem:[%s559 + $0x8] sm:$0xff] %vm331, 0.0
        %562 = vst.msk [vmem:[%s559 + $0x10] sm:$0xff] %vm331, 0.0
        %563 = vst.msk [vmem:[%s559 + $0x18] sm:$0xff] %vm331, 0.0
        %s564 = scalar_lea.vmem [#allocation2], 32
        %565 = vst.msk [vmem:[%s564] sm:$0xff] %vm331, 0.0
        %566 = vst.msk [vmem:[%s564 + $0x20] sm:$0xff] %vm331, 0.0
        %567 = vst.msk [vmem:[%s564 + $0x40] sm:$0xff] %vm331, 0.0
        %568 = vst.msk [vmem:[%s564 + $0x60] sm:$0xff] %vm331, 0.0
        %569 = vst.msk [vmem:[%s564 + $0x80] sm:$0xff] %vm331, 0.0
        %570 = vst.msk [vmem:[%s564 + $0xa0] sm:$0xff] %vm331, 0.0
        %571 = vst.msk [vmem:[%s564 + $0xc0] sm:$0xff] %vm331, 0.0
        %572 = vst.msk [vmem:[%s564 + $0xe0] sm:$0xff] %vm331, 0.0
        %573 = vst.msk [vmem:[%s564 + $0x100] sm:$0xff] %vm331, 0.0
        %574 = vst.msk [vmem:[%s564 + $0x120] sm:$0xff] %vm331, 0.0
        %575 = vst.msk [vmem:[%s564 + $0x140] sm:$0xff] %vm331, 0.0
        %576 = vst.msk [vmem:[%s564 + $0x160] sm:$0xff] %vm331, 0.0
        %577 = vst.msk [vmem:[%s564 + $0x180] sm:$0xff] %vm331, 0.0
        %578 = vst.msk [vmem:[%s564 + $0x1a0] sm:$0xff] %vm331, 0.0
        %579 = vst.msk [vmem:[%s564 + $0x1c0] sm:$0xff] %vm331, 0.0
        %580 = vst.msk [vmem:[%s564 + $0x1e0] sm:$0xff] %vm331, 0.0
        %581 = vst.msk [vmem:[%s564 + $0x18] sm:$0xff] %vm331, 0.0
        %582 = vst.msk [vmem:[%s564 + $0x38] sm:$0xff] %vm331, 0.0
        %583 = vst.msk [vmem:[%s564 + $0x58] sm:$0xff] %vm331, 0.0
        %584 = vst.msk [vmem:[%s564 + $0x78] sm:$0xff] %vm331, 0.0
        %585 = vst.msk [vmem:[%s564 + $0x98] sm:$0xff] %vm331, 0.0
        %586 = vst.msk [vmem:[%s564 + $0xb8] sm:$0xff] %vm331, 0.0
        %587 = vst.msk [vmem:[%s564 + $0xd8] sm:$0xff] %vm331, 0.0
        %588 = vst.msk [vmem:[%s564 + $0xf8] sm:$0xff] %vm331, 0.0
        %589 = vst.msk [vmem:[%s564 + $0x118] sm:$0xff] %vm331, 0.0
        %590 = vst.msk [vmem:[%s564 + $0x138] sm:$0xff] %vm331, 0.0
        %591 = vst.msk [vmem:[%s564 + $0x158] sm:$0xff] %vm331, 0.0
        %592 = vst.msk [vmem:[%s564 + $0x178] sm:$0xff] %vm331, 0.0
        %593 = vst.msk [vmem:[%s564 + $0x198] sm:$0xff] %vm331, 0.0
        %594 = vst.msk [vmem:[%s564 + $0x1b8] sm:$0xff] %vm331, 0.0
        %595 = vst.msk [vmem:[%s564 + $0x1d8] sm:$0xff] %vm331, 0.0
        %596 = vst.msk [vmem:[%s564 + $0x1f8] sm:$0xff] %vm331, 0.0
        %v597 = vld [vmem:[%s314] sm:$0xff]
        %v598 = vld [vmem:[%s314 + $0x10] sm:$0xff]
        %v599 = vld [vmem:[%s314 + $0x20] sm:$0xff]
        %v600 = vld [vmem:[%s314 + $0x30] sm:$0xff]
        %v601 = vld [vmem:[%s314 + $0x40] sm:$0xff]
        %v602 = vld [vmem:[%s314 + $0x50] sm:$0xff]
        %v603 = vld [vmem:[%s314 + $0x60] sm:$0xff]
        %v604 = vld [vmem:[%s314 + $0x70] sm:$0xff]
        %v605 = vpack.c.bf16 %v598, %v597
        %v606 = vpack.c.bf16 %v600, %v599
        %v607 = vpack.c.bf16 %v602, %v601
        %v608 = vpack.c.bf16 %v604, %v603
        %v609 = vld [vmem:[%s3] sm:$0x3]
        %v610 = vld [vmem:[%s4] sm:$0x1]
        %v612 = vperm.slane %v610, 0
        %v615 = vsel %vm331, %v605, 0
        %v618 = vsel %vm331, %v606, 0
        %v621 = vsel %vm331, %v607, 0
        %v624 = vsel %vm331, %v608, 0
        %v627 = vsel %vm443, %v609, 0
        %629 = vmatpush.bf16.msra.mxu0 0
        %630 = vmatpush.bf16.msra.mxu0 0
        %631 = vmatpush.bf16.msra.mxu0 0
        %632 = vmatpush.bf16.msra.mxu0 0
        %633 = vmatpush.bf16.msra.mxu0 0
        %634 = vmatpush.bf16.msra.mxu0 0
        %635 = vmatpush.bf16.msra.mxu0 0
        %636 = vmatpush.bf16.msra.mxu0 %v627
        %637 = vmatmul.bf16.gmra.mxu0 %v615
        %v638 = vpop.f32.mrf.mxu0
        %v639 = vadd.f32 %v612, %v638
        %v640 = vpop.f32.mrf.mxu0
        %v641 = vadd.f32 %v612, %v640
        %642 = vmatmul.bf16.gmra.mxu0 %v618
        %v643 = vpop.f32.mrf.mxu0
        %v644 = vadd.f32 %v612, %v643
        %v645 = vpop.f32.mrf.mxu0
        %v646 = vadd.f32 %v612, %v645
        %647 = vmatmul.bf16.gmra.mxu0 %v621
        %v648 = vpop.f32.mrf.mxu0
        %v649 = vadd.f32 %v612, %v648
        %v650 = vpop.f32.mrf.mxu0
        %v651 = vadd.f32 %v612, %v650
        %652 = vmatmul.bf16.gmra.mxu0 %v624
        %v653 = vpop.f32.mrf.mxu0
        %v654 = vadd.f32 %v612, %v653
        %v655 = vpop.f32.mrf.mxu0
        %v656 = vadd.f32 %v612, %v655
        %657 = vdwg.mxu0
        %v658 = vpack.c.bf16 %v641, %v639
        %v659 = vpack.c.bf16 %v646, %v644
        %v660 = vpack.c.bf16 %v651, %v649
        %v661 = vpack.c.bf16 %v656, %v654
        %666 = vrot.lane.b32.xlu0 %v658, 126
        %v667 = vpop.permute.xlu0 %666
        %668 = vrot.lane.b32.xlu0 %v659, 126
        %v669 = vpop.permute.xlu0 %668
        %670 = vrot.lane.b32.xlu0 %v660, 126
        %v671 = vpop.permute.xlu0 %670
        %672 = vrot.lane.b32.xlu0 %v661, 126
        %v673 = vpop.permute.xlu0 %672
        %v675 = vsel %vm476, %v658, 0
        %v678 = vsel %vm476, %v659, 0
        %v681 = vsel %vm476, %v660, 0
        %v684 = vsel %vm476, %v661, 0
        %v687 = vsel %vm476, %v667, 0
        %v690 = vsel %vm476, %v669, 0
        %v693 = vsel %vm476, %v671, 0
        %v696 = vsel %vm476, %v673, 0
        %698 = vmatpush.bf16.xpose.msra.mxu0 0
        %699 = vmatpush.bf16.xpose.msra.mxu0 0
        %700 = vmatpush.bf16.xpose.msra.mxu0 0
        %701 = vmatpush.bf16.xpose.msra.mxu0 0
        %702 = vmatpush.bf16.xpose.msra.mxu0 %v696
        %703 = vmatpush.bf16.xpose.msra.mxu0 %v693
        %704 = vmatpush.bf16.xpose.msra.mxu0 %v690
        %705 = vmatpush.bf16.xpose.msra.mxu0 %v687
        %706 = vmatmul.bf16.gmra.mxu0 %v675
        %v707 = vpop.f32.mrf.mxu0
        %v708 = vadd.f32 0.0, %v707
        %v709 = vpop.f32.mrf.mxu0
        %v710 = vadd.f32 0.0, %v709
        %711 = vmatmul.bf16.gmra.mxu0 %v678
        %v712 = vpop.f32.mrf.mxu0
        %v713 = vadd.f32 0.0, %v712
        %v714 = vpop.f32.mrf.mxu0
        %v715 = vadd.f32 0.0, %v714
        %716 = vmatmul.bf16.gmra.mxu0 %v681
        %v717 = vpop.f32.mrf.mxu0
        %v718 = vadd.f32 0.0, %v717
        %v719 = vpop.f32.mrf.mxu0
        %v720 = vadd.f32 0.0, %v719
        %721 = vmatmul.bf16.gmra.mxu0 %v684
        %v722 = vpop.f32.mrf.mxu0
        %v723 = vadd.f32 0.0, %v722
        %v724 = vpop.f32.mrf.mxu0
        %v725 = vadd.f32 0.0, %v724
        %726 = vdwg.mxu0
        %vm727 = vcmask 523264
        %v728 = vsel %vm727, %v708, -inf
        %729 = vmax.xlane.f32.xlu0 %v728
        %v730 = vpop.xlane.xlu0 %729
        %v731 = vsel %vm727, %v710, -inf
        %732 = vmax.xlane.f32.xlu0 %v731
        %v733 = vpop.xlane.xlu0 %732
        %v734 = vsel %vm727, %v713, -inf
        %735 = vmax.xlane.f32.xlu0 %v734
        %v736 = vpop.xlane.xlu0 %735
        %v737 = vsel %vm727, %v715, -inf
        %738 = vmax.xlane.f32.xlu0 %v737
        %v739 = vpop.xlane.xlu0 %738
        %v740 = vsel %vm727, %v718, -inf
        %741 = vmax.xlane.f32.xlu0 %v740
        %v742 = vpop.xlane.xlu0 %741
        %v743 = vsel %vm727, %v720, -inf
        %744 = vmax.xlane.f32.xlu0 %v743
        %v745 = vpop.xlane.xlu0 %744
        %v746 = vsel %vm727, %v723, -inf
        %747 = vmax.xlane.f32.xlu0 %v746
        %v748 = vpop.xlane.xlu0 %747
        %v749 = vsel %vm727, %v725, -inf
        %750 = vmax.xlane.f32.xlu0 %v749
        %v751 = vpop.xlane.xlu0 %750
        %v752 = vsub.f32 %v708, %v730
        %v753 = vsub.f32 %v710, %v733
        %v754 = vsub.f32 %v713, %v736
        %v755 = vsub.f32 %v715, %v739
        %v756 = vsub.f32 %v718, %v742
        %v757 = vsub.f32 %v720, %v745
        %v758 = vsub.f32 %v723, %v748
        %v759 = vsub.f32 %v725, %v751
        %v760 = vmul.f32 %v752, 1.442695
        %v761 = vpow.pop %v760
        %v762 = vmul.f32 %v753, 1.442695
        %v763 = vpow.pop %v762
        %v764 = vmul.f32 %v754, 1.442695
        %v765 = vpow.pop %v764
        %v766 = vmul.f32 %v755, 1.442695
        %v767 = vpow.pop %v766
        %v768 = vmul.f32 %v756, 1.442695
        %v769 = vpow.pop %v768
        %v770 = vmul.f32 %v757, 1.442695
        %v771 = vpow.pop %v770
        %v772 = vmul.f32 %v758, 1.442695
        %v773 = vpow.pop %v772
        %v774 = vmul.f32 %v759, 1.442695
        %v775 = vpow.pop %v774
        %v776 = vsel %vm727, %v761, 0.0
        %777 = vadd.xlane.f32.xlu0 %v776
        %v778 = vpop.xlane.xlu0 %777
        %v779 = vsel %vm727, %v763, 0.0
        %780 = vadd.xlane.f32.xlu0 %v779
        %v781 = vpop.xlane.xlu0 %780
        %v782 = vsel %vm727, %v765, 0.0
        %783 = vadd.xlane.f32.xlu0 %v782
        %v784 = vpop.xlane.xlu0 %783
        %v785 = vsel %vm727, %v767, 0.0
        %786 = vadd.xlane.f32.xlu0 %v785
        %v787 = vpop.xlane.xlu0 %786
        %v788 = vsel %vm727, %v769, 0.0
        %789 = vadd.xlane.f32.xlu0 %v788
        %v790 = vpop.xlane.xlu0 %789
        %v791 = vsel %vm727, %v771, 0.0
        %792 = vadd.xlane.f32.xlu0 %v791
        %v793 = vpop.xlane.xlu0 %792
        %v794 = vsel %vm727, %v773, 0.0
        %795 = vadd.xlane.f32.xlu0 %v794
        %v796 = vpop.xlane.xlu0 %795
        %v797 = vsel %vm727, %v775, 0.0
        %798 = vadd.xlane.f32.xlu0 %v797
        %v799 = vpop.xlane.xlu0 %798
        %v800 = vrcp.pop %v778
        %v801 = vrcp.pop %v781
        %v802 = vrcp.pop %v784
        %v803 = vrcp.pop %v787
        %v804 = vrcp.pop %v790
        %v805 = vrcp.pop %v793
        %v806 = vrcp.pop %v796
        %v807 = vrcp.pop %v799
        %v808 = vmul.f32 %v778, %v800
        %v809 = vmul.f32 %v781, %v801
        %v810 = vmul.f32 %v784, %v802
        %v811 = vmul.f32 %v787, %v803
        %v812 = vmul.f32 %v790, %v804
        %v813 = vmul.f32 %v793, %v805
        %v814 = vmul.f32 %v796, %v806
        %v815 = vmul.f32 %v799, %v807
        %v816 = vsub.f32 2.0, %v808
        %v817 = vsub.f32 2.0, %v809
        %v818 = vsub.f32 2.0, %v810
        %v819 = vsub.f32 2.0, %v811
        %v820 = vsub.f32 2.0, %v812
        %v821 = vsub.f32 2.0, %v813
        %v822 = vsub.f32 2.0, %v814
        %v823 = vsub.f32 2.0, %v815
        %v824 = vmul.f32 %v800, %v816
        %v825 = vmul.f32 %v801, %v817
        %v826 = vmul.f32 %v802, %v818
        %v827 = vmul.f32 %v803, %v819
        %v828 = vmul.f32 %v804, %v820
        %v829 = vmul.f32 %v805, %v821
        %v830 = vmul.f32 %v806, %v822
        %v831 = vmul.f32 %v807, %v823
        %v832 = vmul.f32 %v761, %v824
        %v833 = vmul.f32 %v763, %v825
        %v834 = vmul.f32 %v765, %v826
        %v835 = vmul.f32 %v767, %v827
        %v836 = vmul.f32 %v769, %v828
        %v837 = vmul.f32 %v771, %v829
        %v838 = vmul.f32 %v773, %v830
        %v839 = vmul.f32 %v775, %v831
        %v840 = vpack.c.bf16 %v833, %v832
        %v841 = vpack.c.bf16 %v835, %v834
        %v842 = vpack.c.bf16 %v837, %v836
        %v843 = vpack.c.bf16 %v839, %v838
        %844 = vrot.lane.b32.xlu0 %v658, 124
        %v845 = vpop.permute.xlu0 %844
        %846 = vrot.lane.b32.xlu0 %v659, 124
        %v847 = vpop.permute.xlu0 %846
        %848 = vrot.lane.b32.xlu0 %v660, 124
        %v849 = vpop.permute.xlu0 %848
        %850 = vrot.lane.b32.xlu0 %v661, 124
        %v851 = vpop.permute.xlu0 %850
        %v857 = vsel %vm727, %v840, 0
        %v860 = vsel %vm727, %v841, 0
        %v863 = vsel %vm727, %v842, 0
        %v866 = vsel %vm727, %v843, 0
        %868 = vmatpush.bf16.msra.mxu0 0
        %869 = vmatpush.bf16.msra.mxu0 0
        %870 = vmatpush.bf16.msra.mxu0 0
        %871 = vmatpush.bf16.msra.mxu0 0
        %872 = vmatpush.bf16.msra.mxu0 %v851
        %873 = vmatpush.bf16.msra.mxu0 %v849
        %874 = vmatpush.bf16.msra.mxu0 %v847
        %875 = vmatpush.bf16.msra.mxu0 %v845
        %876 = vmatmul.bf16.gmra.mxu0 %v857
        %v877 = vpop.f32.mrf.mxu0
        %v878 = vadd.f32 0.0, %v877
        %v879 = vpop.f32.mrf.mxu0
        %v880 = vadd.f32 0.0, %v879
        %881 = vmatmul.bf16.gmra.mxu0 %v860
        %v882 = vpop.f32.mrf.mxu0
        %v883 = vadd.f32 0.0, %v882
        %v884 = vpop.f32.mrf.mxu0
        %v885 = vadd.f32 0.0, %v884
        %886 = vmatmul.bf16.gmra.mxu0 %v863
        %v887 = vpop.f32.mrf.mxu0
        %v888 = vadd.f32 0.0, %v887
        %v889 = vpop.f32.mrf.mxu0
        %v890 = vadd.f32 0.0, %v889
        %891 = vmatmul.bf16.gmra.mxu0 %v866
        %v892 = vpop.f32.mrf.mxu0
        %v893 = vadd.f32 0.0, %v892
        %v894 = vpop.f32.mrf.mxu0
        %v895 = vadd.f32 0.0, %v894
        %896 = vdwg.mxu0
        %v897 = vstv %s322
        %v898 = vmul.f32 %v897, %v878
        %v899 = vmul.f32 %v897, %v880
        %v900 = vmul.f32 %v897, %v883
        %v901 = vmul.f32 %v897, %v885
        %v902 = vmul.f32 %v897, %v888
        %v903 = vmul.f32 %v897, %v890
        %v904 = vmul.f32 %v897, %v893
        %v905 = vmul.f32 %v897, %v895
        %v906 = vadd.f32 %v898, %v597
        %v907 = vadd.f32 %v899, %v598
        %v908 = vadd.f32 %v900, %v599
        %v909 = vadd.f32 %v901, %v600
        %v910 = vadd.f32 %v902, %v601
        %v911 = vadd.f32 %v903, %v602
        %v912 = vadd.f32 %v904, %v603
        %v913 = vadd.f32 %v905, %v604
        %v914 = vperm.slane %v554, 0
        %v915 = vmul.f32 %v906, %v914
        %v916 = vmul.f32 %v907, %v914
        %v917 = vmul.f32 %v908, %v914
        %v918 = vmul.f32 %v909, %v914
        %v919 = vmul.f32 %v910, %v914
        %v920 = vmul.f32 %v911, %v914
        %v921 = vmul.f32 %v912, %v914
        %v922 = vmul.f32 %v913, %v914
        %923 = vst.msk [vmem:[%s564 + $0x8] sm:$0xff] %vm331, %v915
        %924 = vst.msk [vmem:[%s564 + $0x28] sm:$0xff] %vm331, %v916
        %925 = vst.msk [vmem:[%s564 + $0x48] sm:$0xff] %vm331, %v917
        %926 = vst.msk [vmem:[%s564 + $0x68] sm:$0xff] %vm331, %v918
        %927 = vst.msk [vmem:[%s564 + $0x88] sm:$0xff] %vm331, %v919
        %928 = vst.msk [vmem:[%s564 + $0xa8] sm:$0xff] %vm331, %v920
        %929 = vst.msk [vmem:[%s564 + $0xc8] sm:$0xff] %vm331, %v921
        %930 = vst.msk [vmem:[%s564 + $0xe8] sm:$0xff] %vm331, %v922
        %v931 = vld [vmem:[%s314 + $0x8] sm:$0xff]
        %v932 = vld [vmem:[%s314 + $0x18] sm:$0xff]
        %v933 = vld [vmem:[%s314 + $0x28] sm:$0xff]
        %v934 = vld [vmem:[%s314 + $0x38] sm:$0xff]
        %v935 = vld [vmem:[%s314 + $0x48] sm:$0xff]
        %v936 = vld [vmem:[%s314 + $0x58] sm:$0xff]
        %v937 = vld [vmem:[%s314 + $0x68] sm:$0xff]
        %v938 = vld [vmem:[%s314 + $0x78] sm:$0xff]
        %v939 = vpack.c.bf16 %v932, %v931
        %v940 = vpack.c.bf16 %v934, %v933
        %v941 = vpack.c.bf16 %v936, %v935
        %v942 = vpack.c.bf16 %v938, %v937
        %v943 = vld [vmem:[%s3] sm:$0x3]
        %v944 = vld [vmem:[%s4] sm:$0x1]
        %v946 = vperm.slane %v944, 0
        %v949 = vsel %vm331, %v939, 0
        %v952 = vsel %vm331, %v940, 0
        %v955 = vsel %vm331, %v941, 0
        %v958 = vsel %vm331, %v942, 0
        %v961 = vsel %vm443, %v943, 0
        %963 = vmatpush.bf16.msra.mxu0 0
        %964 = vmatpush.bf16.msra.mxu0 0
        %965 = vmatpush.bf16.msra.mxu0 0
        %966 = vmatpush.bf16.msra.mxu0 0
        %967 = vmatpush.bf16.msra.mxu0 0
        %968 = vmatpush.bf16.msra.mxu0 0
        %969 = vmatpush.bf16.msra.mxu0 0
        %970 = vmatpush.bf16.msra.mxu0 %v961
        %971 = vmatmul.bf16.gmra.mxu0 %v949
        %v972 = vpop.f32.mrf.mxu0
        %v973 = vadd.f32 %v946, %v972
        %v974 = vpop.f32.mrf.mxu0
        %v975 = vadd.f32 %v946, %v974
        %976 = vmatmul.bf16.gmra.mxu0 %v952
        %v977 = vpop.f32.mrf.mxu0
        %v978 = vadd.f32 %v946, %v977
        %v979 = vpop.f32.mrf.mxu0
        %v980 = vadd.f32 %v946, %v979
        %981 = vmatmul.bf16.gmra.mxu0 %v955
        %v982 = vpop.f32.mrf.mxu0
        %v983 = vadd.f32 %v946, %v982
        %v984 = vpop.f32.mrf.mxu0
        %v985 = vadd.f32 %v946, %v984
        %986 = vmatmul.bf16.gmra.mxu0 %v958
        %v987 = vpop.f32.mrf.mxu0
        %v988 = vadd.f32 %v946, %v987
        %v989 = vpop.f32.mrf.mxu0
        %v990 = vadd.f32 %v946, %v989
        %991 = vdwg.mxu0
        %v992 = vpack.c.bf16 %v975, %v973
        %v993 = vpack.c.bf16 %v980, %v978
        %v994 = vpack.c.bf16 %v985, %v983
        %v995 = vpack.c.bf16 %v990, %v988
        %1000 = vrot.lane.b32.xlu0 %v992, 126
        %v1001 = vpop.permute.xlu0 %1000
        %1002 = vrot.lane.b32.xlu0 %v993, 126
        %v1003 = vpop.permute.xlu0 %1002
        %1004 = vrot.lane.b32.xlu0 %v994, 126
        %v1005 = vpop.permute.xlu0 %1004
        %1006 = vrot.lane.b32.xlu0 %v995, 126
        %v1007 = vpop.permute.xlu0 %1006
        %v1009 = vsel %vm476, %v992, 0
        %v1012 = vsel %vm476, %v993, 0
        %v1015 = vsel %vm476, %v994, 0
        %v1018 = vsel %vm476, %v995, 0
        %v1021 = vsel %vm476, %v1001, 0
        %v1024 = vsel %vm476, %v1003, 0
        %v1027 = vsel %vm476, %v1005, 0
        %v1030 = vsel %vm476, %v1007, 0
        %1032 = vmatpush.bf16.xpose.msra.mxu0 0
        %1033 = vmatpush.bf16.xpose.msra.mxu0 0
        %1034 = vmatpush.bf16.xpose.msra.mxu0 0
        %1035 = vmatpush.bf16.xpose.msra.mxu0 0
        %1036 = vmatpush.bf16.xpose.msra.mxu0 %v1030
        %1037 = vmatpush.bf16.xpose.msra.mxu0 %v1027
        %1038 = vmatpush.bf16.xpose.msra.mxu0 %v1024
        %1039 = vmatpush.bf16.xpose.msra.mxu0 %v1021
        %1040 = vmatmul.bf16.gmra.mxu0 %v1009
        %v1041 = vpop.f32.mrf.mxu0
        %v1042 = vadd.f32 0.0, %v1041
        %v1043 = vpop.f32.mrf.mxu0
        %v1044 = vadd.f32 0.0, %v1043
        %1045 = vmatmul.bf16.gmra.mxu0 %v1012
        %v1046 = vpop.f32.mrf.mxu0
        %v1047 = vadd.f32 0.0, %v1046
        %v1048 = vpop.f32.mrf.mxu0
        %v1049 = vadd.f32 0.0, %v1048
        %1050 = vmatmul.bf16.gmra.mxu0 %v1015
        %v1051 = vpop.f32.mrf.mxu0
        %v1052 = vadd.f32 0.0, %v1051
        %v1053 = vpop.f32.mrf.mxu0
        %v1054 = vadd.f32 0.0, %v1053
        %1055 = vmatmul.bf16.gmra.mxu0 %v1018
        %v1056 = vpop.f32.mrf.mxu0
        %v1057 = vadd.f32 0.0, %v1056
        %v1058 = vpop.f32.mrf.mxu0
        %v1059 = vadd.f32 0.0, %v1058
        %1060 = vdwg.mxu0
        %v1061 = vsel %vm727, %v1042, -inf
        %1062 = vmax.xlane.f32.xlu0 %v1061
        %v1063 = vpop.xlane.xlu0 %1062
        %v1064 = vsel %vm727, %v1044, -inf
        %1065 = vmax.xlane.f32.xlu0 %v1064
        %v1066 = vpop.xlane.xlu0 %1065
        %v1067 = vsel %vm727, %v1047, -inf
        %1068 = vmax.xlane.f32.xlu0 %v1067
        %v1069 = vpop.xlane.xlu0 %1068
        %v1070 = vsel %vm727, %v1049, -inf
        %1071 = vmax.xlane.f32.xlu0 %v1070
        %v1072 = vpop.xlane.xlu0 %1071
        %v1073 = vsel %vm727, %v1052, -inf
        %1074 = vmax.xlane.f32.xlu0 %v1073
        %v1075 = vpop.xlane.xlu0 %1074
        %v1076 = vsel %vm727, %v1054, -inf
        %1077 = vmax.xlane.f32.xlu0 %v1076
        %v1078 = vpop.xlane.xlu0 %1077
        %v1079 = vsel %vm727, %v1057, -inf
        %1080 = vmax.xlane.f32.xlu0 %v1079
        %v1081 = vpop.xlane.xlu0 %1080
        %v1082 = vsel %vm727, %v1059, -inf
        %1083 = vmax.xlane.f32.xlu0 %v1082
        %v1084 = vpop.xlane.xlu0 %1083
        %v1085 = vsub.f32 %v1042, %v1063
        %v1086 = vsub.f32 %v1044, %v1066
        %v1087 = vsub.f32 %v1047, %v1069
        %v1088 = vsub.f32 %v1049, %v1072
        %v1089 = vsub.f32 %v1052, %v1075
        %v1090 = vsub.f32 %v1054, %v1078
        %v1091 = vsub.f32 %v1057, %v1081
        %v1092 = vsub.f32 %v1059, %v1084
        %v1093 = vmul.f32 %v1085, 1.442695
        %v1094 = vpow.pop %v1093
        %v1095 = vmul.f32 %v1086, 1.442695
        %v1096 = vpow.pop %v1095
        %v1097 = vmul.f32 %v1087, 1.442695
        %v1098 = vpow.pop %v1097
        %v1099 = vmul.f32 %v1088, 1.442695
        %v1100 = vpow.pop %v1099
        %v1101 = vmul.f32 %v1089, 1.442695
        %v1102 = vpow.pop %v1101
        %v1103 = vmul.f32 %v1090, 1.442695
        %v1104 = vpow.pop %v1103
        %v1105 = vmul.f32 %v1091, 1.442695
        %v1106 = vpow.pop %v1105
        %v1107 = vmul.f32 %v1092, 1.442695
        %v1108 = vpow.pop %v1107
        %v1109 = vsel %vm727, %v1094, 0.0
        %1110 = vadd.xlane.f32.xlu0 %v1109
        %v1111 = vpop.xlane.xlu0 %1110
        %v1112 = vsel %vm727, %v1096, 0.0
        %1113 = vadd.xlane.f32.xlu0 %v1112
        %v1114 = vpop.xlane.xlu0 %1113
        %v1115 = vsel %vm727, %v1098, 0.0
        %1116 = vadd.xlane.f32.xlu0 %v1115
        %v1117 = vpop.xlane.xlu0 %1116
        %v1118 = vsel %vm727, %v1100, 0.0
        %1119 = vadd.xlane.f32.xlu0 %v1118
        %v1120 = vpop.xlane.xlu0 %1119
        %v1121 = vsel %vm727, %v1102, 0.0
        %1122 = vadd.xlane.f32.xlu0 %v1121
        %v1123 = vpop.xlane.xlu0 %1122
        %v1124 = vsel %vm727, %v1104, 0.0
        %1125 = vadd.xlane.f32.xlu0 %v1124
        %v1126 = vpop.xlane.xlu0 %1125
        %v1127 = vsel %vm727, %v1106, 0.0
        %1128 = vadd.xlane.f32.xlu0 %v1127
        %v1129 = vpop.xlane.xlu0 %1128
        %v1130 = vsel %vm727, %v1108, 0.0
        %1131 = vadd.xlane.f32.xlu0 %v1130
        %v1132 = vpop.xlane.xlu0 %1131
        %v1133 = vrcp.pop %v1111
        %v1134 = vrcp.pop %v1114
        %v1135 = vrcp.pop %v1117
        %v1136 = vrcp.pop %v1120
        %v1137 = vrcp.pop %v1123
        %v1138 = vrcp.pop %v1126
        %v1139 = vrcp.pop %v1129
        %v1140 = vrcp.pop %v1132
        %v1141 = vmul.f32 %v1111, %v1133
        %v1142 = vmul.f32 %v1114, %v1134
        %v1143 = vmul.f32 %v1117, %v1135
        %v1144 = vmul.f32 %v1120, %v1136
        %v1145 = vmul.f32 %v1123, %v1137
        %v1146 = vmul.f32 %v1126, %v1138
        %v1147 = vmul.f32 %v1129, %v1139
        %v1148 = vmul.f32 %v1132, %v1140
        %v1149 = vsub.f32 2.0, %v1141
        %v1150 = vsub.f32 2.0, %v1142
        %v1151 = vsub.f32 2.0, %v1143
        %v1152 = vsub.f32 2.0, %v1144
        %v1153 = vsub.f32 2.0, %v1145
        %v1154 = vsub.f32 2.0, %v1146
        %v1155 = vsub.f32 2.0, %v1147
        %v1156 = vsub.f32 2.0, %v1148
        %v1157 = vmul.f32 %v1133, %v1149
        %v1158 = vmul.f32 %v1134, %v1150
        %v1159 = vmul.f32 %v1135, %v1151
        %v1160 = vmul.f32 %v1136, %v1152
        %v1161 = vmul.f32 %v1137, %v1153
        %v1162 = vmul.f32 %v1138, %v1154
        %v1163 = vmul.f32 %v1139, %v1155
        %v1164 = vmul.f32 %v1140, %v1156
        %v1165 = vmul.f32 %v1094, %v1157
        %v1166 = vmul.f32 %v1096, %v1158
        %v1167 = vmul.f32 %v1098, %v1159
        %v1168 = vmul.f32 %v1100, %v1160
        %v1169 = vmul.f32 %v1102, %v1161
        %v1170 = vmul.f32 %v1104, %v1162
        %v1171 = vmul.f32 %v1106, %v1163
        %v1172 = vmul.f32 %v1108, %v1164
        %v1173 = vpack.c.bf16 %v1166, %v1165
        %v1174 = vpack.c.bf16 %v1168, %v1167
        %v1175 = vpack.c.bf16 %v1170, %v1169
        %v1176 = vpack.c.bf16 %v1172, %v1171
        %1177 = vrot.lane.b32.xlu0 %v992, 124
        %v1178 = vpop.permute.xlu0 %1177
        %1179 = vrot.lane.b32.xlu0 %v993, 124
        %v1180 = vpop.permute.xlu0 %1179
        %1181 = vrot.lane.b32.xlu0 %v994, 124
        %v1182 = vpop.permute.xlu0 %1181
        %1183 = vrot.lane.b32.xlu0 %v995, 124
        %v1184 = vpop.permute.xlu0 %1183
        %v1190 = vsel %vm727, %v1173, 0
        %v1193 = vsel %vm727, %v1174, 0
        %v1196 = vsel %vm727, %v1175, 0
        %v1199 = vsel %vm727, %v1176, 0
        %1201 = vmatpush.bf16.msra.mxu0 0
        %1202 = vmatpush.bf16.msra.mxu0 0
        %1203 = vmatpush.bf16.msra.mxu0 0
        %1204 = vmatpush.bf16.msra.mxu0 0
        %1205 = vmatpush.bf16.msra.mxu0 %v1184
        %1206 = vmatpush.bf16.msra.mxu0 %v1182
        %1207 = vmatpush.bf16.msra.mxu0 %v1180
        %1208 = vmatpush.bf16.msra.mxu0 %v1178
        %1209 = vmatmul.bf16.gmra.mxu0 %v1190
        %v1210 = vpop.f32.mrf.mxu0
        %v1211 = vadd.f32 0.0, %v1210
        %v1212 = vpop.f32.mrf.mxu0
        %v1213 = vadd.f32 0.0, %v1212
        %1214 = vmatmul.bf16.gmra.mxu0 %v1193
        %v1215 = vpop.f32.mrf.mxu0
        %v1216 = vadd.f32 0.0, %v1215
        %v1217 = vpop.f32.mrf.mxu0
        %v1218 = vadd.f32 0.0, %v1217
        %1219 = vmatmul.bf16.gmra.mxu0 %v1196
        %v1220 = vpop.f32.mrf.mxu0
        %v1221 = vadd.f32 0.0, %v1220
        %v1222 = vpop.f32.mrf.mxu0
        %v1223 = vadd.f32 0.0, %v1222
        %1224 = vmatmul.bf16.gmra.mxu0 %v1199
        %v1225 = vpop.f32.mrf.mxu0
        %v1226 = vadd.f32 0.0, %v1225
        %v1227 = vpop.f32.mrf.mxu0
        %v1228 = vadd.f32 0.0, %v1227
        %1229 = vdwg.mxu0
        %v1230 = vmul.f32 %v897, %v1211
        %v1231 = vmul.f32 %v897, %v1213
        %v1232 = vmul.f32 %v897, %v1216
        %v1233 = vmul.f32 %v897, %v1218
        %v1234 = vmul.f32 %v897, %v1221
        %v1235 = vmul.f32 %v897, %v1223
        %v1236 = vmul.f32 %v897, %v1226
        %v1237 = vmul.f32 %v897, %v1228
        %v1238 = vadd.f32 %v1230, %v931
        %v1239 = vadd.f32 %v1231, %v932
        %v1240 = vadd.f32 %v1232, %v933
        %v1241 = vadd.f32 %v1233, %v934
        %v1242 = vadd.f32 %v1234, %v935
        %v1243 = vadd.f32 %v1235, %v936
        %v1244 = vadd.f32 %v1236, %v937
        %v1245 = vadd.f32 %v1237, %v938
        %v1246 = vperm.slane %v554, 1
        %v1247 = vmul.f32 %v1238, %v1246
        %v1248 = vmul.f32 %v1239, %v1246
        %v1249 = vmul.f32 %v1240, %v1246
        %v1250 = vmul.f32 %v1241, %v1246
        %v1251 = vmul.f32 %v1242, %v1246
        %v1252 = vmul.f32 %v1243, %v1246
        %v1253 = vmul.f32 %v1244, %v1246
        %v1254 = vmul.f32 %v1245, %v1246
        %1255 = vst.msk [vmem:[%s564 + $0x10] sm:$0xff] %vm331, %v1247
        %1256 = vst.msk [vmem:[%s564 + $0x30] sm:$0xff] %vm331, %v1248
        %1257 = vst.msk [vmem:[%s564 + $0x50] sm:$0xff] %vm331, %v1249
        %1258 = vst.msk [vmem:[%s564 + $0x70] sm:$0xff] %vm331, %v1250
        %1259 = vst.msk [vmem:[%s564 + $0x90] sm:$0xff] %vm331, %v1251
        %1260 = vst.msk [vmem:[%s564 + $0xb0] sm:$0xff] %vm331, %v1252
        %1261 = vst.msk [vmem:[%s564 + $0xd0] sm:$0xff] %vm331, %v1253
        %1262 = vst.msk [vmem:[%s564 + $0xf0] sm:$0xff] %vm331, %v1254
        %v1263 = vld [vmem:[%s382] sm:$0xff]
        %v1264 = vld [vmem:[%s382 + $0x10] sm:$0xff]
        %v1265 = vld [vmem:[%s382 + $0x20] sm:$0xff]
        %v1266 = vld [vmem:[%s382 + $0x30] sm:$0xff]
        %v1267 = vld [vmem:[%s382 + $0x40] sm:$0xff]
        %v1268 = vld [vmem:[%s382 + $0x50] sm:$0xff]
        %v1269 = vld [vmem:[%s382 + $0x60] sm:$0xff]
        %v1270 = vld [vmem:[%s382 + $0x70] sm:$0xff]
        %v1271 = vpack.c.bf16 %v1264, %v1263
        %v1272 = vpack.c.bf16 %v1266, %v1265
        %v1273 = vpack.c.bf16 %v1268, %v1267
        %v1274 = vpack.c.bf16 %v1270, %v1269
        %v1275 = vld [vmem:[%s3] sm:$0x3]
        %v1276 = vld [vmem:[%s4] sm:$0x1]
        %v1278 = vperm.slane %v1276, 0
        %v1281 = vsel %vm331, %v1271, 0
        %v1284 = vsel %vm331, %v1272, 0
        %v1287 = vsel %vm331, %v1273, 0
        %v1290 = vsel %vm331, %v1274, 0
        %v1293 = vsel %vm443, %v1275, 0
        %1295 = vmatpush.bf16.msra.mxu0 0
        %1296 = vmatpush.bf16.msra.mxu0 0
        %1297 = vmatpush.bf16.msra.mxu0 0
        %1298 = vmatpush.bf16.msra.mxu0 0
        %1299 = vmatpush.bf16.msra.mxu0 0
        %1300 = vmatpush.bf16.msra.mxu0 0
        %1301 = vmatpush.bf16.msra.mxu0 0
        %1302 = vmatpush.bf16.msra.mxu0 %v1293
        %1303 = vmatmul.bf16.gmra.mxu0 %v1281
        %v1304 = vpop.f32.mrf.mxu0
        %v1305 = vadd.f32 %v1278, %v1304
        %v1306 = vpop.f32.mrf.mxu0
        %v1307 = vadd.f32 %v1278, %v1306
        %1308 = vmatmul.bf16.gmra.mxu0 %v1284
        %v1309 = vpop.f32.mrf.mxu0
        %v1310 = vadd.f32 %v1278, %v1309
        %v1311 = vpop.f32.mrf.mxu0
        %v1312 = vadd.f32 %v1278, %v1311
        %1313 = vmatmul.bf16.gmra.mxu0 %v1287
        %v1314 = vpop.f32.mrf.mxu0
        %v1315 = vadd.f32 %v1278, %v1314
        %v1316 = vpop.f32.mrf.mxu0
        %v1317 = vadd.f32 %v1278, %v1316
        %1318 = vmatmul.bf16.gmra.mxu0 %v1290
        %v1319 = vpop.f32.mrf.mxu0
        %v1320 = vadd.f32 %v1278, %v1319
        %v1321 = vpop.f32.mrf.mxu0
        %v1322 = vadd.f32 %v1278, %v1321
        %1323 = vdwg.mxu0
        %v1324 = vpack.c.bf16 %v1307, %v1305
        %v1325 = vpack.c.bf16 %v1312, %v1310
        %v1326 = vpack.c.bf16 %v1317, %v1315
        %v1327 = vpack.c.bf16 %v1322, %v1320
        %1332 = vrot.lane.b32.xlu0 %v1324, 126
        %v1333 = vpop.permute.xlu0 %1332
        %1334 = vrot.lane.b32.xlu0 %v1325, 126
        %v1335 = vpop.permute.xlu0 %1334
        %1336 = vrot.lane.b32.xlu0 %v1326, 126
        %v1337 = vpop.permute.xlu0 %1336
        %1338 = vrot.lane.b32.xlu0 %v1327, 126
        %v1339 = vpop.permute.xlu0 %1338
        %v1341 = vsel %vm476, %v1324, 0
        %v1344 = vsel %vm476, %v1325, 0
        %v1347 = vsel %vm476, %v1326, 0
        %v1350 = vsel %vm476, %v1327, 0
        %v1353 = vsel %vm476, %v1333, 0
        %v1356 = vsel %vm476, %v1335, 0
        %v1359 = vsel %vm476, %v1337, 0
        %v1362 = vsel %vm476, %v1339, 0
        %1364 = vmatpush.bf16.xpose.msra.mxu0 0
        %1365 = vmatpush.bf16.xpose.msra.mxu0 0
        %1366 = vmatpush.bf16.xpose.msra.mxu0 0
        %1367 = vmatpush.bf16.xpose.msra.mxu0 0
        %1368 = vmatpush.bf16.xpose.msra.mxu0 %v1362
        %1369 = vmatpush.bf16.xpose.msra.mxu0 %v1359
        %1370 = vmatpush.bf16.xpose.msra.mxu0 %v1356
        %1371 = vmatpush.bf16.xpose.msra.mxu0 %v1353
        %1372 = vmatmul.bf16.gmra.mxu0 %v1341
        %v1373 = vpop.f32.mrf.mxu0
        %v1374 = vadd.f32 0.0, %v1373
        %v1375 = vpop.f32.mrf.mxu0
        %v1376 = vadd.f32 0.0, %v1375
        %1377 = vmatmul.bf16.gmra.mxu0 %v1344
        %v1378 = vpop.f32.mrf.mxu0
        %v1379 = vadd.f32 0.0, %v1378
        %v1380 = vpop.f32.mrf.mxu0
        %v1381 = vadd.f32 0.0, %v1380
        %1382 = vmatmul.bf16.gmra.mxu0 %v1347
        %v1383 = vpop.f32.mrf.mxu0
        %v1384 = vadd.f32 0.0, %v1383
        %v1385 = vpop.f32.mrf.mxu0
        %v1386 = vadd.f32 0.0, %v1385
        %1387 = vmatmul.bf16.gmra.mxu0 %v1350
        %v1388 = vpop.f32.mrf.mxu0
        %v1389 = vadd.f32 0.0, %v1388
        %v1390 = vpop.f32.mrf.mxu0
        %v1391 = vadd.f32 0.0, %v1390
        %1392 = vdwg.mxu0
        %v1393 = vsel %vm727, %v1374, -inf
        %1394 = vmax.xlane.f32.xlu0 %v1393
        %v1395 = vpop.xlane.xlu0 %1394
        %v1396 = vsel %vm727, %v1376, -inf
        %1397 = vmax.xlane.f32.xlu0 %v1396
        %v1398 = vpop.xlane.xlu0 %1397
        %v1399 = vsel %vm727, %v1379, -inf
        %1400 = vmax.xlane.f32.xlu0 %v1399
        %v1401 = vpop.xlane.xlu0 %1400
        %v1402 = vsel %vm727, %v1381, -inf
        %1403 = vmax.xlane.f32.xlu0 %v1402
        %v1404 = vpop.xlane.xlu0 %1403
        %v1405 = vsel %vm727, %v1384, -inf
        %1406 = vmax.xlane.f32.xlu0 %v1405
        %v1407 = vpop.xlane.xlu0 %1406
        %v1408 = vsel %vm727, %v1386, -inf
        %1409 = vmax.xlane.f32.xlu0 %v1408
        %v1410 = vpop.xlane.xlu0 %1409
        %v1411 = vsel %vm727, %v1389, -inf
        %1412 = vmax.xlane.f32.xlu0 %v1411
        %v1413 = vpop.xlane.xlu0 %1412
        %v1414 = vsel %vm727, %v1391, -inf
        %1415 = vmax.xlane.f32.xlu0 %v1414
        %v1416 = vpop.xlane.xlu0 %1415
        %v1417 = vsub.f32 %v1374, %v1395
        %v1418 = vsub.f32 %v1376, %v1398
        %v1419 = vsub.f32 %v1379, %v1401
        %v1420 = vsub.f32 %v1381, %v1404
        %v1421 = vsub.f32 %v1384, %v1407
        %v1422 = vsub.f32 %v1386, %v1410
        %v1423 = vsub.f32 %v1389, %v1413
        %v1424 = vsub.f32 %v1391, %v1416
        %v1425 = vmul.f32 %v1417, 1.442695
        %v1426 = vpow.pop %v1425
        %v1427 = vmul.f32 %v1418, 1.442695
        %v1428 = vpow.pop %v1427
        %v1429 = vmul.f32 %v1419, 1.442695
        %v1430 = vpow.pop %v1429
        %v1431 = vmul.f32 %v1420, 1.442695
        %v1432 = vpow.pop %v1431
        %v1433 = vmul.f32 %v1421, 1.442695
        %v1434 = vpow.pop %v1433
        %v1435 = vmul.f32 %v1422, 1.442695
        %v1436 = vpow.pop %v1435
        %v1437 = vmul.f32 %v1423, 1.442695
        %v1438 = vpow.pop %v1437
        %v1439 = vmul.f32 %v1424, 1.442695
        %v1440 = vpow.pop %v1439
        %v1441 = vsel %vm727, %v1426, 0.0
        %1442 = vadd.xlane.f32.xlu0 %v1441
        %v1443 = vpop.xlane.xlu0 %1442
        %v1444 = vsel %vm727, %v1428, 0.0
        %1445 = vadd.xlane.f32.xlu0 %v1444
        %v1446 = vpop.xlane.xlu0 %1445
        %v1447 = vsel %vm727, %v1430, 0.0
        %1448 = vadd.xlane.f32.xlu0 %v1447
        %v1449 = vpop.xlane.xlu0 %1448
        %v1450 = vsel %vm727, %v1432, 0.0
        %1451 = vadd.xlane.f32.xlu0 %v1450
        %v1452 = vpop.xlane.xlu0 %1451
        %v1453 = vsel %vm727, %v1434, 0.0
        %1454 = vadd.xlane.f32.xlu0 %v1453
        %v1455 = vpop.xlane.xlu0 %1454
        %v1456 = vsel %vm727, %v1436, 0.0
        %1457 = vadd.xlane.f32.xlu0 %v1456
        %v1458 = vpop.xlane.xlu0 %1457
        %v1459 = vsel %vm727, %v1438, 0.0
        %1460 = vadd.xlane.f32.xlu0 %v1459
        %v1461 = vpop.xlane.xlu0 %1460
        %v1462 = vsel %vm727, %v1440, 0.0
        %1463 = vadd.xlane.f32.xlu0 %v1462
        %v1464 = vpop.xlane.xlu0 %1463
        %v1465 = vrcp.pop %v1443
        %v1466 = vrcp.pop %v1446
        %v1467 = vrcp.pop %v1449
        %v1468 = vrcp.pop %v1452
        %v1469 = vrcp.pop %v1455
        %v1470 = vrcp.pop %v1458
        %v1471 = vrcp.pop %v1461
        %v1472 = vrcp.pop %v1464
        %v1473 = vmul.f32 %v1443, %v1465
        %v1474 = vmul.f32 %v1446, %v1466
        %v1475 = vmul.f32 %v1449, %v1467
        %v1476 = vmul.f32 %v1452, %v1468
        %v1477 = vmul.f32 %v1455, %v1469
        %v1478 = vmul.f32 %v1458, %v1470
        %v1479 = vmul.f32 %v1461, %v1471
        %v1480 = vmul.f32 %v1464, %v1472
        %v1481 = vsub.f32 2.0, %v1473
        %v1482 = vsub.f32 2.0, %v1474
        %v1483 = vsub.f32 2.0, %v1475
        %v1484 = vsub.f32 2.0, %v1476
        %v1485 = vsub.f32 2.0, %v1477
        %v1486 = vsub.f32 2.0, %v1478
        %v1487 = vsub.f32 2.0, %v1479
        %v1488 = vsub.f32 2.0, %v1480
        %v1489 = vmul.f32 %v1465, %v1481
        %v1490 = vmul.f32 %v1466, %v1482
        %v1491 = vmul.f32 %v1467, %v1483
        %v1492 = vmul.f32 %v1468, %v1484
        %v1493 = vmul.f32 %v1469, %v1485
        %v1494 = vmul.f32 %v1470, %v1486
        %v1495 = vmul.f32 %v1471, %v1487
        %v1496 = vmul.f32 %v1472, %v1488
        %v1497 = vmul.f32 %v1426, %v1489
        %v1498 = vmul.f32 %v1428, %v1490
        %v1499 = vmul.f32 %v1430, %v1491
        %v1500 = vmul.f32 %v1432, %v1492
        %v1501 = vmul.f32 %v1434, %v1493
        %v1502 = vmul.f32 %v1436, %v1494
        %v1503 = vmul.f32 %v1438, %v1495
        %v1504 = vmul.f32 %v1440, %v1496
        %v1505 = vpack.c.bf16 %v1498, %v1497
        %v1506 = vpack.c.bf16 %v1500, %v1499
        %v1507 = vpack.c.bf16 %v1502, %v1501
        %v1508 = vpack.c.bf16 %v1504, %v1503
        %1509 = vrot.lane.b32.xlu0 %v1324, 124
        %v1510 = vpop.permute.xlu0 %1509
        %1511 = vrot.lane.b32.xlu0 %v1325, 124
        %v1512 = vpop.permute.xlu0 %1511
        %1513 = vrot.lane.b32.xlu0 %v1326, 124
        %v1514 = vpop.permute.xlu0 %1513
        %1515 = vrot.lane.b32.xlu0 %v1327, 124
        %v1516 = vpop.permute.xlu0 %1515
        %v1522 = vsel %vm727, %v1505, 0
        %v1525 = vsel %vm727, %v1506, 0
        %v1528 = vsel %vm727, %v1507, 0
        %v1531 = vsel %vm727, %v1508, 0
        %1533 = vmatpush.bf16.msra.mxu0 0
        %1534 = vmatpush.bf16.msra.mxu0 0
        %1535 = vmatpush.bf16.msra.mxu0 0
        %1536 = vmatpush.bf16.msra.mxu0 0
        %1537 = vmatpush.bf16.msra.mxu0 %v1516
        %1538 = vmatpush.bf16.msra.mxu0 %v1514
        %1539 = vmatpush.bf16.msra.mxu0 %v1512
        %1540 = vmatpush.bf16.msra.mxu0 %v1510
        %1541 = vmatmul.bf16.gmra.mxu0 %v1522
        %v1542 = vpop.f32.mrf.mxu0
        %v1543 = vadd.f32 0.0, %v1542
        %v1544 = vpop.f32.mrf.mxu0
        %v1545 = vadd.f32 0.0, %v1544
        %1546 = vmatmul.bf16.gmra.mxu0 %v1525
        %v1547 = vpop.f32.mrf.mxu0
        %v1548 = vadd.f32 0.0, %v1547
        %v1549 = vpop.f32.mrf.mxu0
        %v1550 = vadd.f32 0.0, %v1549
        %1551 = vmatmul.bf16.gmra.mxu0 %v1528
        %v1552 = vpop.f32.mrf.mxu0
        %v1553 = vadd.f32 0.0, %v1552
        %v1554 = vpop.f32.mrf.mxu0
        %v1555 = vadd.f32 0.0, %v1554
        %1556 = vmatmul.bf16.gmra.mxu0 %v1531
        %v1557 = vpop.f32.mrf.mxu0
        %v1558 = vadd.f32 0.0, %v1557
        %v1559 = vpop.f32.mrf.mxu0
        %v1560 = vadd.f32 0.0, %v1559
        %1561 = vdwg.mxu0
        %v1562 = vmul.f32 %v897, %v1543
        %v1563 = vmul.f32 %v897, %v1545
        %v1564 = vmul.f32 %v897, %v1548
        %v1565 = vmul.f32 %v897, %v1550
        %v1566 = vmul.f32 %v897, %v1553
        %v1567 = vmul.f32 %v897, %v1555
        %v1568 = vmul.f32 %v897, %v1558
        %v1569 = vmul.f32 %v897, %v1560
        %v1570 = vadd.f32 %v1562, %v1263
        %v1571 = vadd.f32 %v1563, %v1264
        %v1572 = vadd.f32 %v1564, %v1265
        %v1573 = vadd.f32 %v1565, %v1266
        %v1574 = vadd.f32 %v1566, %v1267
        %v1575 = vadd.f32 %v1567, %v1268
        %v1576 = vadd.f32 %v1568, %v1269
        %v1577 = vadd.f32 %v1569, %v1270
        %v1578 = vperm.slane %v554, 2
        %v1579 = vmul.f32 %v1570, %v1578
        %v1580 = vmul.f32 %v1571, %v1578
        %v1581 = vmul.f32 %v1572, %v1578
        %v1582 = vmul.f32 %v1573, %v1578
        %v1583 = vmul.f32 %v1574, %v1578
        %v1584 = vmul.f32 %v1575, %v1578
        %v1585 = vmul.f32 %v1576, %v1578
        %v1586 = vmul.f32 %v1577, %v1578
        %s1587 = scalar_lea.vmem [#allocation2], 288
        %1588 = vst.msk [vmem:[%s1587 + $0x8] sm:$0xff] %vm331, %v1579
        %1589 = vst.msk [vmem:[%s1587 + $0x28] sm:$0xff] %vm331, %v1580
        %1590 = vst.msk [vmem:[%s1587 + $0x48] sm:$0xff] %vm331, %v1581
        %1591 = vst.msk [vmem:[%s1587 + $0x68] sm:$0xff] %vm331, %v1582
        %1592 = vst.msk [vmem:[%s1587 + $0x88] sm:$0xff] %vm331, %v1583
        %1593 = vst.msk [vmem:[%s1587 + $0xa8] sm:$0xff] %vm331, %v1584
        %1594 = vst.msk [vmem:[%s1587 + $0xc8] sm:$0xff] %vm331, %v1585
        %1595 = vst.msk [vmem:[%s1587 + $0xe8] sm:$0xff] %vm331, %v1586
        %v1596 = vld [vmem:[%s382 + $0x8] sm:$0xff]
        %v1597 = vld [vmem:[%s382 + $0x18] sm:$0xff]
        %v1598 = vld [vmem:[%s382 + $0x28] sm:$0xff]
        %v1599 = vld [vmem:[%s382 + $0x38] sm:$0xff]
        %v1600 = vld [vmem:[%s382 + $0x48] sm:$0xff]
        %v1601 = vld [vmem:[%s382 + $0x58] sm:$0xff]
        %v1602 = vld [vmem:[%s382 + $0x68] sm:$0xff]
        %v1603 = vld [vmem:[%s382 + $0x78] sm:$0xff]
        %v1604 = vpack.c.bf16 %v1597, %v1596
        %v1605 = vpack.c.bf16 %v1599, %v1598
        %v1606 = vpack.c.bf16 %v1601, %v1600
        %v1607 = vpack.c.bf16 %v1603, %v1602
        %v1608 = vld [vmem:[%s3] sm:$0x3]
        %v1609 = vld [vmem:[%s4] sm:$0x1]
        %v1611 = vperm.slane %v1609, 0
        %v1614 = vsel %vm331, %v1604, 0
        %v1617 = vsel %vm331, %v1605, 0
        %v1620 = vsel %vm331, %v1606, 0
        %v1623 = vsel %vm331, %v1607, 0
        %v1626 = vsel %vm443, %v1608, 0
        %1628 = vmatpush.bf16.msra.mxu0 0
        %1629 = vmatpush.bf16.msra.mxu0 0
        %1630 = vmatpush.bf16.msra.mxu0 0
        %1631 = vmatpush.bf16.msra.mxu0 0
        %1632 = vmatpush.bf16.msra.mxu0 0
        %1633 = vmatpush.bf16.msra.mxu0 0
        %1634 = vmatpush.bf16.msra.mxu0 0
        %1635 = vmatpush.bf16.msra.mxu0 %v1626
        %1636 = vmatmul.bf16.gmra.mxu0 %v1614
        %v1637 = vpop.f32.mrf.mxu0
        %v1638 = vadd.f32 %v1611, %v1637
        %v1639 = vpop.f32.mrf.mxu0
        %v1640 = vadd.f32 %v1611, %v1639
        %1641 = vmatmul.bf16.gmra.mxu0 %v1617
        %v1642 = vpop.f32.mrf.mxu0
        %v1643 = vadd.f32 %v1611, %v1642
        %v1644 = vpop.f32.mrf.mxu0
        %v1645 = vadd.f32 %v1611, %v1644
        %1646 = vmatmul.bf16.gmra.mxu0 %v1620
        %v1647 = vpop.f32.mrf.mxu0
        %v1648 = vadd.f32 %v1611, %v1647
        %v1649 = vpop.f32.mrf.mxu0
        %v1650 = vadd.f32 %v1611, %v1649
        %1651 = vmatmul.bf16.gmra.mxu0 %v1623
        %v1652 = vpop.f32.mrf.mxu0
        %v1653 = vadd.f32 %v1611, %v1652
        %v1654 = vpop.f32.mrf.mxu0
        %v1655 = vadd.f32 %v1611, %v1654
        %1656 = vdwg.mxu0
        %v1657 = vpack.c.bf16 %v1640, %v1638
        %v1658 = vpack.c.bf16 %v1645, %v1643
        %v1659 = vpack.c.bf16 %v1650, %v1648
        %v1660 = vpack.c.bf16 %v1655, %v1653
        %1665 = vrot.lane.b32.xlu0 %v1657, 126
        %v1666 = vpop.permute.xlu0 %1665
        %1667 = vrot.lane.b32.xlu0 %v1658, 126
        %v1668 = vpop.permute.xlu0 %1667
        %1669 = vrot.lane.b32.xlu0 %v1659, 126
        %v1670 = vpop.permute.xlu0 %1669
        %1671 = vrot.lane.b32.xlu0 %v1660, 126
        %v1672 = vpop.permute.xlu0 %1671
        %v1674 = vsel %vm476, %v1657, 0
        %v1677 = vsel %vm476, %v1658, 0
        %v1680 = vsel %vm476, %v1659, 0
        %v1683 = vsel %vm476, %v1660, 0
        %v1686 = vsel %vm476, %v1666, 0
        %v1689 = vsel %vm476, %v1668, 0
        %v1692 = vsel %vm476, %v1670, 0
        %v1695 = vsel %vm476, %v1672, 0
        %1697 = vmatpush.bf16.xpose.msra.mxu0 0
        %1698 = vmatpush.bf16.xpose.msra.mxu0 0
        %1699 = vmatpush.bf16.xpose.msra.mxu0 0
        %1700 = vmatpush.bf16.xpose.msra.mxu0 0
        %1701 = vmatpush.bf16.xpose.msra.mxu0 %v1695
        %1702 = vmatpush.bf16.xpose.msra.mxu0 %v1692
        %1703 = vmatpush.bf16.xpose.msra.mxu0 %v1689
        %1704 = vmatpush.bf16.xpose.msra.mxu0 %v1686
        %1705 = vmatmul.bf16.gmra.mxu0 %v1674
        %v1706 = vpop.f32.mrf.mxu0
        %v1707 = vadd.f32 0.0, %v1706
        %v1708 = vpop.f32.mrf.mxu0
        %v1709 = vadd.f32 0.0, %v1708
        %1710 = vmatmul.bf16.gmra.mxu0 %v1677
        %v1711 = vpop.f32.mrf.mxu0
        %v1712 = vadd.f32 0.0, %v1711
        %v1713 = vpop.f32.mrf.mxu0
        %v1714 = vadd.f32 0.0, %v1713
        %1715 = vmatmul.bf16.gmra.mxu0 %v1680
        %v1716 = vpop.f32.mrf.mxu0
        %v1717 = vadd.f32 0.0, %v1716
        %v1718 = vpop.f32.mrf.mxu0
        %v1719 = vadd.f32 0.0, %v1718
        %1720 = vmatmul.bf16.gmra.mxu0 %v1683
        %v1721 = vpop.f32.mrf.mxu0
        %v1722 = vadd.f32 0.0, %v1721
        %v1723 = vpop.f32.mrf.mxu0
        %v1724 = vadd.f32 0.0, %v1723
        %1725 = vdwg.mxu0
        %v1726 = vsel %vm727, %v1707, -inf
        %1727 = vmax.xlane.f32.xlu0 %v1726
        %v1728 = vpop.xlane.xlu0 %1727
        %v1729 = vsel %vm727, %v1709, -inf
        %1730 = vmax.xlane.f32.xlu0 %v1729
        %v1731 = vpop.xlane.xlu0 %1730
        %v1732 = vsel %vm727, %v1712, -inf
        %1733 = vmax.xlane.f32.xlu0 %v1732
        %v1734 = vpop.xlane.xlu0 %1733
        %v1735 = vsel %vm727, %v1714, -inf
        %1736 = vmax.xlane.f32.xlu0 %v1735
        %v1737 = vpop.xlane.xlu0 %1736
        %v1738 = vsel %vm727, %v1717, -inf
        %1739 = vmax.xlane.f32.xlu0 %v1738
        %v1740 = vpop.xlane.xlu0 %1739
        %v1741 = vsel %vm727, %v1719, -inf
        %1742 = vmax.xlane.f32.xlu0 %v1741
        %v1743 = vpop.xlane.xlu0 %1742
        %v1744 = vsel %vm727, %v1722, -inf
        %1745 = vmax.xlane.f32.xlu0 %v1744
        %v1746 = vpop.xlane.xlu0 %1745
        %v1747 = vsel %vm727, %v1724, -inf
        %1748 = vmax.xlane.f32.xlu0 %v1747
        %v1749 = vpop.xlane.xlu0 %1748
        %v1750 = vsub.f32 %v1707, %v1728
        %v1751 = vsub.f32 %v1709, %v1731
        %v1752 = vsub.f32 %v1712, %v1734
        %v1753 = vsub.f32 %v1714, %v1737
        %v1754 = vsub.f32 %v1717, %v1740
        %v1755 = vsub.f32 %v1719, %v1743
        %v1756 = vsub.f32 %v1722, %v1746
        %v1757 = vsub.f32 %v1724, %v1749
        %v1758 = vmul.f32 %v1750, 1.442695
        %v1759 = vpow.pop %v1758
        %v1760 = vmul.f32 %v1751, 1.442695
        %v1761 = vpow.pop %v1760
        %v1762 = vmul.f32 %v1752, 1.442695
        %v1763 = vpow.pop %v1762
        %v1764 = vmul.f32 %v1753, 1.442695
        %v1765 = vpow.pop %v1764
        %v1766 = vmul.f32 %v1754, 1.442695
        %v1767 = vpow.pop %v1766
        %v1768 = vmul.f32 %v1755, 1.442695
        %v1769 = vpow.pop %v1768
        %v1770 = vmul.f32 %v1756, 1.442695
        %v1771 = vpow.pop %v1770
        %v1772 = vmul.f32 %v1757, 1.442695
        %v1773 = vpow.pop %v1772
        %v1774 = vsel %vm727, %v1759, 0.0
        %1775 = vadd.xlane.f32.xlu0 %v1774
        %v1776 = vpop.xlane.xlu0 %1775
        %v1777 = vsel %vm727, %v1761, 0.0
        %1778 = vadd.xlane.f32.xlu0 %v1777
        %v1779 = vpop.xlane.xlu0 %1778
        %v1780 = vsel %vm727, %v1763, 0.0
        %1781 = vadd.xlane.f32.xlu0 %v1780
        %v1782 = vpop.xlane.xlu0 %1781
        %v1783 = vsel %vm727, %v1765, 0.0
        %1784 = vadd.xlane.f32.xlu0 %v1783
        %v1785 = vpop.xlane.xlu0 %1784
        %v1786 = vsel %vm727, %v1767, 0.0
        %1787 = vadd.xlane.f32.xlu0 %v1786
        %v1788 = vpop.xlane.xlu0 %1787
        %v1789 = vsel %vm727, %v1769, 0.0
        %1790 = vadd.xlane.f32.xlu0 %v1789
        %v1791 = vpop.xlane.xlu0 %1790
        %v1792 = vsel %vm727, %v1771, 0.0
        %1793 = vadd.xlane.f32.xlu0 %v1792
        %v1794 = vpop.xlane.xlu0 %1793
        %v1795 = vsel %vm727, %v1773, 0.0
        %1796 = vadd.xlane.f32.xlu0 %v1795
        %v1797 = vpop.xlane.xlu0 %1796
        %v1798 = vrcp.pop %v1776
        %v1799 = vrcp.pop %v1779
        %v1800 = vrcp.pop %v1782
        %v1801 = vrcp.pop %v1785
        %v1802 = vrcp.pop %v1788
        %v1803 = vrcp.pop %v1791
        %v1804 = vrcp.pop %v1794
        %v1805 = vrcp.pop %v1797
        %v1806 = vmul.f32 %v1776, %v1798
        %v1807 = vmul.f32 %v1779, %v1799
        %v1808 = vmul.f32 %v1782, %v1800
        %v1809 = vmul.f32 %v1785, %v1801
        %v1810 = vmul.f32 %v1788, %v1802
        %v1811 = vmul.f32 %v1791, %v1803
        %v1812 = vmul.f32 %v1794, %v1804
        %v1813 = vmul.f32 %v1797, %v1805
        %v1814 = vsub.f32 2.0, %v1806
        %v1815 = vsub.f32 2.0, %v1807
        %v1816 = vsub.f32 2.0, %v1808
        %v1817 = vsub.f32 2.0, %v1809
        %v1818 = vsub.f32 2.0, %v1810
        %v1819 = vsub.f32 2.0, %v1811
        %v1820 = vsub.f32 2.0, %v1812
        %v1821 = vsub.f32 2.0, %v1813
        %v1822 = vmul.f32 %v1798, %v1814
        %v1823 = vmul.f32 %v1799, %v1815
        %v1824 = vmul.f32 %v1800, %v1816
        %v1825 = vmul.f32 %v1801, %v1817
        %v1826 = vmul.f32 %v1802, %v1818
        %v1827 = vmul.f32 %v1803, %v1819
        %v1828 = vmul.f32 %v1804, %v1820
        %v1829 = vmul.f32 %v1805, %v1821
        %v1830 = vmul.f32 %v1759, %v1822
        %v1831 = vmul.f32 %v1761, %v1823
        %v1832 = vmul.f32 %v1763, %v1824
        %v1833 = vmul.f32 %v1765, %v1825
        %v1834 = vmul.f32 %v1767, %v1826
        %v1835 = vmul.f32 %v1769, %v1827
        %v1836 = vmul.f32 %v1771, %v1828
        %v1837 = vmul.f32 %v1773, %v1829
        %v1838 = vpack.c.bf16 %v1831, %v1830
        %v1839 = vpack.c.bf16 %v1833, %v1832
        %v1840 = vpack.c.bf16 %v1835, %v1834
        %v1841 = vpack.c.bf16 %v1837, %v1836
        %1842 = vrot.lane.b32.xlu0 %v1657, 124
        %v1843 = vpop.permute.xlu0 %1842
        %1844 = vrot.lane.b32.xlu0 %v1658, 124
        %v1845 = vpop.permute.xlu0 %1844
        %1846 = vrot.lane.b32.xlu0 %v1659, 124
        %v1847 = vpop.permute.xlu0 %1846
        %1848 = vrot.lane.b32.xlu0 %v1660, 124
        %v1849 = vpop.permute.xlu0 %1848
        %v1855 = vsel %vm727, %v1838, 0
        %v1858 = vsel %vm727, %v1839, 0
        %v1861 = vsel %vm727, %v1840, 0
        %v1864 = vsel %vm727, %v1841, 0
        %1866 = vmatpush.bf16.msra.mxu0 0
        %1867 = vmatpush.bf16.msra.mxu0 0
        %1868 = vmatpush.bf16.msra.mxu0 0
        %1869 = vmatpush.bf16.msra.mxu0 0
        %1870 = vmatpush.bf16.msra.mxu0 %v1849
        %1871 = vmatpush.bf16.msra.mxu0 %v1847
        %1872 = vmatpush.bf16.msra.mxu0 %v1845
        %1873 = vmatpush.bf16.msra.mxu0 %v1843
        %1874 = vmatmul.bf16.gmra.mxu0 %v1855
        %v1875 = vpop.f32.mrf.mxu0
        %v1876 = vadd.f32 0.0, %v1875
        %v1877 = vpop.f32.mrf.mxu0
        %v1878 = vadd.f32 0.0, %v1877
        %1879 = vmatmul.bf16.gmra.mxu0 %v1858
        %v1880 = vpop.f32.mrf.mxu0
        %v1881 = vadd.f32 0.0, %v1880
        %v1882 = vpop.f32.mrf.mxu0
        %v1883 = vadd.f32 0.0, %v1882
        %1884 = vmatmul.bf16.gmra.mxu0 %v1861
        %v1885 = vpop.f32.mrf.mxu0
        %v1886 = vadd.f32 0.0, %v1885
        %v1887 = vpop.f32.mrf.mxu0
        %v1888 = vadd.f32 0.0, %v1887
        %1889 = vmatmul.bf16.gmra.mxu0 %v1864
        %v1890 = vpop.f32.mrf.mxu0
        %v1891 = vadd.f32 0.0, %v1890
        %v1892 = vpop.f32.mrf.mxu0
        %v1893 = vadd.f32 0.0, %v1892
        %1894 = vdwg.mxu0
        %v1895 = vmul.f32 %v897, %v1876
        %v1896 = vmul.f32 %v897, %v1878
        %v1897 = vmul.f32 %v897, %v1881
        %v1898 = vmul.f32 %v897, %v1883
        %v1899 = vmul.f32 %v897, %v1886
        %v1900 = vmul.f32 %v897, %v1888
        %v1901 = vmul.f32 %v897, %v1891
        %v1902 = vmul.f32 %v897, %v1893
        %v1903 = vadd.f32 %v1895, %v1596
        %v1904 = vadd.f32 %v1896, %v1597
        %v1905 = vadd.f32 %v1897, %v1598
        %v1906 = vadd.f32 %v1898, %v1599
        %v1907 = vadd.f32 %v1899, %v1600
        %v1908 = vadd.f32 %v1900, %v1601
        %v1909 = vadd.f32 %v1901, %v1602
        %v1910 = vadd.f32 %v1902, %v1603
        %v1911 = vperm.slane %v554, 3
        %v1912 = vmul.f32 %v1903, %v1911
        %v1913 = vmul.f32 %v1904, %v1911
        %v1914 = vmul.f32 %v1905, %v1911
        %v1915 = vmul.f32 %v1906, %v1911
        %v1916 = vmul.f32 %v1907, %v1911
        %v1917 = vmul.f32 %v1908, %v1911
        %v1918 = vmul.f32 %v1909, %v1911
        %v1919 = vmul.f32 %v1910, %v1911
        %1920 = vst.msk [vmem:[%s1587 + $0x10] sm:$0xff] %vm331, %v1912
        %1921 = vst.msk [vmem:[%s1587 + $0x30] sm:$0xff] %vm331, %v1913
        %1922 = vst.msk [vmem:[%s1587 + $0x50] sm:$0xff] %vm331, %v1914
        %1923 = vst.msk [vmem:[%s1587 + $0x70] sm:$0xff] %vm331, %v1915
        %1924 = vst.msk [vmem:[%s1587 + $0x90] sm:$0xff] %vm331, %v1916
        %1925 = vst.msk [vmem:[%s1587 + $0xb0] sm:$0xff] %vm331, %v1917
        %1926 = vst.msk [vmem:[%s1587 + $0xd0] sm:$0xff] %vm331, %v1918
        %1927 = vst.msk [vmem:[%s1587 + $0xf0] sm:$0xff] %vm331, %v1919
        %v1928 = vld [vmem:[#allocation2] sm:$0xff]
        %v1929 = vld [vmem:[#allocation2 + $0x8] sm:$0xff]
        %v1930 = vld [vmem:[#allocation2 + $0x10] sm:$0xff]
        %v1931 = vld [vmem:[#allocation2 + $0x18] sm:$0xff]
        %v1932 = vld [vmem:[#allocation2 + $0x20] sm:$0xff]
        %v1933 = vld [vmem:[#allocation2 + $0x28] sm:$0xff]
        %v1934 = vld [vmem:[#allocation2 + $0x30] sm:$0xff]
        %v1935 = vld [vmem:[#allocation2 + $0x38] sm:$0xff]
        %v1936 = vld [vmem:[#allocation2 + $0x40] sm:$0xff]
        %v1937 = vld [vmem:[#allocation2 + $0x48] sm:$0xff]
        %v1938 = vld [vmem:[#allocation2 + $0x50] sm:$0xff]
        %v1939 = vld [vmem:[#allocation2 + $0x58] sm:$0xff]
        %v1940 = vld [vmem:[#allocation2 + $0x60] sm:$0xff]
        %v1941 = vld [vmem:[#allocation2 + $0x68] sm:$0xff]
        %v1942 = vld [vmem:[#allocation2 + $0x70] sm:$0xff]
        %v1943 = vld [vmem:[#allocation2 + $0x78] sm:$0xff]
        %v1944 = vld [vmem:[#allocation2 + $0x80] sm:$0xff]
        %v1945 = vld [vmem:[#allocation2 + $0x88] sm:$0xff]
        %v1946 = vld [vmem:[#allocation2 + $0x90] sm:$0xff]
        %v1947 = vld [vmem:[#allocation2 + $0x98] sm:$0xff]
        %v1948 = vld [vmem:[#allocation2 + $0xa0] sm:$0xff]
        %v1949 = vld [vmem:[#allocation2 + $0xa8] sm:$0xff]
        %v1950 = vld [vmem:[#allocation2 + $0xb0] sm:$0xff]
        %v1951 = vld [vmem:[#allocation2 + $0xb8] sm:$0xff]
        %v1952 = vld [vmem:[#allocation2 + $0xc0] sm:$0xff]
        %v1953 = vld [vmem:[#allocation2 + $0xc8] sm:$0xff]
        %v1954 = vld [vmem:[#allocation2 + $0xd0] sm:$0xff]
        %v1955 = vld [vmem:[#allocation2 + $0xd8] sm:$0xff]
        %v1956 = vld [vmem:[#allocation2 + $0xe0] sm:$0xff]
        %v1957 = vld [vmem:[#allocation2 + $0xe8] sm:$0xff]
        %v1958 = vld [vmem:[#allocation2 + $0xf0] sm:$0xff]
        %v1959 = vld [vmem:[#allocation2 + $0xf8] sm:$0xff]
        %v1960 = vld [vmem:[#allocation2 + $0x100] sm:$0xff]
        %v1961 = vld [vmem:[#allocation2 + $0x108] sm:$0xff]
        %v1962 = vld [vmem:[#allocation2 + $0x110] sm:$0xff]
        %v1963 = vld [vmem:[#allocation2 + $0x118] sm:$0xff]
        %v1964 = vld [vmem:[#allocation2 + $0x120] sm:$0xff]
        %v1965 = vld [vmem:[#allocation2 + $0x128] sm:$0xff]
        %v1966 = vld [vmem:[#allocation2 + $0x130] sm:$0xff]
        %v1967 = vld [vmem:[#allocation2 + $0x138] sm:$0xff]
        %v1968 = vld [vmem:[#allocation2 + $0x140] sm:$0xff]
        %v1969 = vld [vmem:[#allocation2 + $0x148] sm:$0xff]
        %v1970 = vld [vmem:[#allocation2 + $0x150] sm:$0xff]
        %v1971 = vld [vmem:[#allocation2 + $0x158] sm:$0xff]
        %v1972 = vld [vmem:[#allocation2 + $0x160] sm:$0xff]
        %v1973 = vld [vmem:[#allocation2 + $0x168] sm:$0xff]
        %v1974 = vld [vmem:[#allocation2 + $0x170] sm:$0xff]
        %v1975 = vld [vmem:[#allocation2 + $0x178] sm:$0xff]
        %v1976 = vld [vmem:[#allocation2 + $0x180] sm:$0xff]
        %v1977 = vld [vmem:[#allocation2 + $0x188] sm:$0xff]
        %v1978 = vld [vmem:[#allocation2 + $0x190] sm:$0xff]
        %v1979 = vld [vmem:[#allocation2 + $0x198] sm:$0xff]
        %v1980 = vld [vmem:[#allocation2 + $0x1a0] sm:$0xff]
        %v1981 = vld [vmem:[#allocation2 + $0x1a8] sm:$0xff]
        %v1982 = vld [vmem:[#allocation2 + $0x1b0] sm:$0xff]
        %v1983 = vld [vmem:[#allocation2 + $0x1b8] sm:$0xff]
        %v1984 = vld [vmem:[#allocation2 + $0x1c0] sm:$0xff]
        %v1985 = vld [vmem:[#allocation2 + $0x1c8] sm:$0xff]
        %v1986 = vld [vmem:[#allocation2 + $0x1d0] sm:$0xff]
        %v1987 = vld [vmem:[#allocation2 + $0x1d8] sm:$0xff]
        %v1988 = vld [vmem:[#allocation2 + $0x1e0] sm:$0xff]
        %v1989 = vld [vmem:[#allocation2 + $0x1e8] sm:$0xff]
        %v1990 = vld [vmem:[#allocation2 + $0x1f0] sm:$0xff]
        %v1991 = vld [vmem:[#allocation2 + $0x1f8] sm:$0xff]
        %v1992 = vld [vmem:[#allocation2 + $0x200] sm:$0xff]
        %v1993 = vld [vmem:[#allocation2 + $0x208] sm:$0xff]
        %v1994 = vld [vmem:[#allocation2 + $0x210] sm:$0xff]
        %v1995 = vld [vmem:[#allocation2 + $0x218] sm:$0xff]
        %v1996 = vld [vmem:[#allocation2 + $0x220] sm:$0xff]
        %v1997 = vld [vmem:[#allocation2 + $0x228] sm:$0xff]
        %v1998 = vld [vmem:[#allocation2 + $0x230] sm:$0xff]
        %v1999 = vld [vmem:[#allocation2 + $0x238] sm:$0xff]
        %v2000 = vrot.slane %v1928, 7
        %v2001 = vrot.slane %v1932, 7
        %v2002 = vrot.slane %v1936, 7
        %v2003 = vrot.slane %v1940, 7
        %v2004 = vrot.slane %v1944, 7
        %v2005 = vrot.slane %v1948, 7
        %v2006 = vrot.slane %v1952, 7
        %v2007 = vrot.slane %v1956, 7
        %v2008 = vrot.slane %v1960, 7
        %v2009 = vrot.slane %v1964, 7
        %v2010 = vrot.slane %v1968, 7
        %v2011 = vrot.slane %v1972, 7
        %v2012 = vrot.slane %v1976, 7
        %v2013 = vrot.slane %v1980, 7
        %v2014 = vrot.slane %v1984, 7
        %v2015 = vrot.slane %v1988, 7
        %v2016 = vrot.slane %v1992, 7
        %v2017 = vrot.slane %v1996, 7
        %v2018 = vrot.slane %v1929, 7
        %v2019 = vrot.slane %v1933, 7
        %v2020 = vrot.slane %v1937, 7
        %v2021 = vrot.slane %v1941, 7
        %v2022 = vrot.slane %v1945, 7
        %v2023 = vrot.slane %v1949, 7
        %v2024 = vrot.slane %v1953, 7
        %v2025 = vrot.slane %v1957, 7
        %v2026 = vrot.slane %v1961, 7
        %v2027 = vrot.slane %v1965, 7
        %v2028 = vrot.slane %v1969, 7
        %v2029 = vrot.slane %v1973, 7
        %v2030 = vrot.slane %v1977, 7
        %v2031 = vrot.slane %v1981, 7
        %v2032 = vrot.slane %v1985, 7
        %v2033 = vrot.slane %v1989, 7
        %v2034 = vrot.slane %v1993, 7
        %v2035 = vrot.slane %v1997, 7
        %v2036 = vrot.slane %v1930, 7
        %v2037 = vrot.slane %v1934, 7
        %v2038 = vrot.slane %v1938, 7
        %v2039 = vrot.slane %v1942, 7
        %v2040 = vrot.slane %v1946, 7
        %v2041 = vrot.slane %v1950, 7
        %v2042 = vrot.slane %v1954, 7
        %v2043 = vrot.slane %v1958, 7
        %v2044 = vrot.slane %v1962, 7
        %v2045 = vrot.slane %v1966, 7
        %v2046 = vrot.slane %v1970, 7
        %v2047 = vrot.slane %v1974, 7
        %v2048 = vrot.slane %v1978, 7
        %v2049 = vrot.slane %v1982, 7
        %v2050 = vrot.slane %v1986, 7
        %v2051 = vrot.slane %v1990, 7
        %v2052 = vrot.slane %v1994, 7
        %v2053 = vrot.slane %v1998, 7
        %v2054 = vlaneseq
        %v2055 = vshrl.u32 %v2054, 7
        %vm2056 = vcmp.lt.s32.totalorder %v2055, 1
        %v2057 = vsel %vm2056, %v2018, %v2036
        %v2058 = vsel %vm2056, %v2019, %v2037
        %v2059 = vsel %vm2056, %v2020, %v2038
        %v2060 = vsel %vm2056, %v2021, %v2039
        %v2061 = vsel %vm2056, %v2022, %v2040
        %v2062 = vsel %vm2056, %v2023, %v2041
        %v2063 = vsel %vm2056, %v2024, %v2042
        %v2064 = vsel %vm2056, %v2025, %v2043
        %v2065 = vsel %vm2056, %v2026, %v2044
        %v2066 = vsel %vm2056, %v2027, %v2045
        %v2067 = vsel %vm2056, %v2028, %v2046
        %v2068 = vsel %vm2056, %v2029, %v2047
        %v2069 = vsel %vm2056, %v2030, %v2048
        %v2070 = vsel %vm2056, %v2031, %v2049
        %v2071 = vsel %vm2056, %v2032, %v2050
        %v2072 = vsel %vm2056, %v2033, %v2051
        %v2073 = vsel %vm2056, %v2034, %v2052
        %v2074 = vsel %vm2056, %v2035, %v2053
        %v2075 = vsel %vm2056, %v2000, %v2018
        %v2076 = vsel %vm2056, %v2001, %v2019
        %v2077 = vsel %vm2056, %v2002, %v2020
        %v2078 = vsel %vm2056, %v2003, %v2021
        %v2079 = vsel %vm2056, %v2004, %v2022
        %v2080 = vsel %vm2056, %v2005, %v2023
        %v2081 = vsel %vm2056, %v2006, %v2024
        %v2082 = vsel %vm2056, %v2007, %v2025
        %v2083 = vsel %vm2056, %v2008, %v2026
        %v2084 = vsel %vm2056, %v2009, %v2027
        %v2085 = vsel %vm2056, %v2010, %v2028
        %v2086 = vsel %vm2056, %v2011, %v2029
        %v2087 = vsel %vm2056, %v2012, %v2030
        %v2088 = vsel %vm2056, %v2013, %v2031
        %v2089 = vsel %vm2056, %v2014, %v2032
        %v2090 = vsel %vm2056, %v2015, %v2033
        %v2091 = vsel %vm2056, %v2016, %v2034
        %v2092 = vsel %vm2056, %v2017, %v2035
        %v2093 = vpack.c.bf16 %v2057, %v2075
        %v2094 = vpack.c.bf16 %v2058, %v2076
        %v2095 = vpack.c.bf16 %v2059, %v2077
        %v2096 = vpack.c.bf16 %v2060, %v2078
        %v2097 = vpack.c.bf16 %v2061, %v2079
        %v2098 = vpack.c.bf16 %v2062, %v2080
        %v2099 = vpack.c.bf16 %v2063, %v2081
        %v2100 = vpack.c.bf16 %v2064, %v2082
        %v2101 = vpack.c.bf16 %v2065, %v2083
        %v2102 = vpack.c.bf16 %v2066, %v2084
        %v2103 = vpack.c.bf16 %v2067, %v2085
        %v2104 = vpack.c.bf16 %v2068, %v2086
        %v2105 = vpack.c.bf16 %v2069, %v2087
        %v2106 = vpack.c.bf16 %v2070, %v2088
        %v2107 = vpack.c.bf16 %v2071, %v2089
        %v2108 = vpack.c.bf16 %v2072, %v2090
        %v2109 = vld [vmem:[%s5] sm:$0x3]
        %v2110 = vpack.c.bf16 %v2073, %v2091
        %s2111 = scalar_lea.vmem %s5, 6
        %v2112 = vld [vmem:[%s2111] sm:$0x3]
        %v2114 = vsel %vm331, %v2094, 0
        %v2117 = vsel %vm331, %v2095, 0
        %v2120 = vsel %vm331, %v2096, 0
        %v2123 = vsel %vm331, %v2097, 0
        %v2126 = vsel %vm331, %v2098, 0
        %v2129 = vsel %vm331, %v2099, 0
        %v2132 = vsel %vm331, %v2100, 0
        %v2135 = vsel %vm331, %v2101, 0
        %v2138 = vsel %vm331, %v2102, 0
        %v2141 = vsel %vm331, %v2103, 0
        %v2144 = vsel %vm331, %v2104, 0
        %v2147 = vsel %vm331, %v2105, 0
        %v2150 = vsel %vm331, %v2106, 0
        %v2153 = vsel %vm331, %v2107, 0
        %v2156 = vsel %vm331, %v2108, 0
        %v2159 = vsel %vm331, %v2110, 0
        %v2162 = vsel %vm443, %v2112, 0
        %2164 = vmatpush.bf16.msra.mxu0 0
        %2165 = vmatpush.bf16.msra.mxu0 0
        %2166 = vmatpush.bf16.msra.mxu0 0
        %2167 = vmatpush.bf16.msra.mxu0 0
        %2168 = vmatpush.bf16.msra.mxu0 0
        %2169 = vmatpush.bf16.msra.mxu0 0
        %2170 = vmatpush.bf16.msra.mxu0 0
        %2171 = vmatpush.bf16.msra.mxu0 %v2162
        %2172 = vmatmul.bf16.gmra.mxu0 %v2114
        %v2173 = vpop.f32.mrf.mxu0
        %v2174 = vadd.f32 0.0, %v2173
        %v2175 = vpop.f32.mrf.mxu0
        %v2176 = vadd.f32 0.0, %v2175
        %2177 = vmatmul.bf16.gmra.mxu0 %v2117
        %v2178 = vpop.f32.mrf.mxu0
        %v2179 = vadd.f32 0.0, %v2178
        %v2180 = vpop.f32.mrf.mxu0
        %v2181 = vadd.f32 0.0, %v2180
        %2182 = vmatmul.bf16.gmra.mxu0 %v2120
        %v2183 = vpop.f32.mrf.mxu0
        %v2184 = vadd.f32 0.0, %v2183
        %v2185 = vpop.f32.mrf.mxu0
        %v2186 = vadd.f32 0.0, %v2185
        %2187 = vmatmul.bf16.gmra.mxu0 %v2123
        %v2188 = vpop.f32.mrf.mxu0
        %v2189 = vadd.f32 0.0, %v2188
        %v2190 = vpop.f32.mrf.mxu0
        %v2191 = vadd.f32 0.0, %v2190
        %2192 = vmatmul.bf16.gmra.mxu0 %v2126
        %v2193 = vpop.f32.mrf.mxu0
        %v2194 = vadd.f32 0.0, %v2193
        %v2195 = vpop.f32.mrf.mxu0
        %v2196 = vadd.f32 0.0, %v2195
        %2197 = vmatmul.bf16.gmra.mxu0 %v2129
        %v2198 = vpop.f32.mrf.mxu0
        %v2199 = vadd.f32 0.0, %v2198
        %v2200 = vpop.f32.mrf.mxu0
        %v2201 = vadd.f32 0.0, %v2200
        %2202 = vmatmul.bf16.gmra.mxu0 %v2132
        %v2203 = vpop.f32.mrf.mxu0
        %v2204 = vadd.f32 0.0, %v2203
        %v2205 = vpop.f32.mrf.mxu0
        %v2206 = vadd.f32 0.0, %v2205
        %2207 = vmatmul.bf16.gmra.mxu0 %v2135
        %v2208 = vpop.f32.mrf.mxu0
        %v2209 = vadd.f32 0.0, %v2208
        %v2210 = vpop.f32.mrf.mxu0
        %v2211 = vadd.f32 0.0, %v2210
        %2212 = vmatmul.bf16.gmra.mxu0 %v2138
        %v2213 = vpop.f32.mrf.mxu0
        %v2214 = vadd.f32 0.0, %v2213
        %v2215 = vpop.f32.mrf.mxu0
        %v2216 = vadd.f32 0.0, %v2215
        %2217 = vmatmul.bf16.gmra.mxu0 %v2141
        %v2218 = vpop.f32.mrf.mxu0
        %v2219 = vadd.f32 0.0, %v2218
        %v2220 = vpop.f32.mrf.mxu0
        %v2221 = vadd.f32 0.0, %v2220
        %2222 = vmatmul.bf16.gmra.mxu0 %v2144
        %v2223 = vpop.f32.mrf.mxu0
        %v2224 = vadd.f32 0.0, %v2223
        %v2225 = vpop.f32.mrf.mxu0
        %v2226 = vadd.f32 0.0, %v2225
        %2227 = vmatmul.bf16.gmra.mxu0 %v2147
        %v2228 = vpop.f32.mrf.mxu0
        %v2229 = vadd.f32 0.0, %v2228
        %v2230 = vpop.f32.mrf.mxu0
        %v2231 = vadd.f32 0.0, %v2230
        %2232 = vmatmul.bf16.gmra.mxu0 %v2150
        %v2233 = vpop.f32.mrf.mxu0
        %v2234 = vadd.f32 0.0, %v2233
        %v2235 = vpop.f32.mrf.mxu0
        %v2236 = vadd.f32 0.0, %v2235
        %2237 = vmatmul.bf16.gmra.mxu0 %v2153
        %v2238 = vpop.f32.mrf.mxu0
        %v2239 = vadd.f32 0.0, %v2238
        %v2240 = vpop.f32.mrf.mxu0
        %v2241 = vadd.f32 0.0, %v2240
        %2242 = vmatmul.bf16.gmra.mxu0 %v2156
        %v2243 = vpop.f32.mrf.mxu0
        %v2244 = vadd.f32 0.0, %v2243
        %v2245 = vpop.f32.mrf.mxu0
        %v2246 = vadd.f32 0.0, %v2245
        %2247 = vmatmul.bf16.gmra.mxu0 %v2159
        %v2248 = vpop.f32.mrf.mxu0
        %v2249 = vadd.f32 0.0, %v2248
        %v2250 = vpop.f32.mrf.mxu0
        %v2251 = vadd.f32 0.0, %v2250
        %2252 = vdwg.mxu0
        %v2254 = vsel %vm331, %v2093, 0
        %v2257 = vsel %vm443, %v2109, 0
        %2259 = vmatpush.bf16.msra.mxu0 0
        %2260 = vmatpush.bf16.msra.mxu0 0
        %2261 = vmatpush.bf16.msra.mxu0 0
        %2262 = vmatpush.bf16.msra.mxu0 0
        %2263 = vmatpush.bf16.msra.mxu0 0
        %2264 = vmatpush.bf16.msra.mxu0 0
        %2265 = vmatpush.bf16.msra.mxu0 0
        %2266 = vmatpush.bf16.msra.mxu0 %v2257
        %2267 = vmatmul.bf16.gmra.mxu0 %v2254
        %v2268 = vpop.f32.mrf.mxu0
        %v2269 = vadd.f32 %v2174, %v2268
        %v2270 = vpop.f32.mrf.mxu0
        %v2271 = vadd.f32 %v2176, %v2270
        %2272 = vmatmul.bf16.gmra.mxu0 %v2114
        %v2273 = vpop.f32.mrf.mxu0
        %v2274 = vadd.f32 %v2179, %v2273
        %v2275 = vpop.f32.mrf.mxu0
        %v2276 = vadd.f32 %v2181, %v2275
        %2277 = vmatmul.bf16.gmra.mxu0 %v2117
        %v2278 = vpop.f32.mrf.mxu0
        %v2279 = vadd.f32 %v2184, %v2278
        %v2280 = vpop.f32.mrf.mxu0
        %v2281 = vadd.f32 %v2186, %v2280
        %2282 = vmatmul.bf16.gmra.mxu0 %v2120
        %v2283 = vpop.f32.mrf.mxu0
        %v2284 = vadd.f32 %v2189, %v2283
        %v2285 = vpop.f32.mrf.mxu0
        %v2286 = vadd.f32 %v2191, %v2285
        %2287 = vmatmul.bf16.gmra.mxu0 %v2123
        %v2288 = vpop.f32.mrf.mxu0
        %v2289 = vadd.f32 %v2194, %v2288
        %v2290 = vpop.f32.mrf.mxu0
        %v2291 = vadd.f32 %v2196, %v2290
        %2292 = vmatmul.bf16.gmra.mxu0 %v2126
        %v2293 = vpop.f32.mrf.mxu0
        %v2294 = vadd.f32 %v2199, %v2293
        %v2295 = vpop.f32.mrf.mxu0
        %v2296 = vadd.f32 %v2201, %v2295
        %2297 = vmatmul.bf16.gmra.mxu0 %v2129
        %v2298 = vpop.f32.mrf.mxu0
        %v2299 = vadd.f32 %v2204, %v2298
        %v2300 = vpop.f32.mrf.mxu0
        %v2301 = vadd.f32 %v2206, %v2300
        %2302 = vmatmul.bf16.gmra.mxu0 %v2132
        %v2303 = vpop.f32.mrf.mxu0
        %v2304 = vadd.f32 %v2209, %v2303
        %v2305 = vpop.f32.mrf.mxu0
        %v2306 = vadd.f32 %v2211, %v2305
        %2307 = vmatmul.bf16.gmra.mxu0 %v2135
        %v2308 = vpop.f32.mrf.mxu0
        %v2309 = vadd.f32 %v2214, %v2308
        %v2310 = vpop.f32.mrf.mxu0
        %v2311 = vadd.f32 %v2216, %v2310
        %2312 = vmatmul.bf16.gmra.mxu0 %v2138
        %v2313 = vpop.f32.mrf.mxu0
        %v2314 = vadd.f32 %v2219, %v2313
        %v2315 = vpop.f32.mrf.mxu0
        %v2316 = vadd.f32 %v2221, %v2315
        %2317 = vmatmul.bf16.gmra.mxu0 %v2141
        %v2318 = vpop.f32.mrf.mxu0
        %v2319 = vadd.f32 %v2224, %v2318
        %v2320 = vpop.f32.mrf.mxu0
        %v2321 = vadd.f32 %v2226, %v2320
        %2322 = vmatmul.bf16.gmra.mxu0 %v2144
        %v2323 = vpop.f32.mrf.mxu0
        %v2324 = vadd.f32 %v2229, %v2323
        %v2325 = vpop.f32.mrf.mxu0
        %v2326 = vadd.f32 %v2231, %v2325
        %2327 = vmatmul.bf16.gmra.mxu0 %v2147
        %v2328 = vpop.f32.mrf.mxu0
        %v2329 = vadd.f32 %v2234, %v2328
        %v2330 = vpop.f32.mrf.mxu0
        %v2331 = vadd.f32 %v2236, %v2330
        %2332 = vmatmul.bf16.gmra.mxu0 %v2150
        %v2333 = vpop.f32.mrf.mxu0
        %v2334 = vadd.f32 %v2239, %v2333
        %v2335 = vpop.f32.mrf.mxu0
        %v2336 = vadd.f32 %v2241, %v2335
        %2337 = vmatmul.bf16.gmra.mxu0 %v2153
        %v2338 = vpop.f32.mrf.mxu0
        %v2339 = vadd.f32 %v2244, %v2338
        %v2340 = vpop.f32.mrf.mxu0
        %v2341 = vadd.f32 %v2246, %v2340
        %2342 = vmatmul.bf16.gmra.mxu0 %v2156
        %v2343 = vpop.f32.mrf.mxu0
        %v2344 = vadd.f32 %v2249, %v2343
        %v2345 = vpop.f32.mrf.mxu0
        %v2346 = vadd.f32 %v2251, %v2345
        %2347 = vdwg.mxu0
        %v2348 = vpack.c.bf16 %v2074, %v2092
        %s2349 = scalar_lea.vmem %s5, 12
        %v2350 = vld [vmem:[%s2349] sm:$0x3]
        %v2352 = vsel %vm331, %v2348, 0
        %v2355 = vsel %vm443, %v2350, 0
        %2357 = vmatpush.bf16.msra.mxu0 0
        %2358 = vmatpush.bf16.msra.mxu0 0
        %2359 = vmatpush.bf16.msra.mxu0 0
        %2360 = vmatpush.bf16.msra.mxu0 0
        %2361 = vmatpush.bf16.msra.mxu0 0
        %2362 = vmatpush.bf16.msra.mxu0 0
        %2363 = vmatpush.bf16.msra.mxu0 0
        %2364 = vmatpush.bf16.msra.mxu0 %v2355
        %2365 = vmatmul.bf16.gmra.mxu0 %v2117
        %v2366 = vpop.f32.mrf.mxu0
        %v2367 = vadd.f32 0.0, %v2366
        %v2368 = vpop.f32.mrf.mxu0
        %v2369 = vadd.f32 0.0, %v2368
        %2370 = vmatmul.bf16.gmra.mxu0 %v2120
        %v2371 = vpop.f32.mrf.mxu0
        %v2372 = vadd.f32 0.0, %v2371
        %v2373 = vpop.f32.mrf.mxu0
        %v2374 = vadd.f32 0.0, %v2373
        %2375 = vmatmul.bf16.gmra.mxu0 %v2123
        %v2376 = vpop.f32.mrf.mxu0
        %v2377 = vadd.f32 0.0, %v2376
        %v2378 = vpop.f32.mrf.mxu0
        %v2379 = vadd.f32 0.0, %v2378
        %2380 = vmatmul.bf16.gmra.mxu0 %v2126
        %v2381 = vpop.f32.mrf.mxu0
        %v2382 = vadd.f32 0.0, %v2381
        %v2383 = vpop.f32.mrf.mxu0
        %v2384 = vadd.f32 0.0, %v2383
        %2385 = vmatmul.bf16.gmra.mxu0 %v2129
        %v2386 = vpop.f32.mrf.mxu0
        %v2387 = vadd.f32 0.0, %v2386
        %v2388 = vpop.f32.mrf.mxu0
        %v2389 = vadd.f32 0.0, %v2388
        %2390 = vmatmul.bf16.gmra.mxu0 %v2132
        %v2391 = vpop.f32.mrf.mxu0
        %v2392 = vadd.f32 0.0, %v2391
        %v2393 = vpop.f32.mrf.mxu0
        %v2394 = vadd.f32 0.0, %v2393
        %2395 = vmatmul.bf16.gmra.mxu0 %v2135
        %v2396 = vpop.f32.mrf.mxu0
        %v2397 = vadd.f32 0.0, %v2396
        %v2398 = vpop.f32.mrf.mxu0
        %v2399 = vadd.f32 0.0, %v2398
        %2400 = vmatmul.bf16.gmra.mxu0 %v2138
        %v2401 = vpop.f32.mrf.mxu0
        %v2402 = vadd.f32 0.0, %v2401
        %v2403 = vpop.f32.mrf.mxu0
        %v2404 = vadd.f32 0.0, %v2403
        %2405 = vmatmul.bf16.gmra.mxu0 %v2141
        %v2406 = vpop.f32.mrf.mxu0
        %v2407 = vadd.f32 0.0, %v2406
        %v2408 = vpop.f32.mrf.mxu0
        %v2409 = vadd.f32 0.0, %v2408
        %2410 = vmatmul.bf16.gmra.mxu0 %v2144
        %v2411 = vpop.f32.mrf.mxu0
        %v2412 = vadd.f32 0.0, %v2411
        %v2413 = vpop.f32.mrf.mxu0
        %v2414 = vadd.f32 0.0, %v2413
        %2415 = vmatmul.bf16.gmra.mxu0 %v2147
        %v2416 = vpop.f32.mrf.mxu0
        %v2417 = vadd.f32 0.0, %v2416
        %v2418 = vpop.f32.mrf.mxu0
        %v2419 = vadd.f32 0.0, %v2418
        %2420 = vmatmul.bf16.gmra.mxu0 %v2150
        %v2421 = vpop.f32.mrf.mxu0
        %v2422 = vadd.f32 0.0, %v2421
        %v2423 = vpop.f32.mrf.mxu0
        %v2424 = vadd.f32 0.0, %v2423
        %2425 = vmatmul.bf16.gmra.mxu0 %v2153
        %v2426 = vpop.f32.mrf.mxu0
        %v2427 = vadd.f32 0.0, %v2426
        %v2428 = vpop.f32.mrf.mxu0
        %v2429 = vadd.f32 0.0, %v2428
        %2430 = vmatmul.bf16.gmra.mxu0 %v2156
        %v2431 = vpop.f32.mrf.mxu0
        %v2432 = vadd.f32 0.0, %v2431
        %v2433 = vpop.f32.mrf.mxu0
        %v2434 = vadd.f32 0.0, %v2433
        %2435 = vmatmul.bf16.gmra.mxu0 %v2159
        %v2436 = vpop.f32.mrf.mxu0
        %v2437 = vadd.f32 0.0, %v2436
        %v2438 = vpop.f32.mrf.mxu0
        %v2439 = vadd.f32 0.0, %v2438
        %2440 = vmatmul.bf16.gmra.mxu0 %v2352
        %v2441 = vpop.f32.mrf.mxu0
        %v2442 = vadd.f32 0.0, %v2441
        %v2443 = vpop.f32.mrf.mxu0
        %v2444 = vadd.f32 0.0, %v2443
        %2445 = vdwg.mxu0
        %v2446 = vadd.f32 %v2269, %v2367
        %v2447 = vadd.f32 %v2271, %v2369
        %v2448 = vadd.f32 %v2274, %v2372
        %v2449 = vadd.f32 %v2276, %v2374
        %v2450 = vadd.f32 %v2279, %v2377
        %v2451 = vadd.f32 %v2281, %v2379
        %v2452 = vadd.f32 %v2284, %v2382
        %v2453 = vadd.f32 %v2286, %v2384
        %v2454 = vadd.f32 %v2289, %v2387
        %v2455 = vadd.f32 %v2291, %v2389
        %v2456 = vadd.f32 %v2294, %v2392
        %v2457 = vadd.f32 %v2296, %v2394
        %v2458 = vadd.f32 %v2299, %v2397
        %v2459 = vadd.f32 %v2301, %v2399
        %v2460 = vadd.f32 %v2304, %v2402
        %v2461 = vadd.f32 %v2306, %v2404
        %v2462 = vadd.f32 %v2309, %v2407
        %v2463 = vadd.f32 %v2311, %v2409
        %v2464 = vadd.f32 %v2314, %v2412
        %v2465 = vadd.f32 %v2316, %v2414
        %v2466 = vadd.f32 %v2319, %v2417
        %v2467 = vadd.f32 %v2321, %v2419
        %v2468 = vadd.f32 %v2324, %v2422
        %v2469 = vadd.f32 %v2326, %v2424
        %v2470 = vadd.f32 %v2329, %v2427
        %v2471 = vadd.f32 %v2331, %v2429
        %v2472 = vadd.f32 %v2334, %v2432
        %v2473 = vadd.f32 %v2336, %v2434
        %v2474 = vadd.f32 %v2339, %v2437
        %v2475 = vadd.f32 %v2341, %v2439
        %v2476 = vadd.f32 %v2344, %v2442
        %v2477 = vadd.f32 %v2346, %v2444
        %v2478 = vld [vmem:[#allocation2 + $0x8] sm:$0xff]
        %v2479 = vld [vmem:[#allocation2 + $0x10] sm:$0xff]
        %v2480 = vld [vmem:[#allocation2 + $0x28] sm:$0xff]
        %v2481 = vld [vmem:[#allocation2 + $0x30] sm:$0xff]
        %v2482 = vld [vmem:[#allocation2 + $0x48] sm:$0xff]
        %v2483 = vld [vmem:[#allocation2 + $0x50] sm:$0xff]
        %v2484 = vld [vmem:[#allocation2 + $0x68] sm:$0xff]
        %v2485 = vld [vmem:[#allocation2 + $0x70] sm:$0xff]
        %v2486 = vld [vmem:[#allocation2 + $0x88] sm:$0xff]
        %v2487 = vld [vmem:[#allocation2 + $0x90] sm:$0xff]
        %v2488 = vld [vmem:[#allocation2 + $0xa8] sm:$0xff]
        %v2489 = vld [vmem:[#allocation2 + $0xb0] sm:$0xff]
        %v2490 = vld [vmem:[#allocation2 + $0xc8] sm:$0xff]
        %v2491 = vld [vmem:[#allocation2 + $0xd0] sm:$0xff]
        %v2492 = vld [vmem:[#allocation2 + $0xe8] sm:$0xff]
        %v2493 = vld [vmem:[#allocation2 + $0xf0] sm:$0xff]
        %v2494 = vld [vmem:[#allocation2 + $0x108] sm:$0xff]
        %v2495 = vld [vmem:[#allocation2 + $0x110] sm:$0xff]
        %v2496 = vld [vmem:[#allocation2 + $0x128] sm:$0xff]
        %v2497 = vld [vmem:[#allocation2 + $0x130] sm:$0xff]
        %v2498 = vld [vmem:[#allocation2 + $0x148] sm:$0xff]
        %v2499 = vld [vmem:[#allocation2 + $0x150] sm:$0xff]
        %v2500 = vld [vmem:[#allocation2 + $0x168] sm:$0xff]
        %v2501 = vld [vmem:[#allocation2 + $0x170] sm:$0xff]
        %v2502 = vld [vmem:[#allocation2 + $0x188] sm:$0xff]
        %v2503 = vld [vmem:[#allocation2 + $0x190] sm:$0xff]
        %v2504 = vld [vmem:[#allocation2 + $0x1a8] sm:$0xff]
        %v2505 = vld [vmem:[#allocation2 + $0x1b0] sm:$0xff]
        %v2506 = vld [vmem:[#allocation2 + $0x1c8] sm:$0xff]
        %v2507 = vld [vmem:[#allocation2 + $0x1d0] sm:$0xff]
        %v2508 = vld [vmem:[#allocation2 + $0x1e8] sm:$0xff]
        %v2509 = vld [vmem:[#allocation2 + $0x1f0] sm:$0xff]
        %v2510 = vpack.c.bf16 %v2479, %v2478
        %v2511 = vpack.c.bf16 %v2481, %v2480
        %v2512 = vpack.c.bf16 %v2483, %v2482
        %v2513 = vpack.c.bf16 %v2485, %v2484
        %v2514 = vpack.c.bf16 %v2487, %v2486
        %v2515 = vpack.c.bf16 %v2489, %v2488
        %v2516 = vpack.c.bf16 %v2491, %v2490
        %v2517 = vpack.c.bf16 %v2493, %v2492
        %v2518 = vpack.c.bf16 %v2495, %v2494
        %v2519 = vpack.c.bf16 %v2497, %v2496
        %v2520 = vpack.c.bf16 %v2499, %v2498
        %v2521 = vpack.c.bf16 %v2501, %v2500
        %v2522 = vpack.c.bf16 %v2503, %v2502
        %v2523 = vpack.c.bf16 %v2505, %v2504
        %v2524 = vpack.c.bf16 %v2507, %v2506
        %v2525 = vpack.c.bf16 %v2509, %v2508
        %s2526 = scalar_lea.vmem %s5, 2
        %v2527 = vld [vmem:[%s2526] sm:$0x3]
        %v2529 = vsel %vm331, %v2510, 0
        %v2532 = vsel %vm331, %v2511, 0
        %v2535 = vsel %vm331, %v2512, 0
        %v2538 = vsel %vm331, %v2513, 0
        %v2541 = vsel %vm331, %v2514, 0
        %v2544 = vsel %vm331, %v2515, 0
        %v2547 = vsel %vm331, %v2516, 0
        %v2550 = vsel %vm331, %v2517, 0
        %v2553 = vsel %vm331, %v2518, 0
        %v2556 = vsel %vm331, %v2519, 0
        %v2559 = vsel %vm331, %v2520, 0
        %v2562 = vsel %vm331, %v2521, 0
        %v2565 = vsel %vm331, %v2522, 0
        %v2568 = vsel %vm331, %v2523, 0
        %v2571 = vsel %vm331, %v2524, 0
        %v2574 = vsel %vm331, %v2525, 0
        %v2577 = vsel %vm443, %v2527, 0
        %2579 = vmatpush.bf16.msra.mxu0 0
        %2580 = vmatpush.bf16.msra.mxu0 0
        %2581 = vmatpush.bf16.msra.mxu0 0
        %2582 = vmatpush.bf16.msra.mxu0 0
        %2583 = vmatpush.bf16.msra.mxu0 0
        %2584 = vmatpush.bf16.msra.mxu0 0
        %2585 = vmatpush.bf16.msra.mxu0 0
        %2586 = vmatpush.bf16.msra.mxu0 %v2577
        %2587 = vmatmul.bf16.gmra.mxu0 %v2529
        %v2588 = vpop.f32.mrf.mxu0
        %v2589 = vadd.f32 0.0, %v2588
        %v2590 = vpop.f32.mrf.mxu0
        %v2591 = vadd.f32 0.0, %v2590
        %2592 = vmatmul.bf16.gmra.mxu0 %v2532
        %v2593 = vpop.f32.mrf.mxu0
        %v2594 = vadd.f32 0.0, %v2593
        %v2595 = vpop.f32.mrf.mxu0
        %v2596 = vadd.f32 0.0, %v2595
        %2597 = vmatmul.bf16.gmra.mxu0 %v2535
        %v2598 = vpop.f32.mrf.mxu0
        %v2599 = vadd.f32 0.0, %v2598
        %v2600 = vpop.f32.mrf.mxu0
        %v2601 = vadd.f32 0.0, %v2600
        %2602 = vmatmul.bf16.gmra.mxu0 %v2538
        %v2603 = vpop.f32.mrf.mxu0
        %v2604 = vadd.f32 0.0, %v2603
        %v2605 = vpop.f32.mrf.mxu0
        %v2606 = vadd.f32 0.0, %v2605
        %2607 = vmatmul.bf16.gmra.mxu0 %v2541
        %v2608 = vpop.f32.mrf.mxu0
        %v2609 = vadd.f32 0.0, %v2608
        %v2610 = vpop.f32.mrf.mxu0
        %v2611 = vadd.f32 0.0, %v2610
        %2612 = vmatmul.bf16.gmra.mxu0 %v2544
        %v2613 = vpop.f32.mrf.mxu0
        %v2614 = vadd.f32 0.0, %v2613
        %v2615 = vpop.f32.mrf.mxu0
        %v2616 = vadd.f32 0.0, %v2615
        %2617 = vmatmul.bf16.gmra.mxu0 %v2547
        %v2618 = vpop.f32.mrf.mxu0
        %v2619 = vadd.f32 0.0, %v2618
        %v2620 = vpop.f32.mrf.mxu0
        %v2621 = vadd.f32 0.0, %v2620
        %2622 = vmatmul.bf16.gmra.mxu0 %v2550
        %v2623 = vpop.f32.mrf.mxu0
        %v2624 = vadd.f32 0.0, %v2623
        %v2625 = vpop.f32.mrf.mxu0
        %v2626 = vadd.f32 0.0, %v2625
        %2627 = vmatmul.bf16.gmra.mxu0 %v2553
        %v2628 = vpop.f32.mrf.mxu0
        %v2629 = vadd.f32 0.0, %v2628
        %v2630 = vpop.f32.mrf.mxu0
        %v2631 = vadd.f32 0.0, %v2630
        %2632 = vmatmul.bf16.gmra.mxu0 %v2556
        %v2633 = vpop.f32.mrf.mxu0
        %v2634 = vadd.f32 0.0, %v2633
        %v2635 = vpop.f32.mrf.mxu0
        %v2636 = vadd.f32 0.0, %v2635
        %2637 = vmatmul.bf16.gmra.mxu0 %v2559
        %v2638 = vpop.f32.mrf.mxu0
        %v2639 = vadd.f32 0.0, %v2638
        %v2640 = vpop.f32.mrf.mxu0
        %v2641 = vadd.f32 0.0, %v2640
        %2642 = vmatmul.bf16.gmra.mxu0 %v2562
        %v2643 = vpop.f32.mrf.mxu0
        %v2644 = vadd.f32 0.0, %v2643
        %v2645 = vpop.f32.mrf.mxu0
        %v2646 = vadd.f32 0.0, %v2645
        %2647 = vmatmul.bf16.gmra.mxu0 %v2565
        %v2648 = vpop.f32.mrf.mxu0
        %v2649 = vadd.f32 0.0, %v2648
        %v2650 = vpop.f32.mrf.mxu0
        %v2651 = vadd.f32 0.0, %v2650
        %2652 = vmatmul.bf16.gmra.mxu0 %v2568
        %v2653 = vpop.f32.mrf.mxu0
        %v2654 = vadd.f32 0.0, %v2653
        %v2655 = vpop.f32.mrf.mxu0
        %v2656 = vadd.f32 0.0, %v2655
        %2657 = vmatmul.bf16.gmra.mxu0 %v2571
        %v2658 = vpop.f32.mrf.mxu0
        %v2659 = vadd.f32 0.0, %v2658
        %v2660 = vpop.f32.mrf.mxu0
        %v2661 = vadd.f32 0.0, %v2660
        %2662 = vmatmul.bf16.gmra.mxu0 %v2574
        %v2663 = vpop.f32.mrf.mxu0
        %v2664 = vadd.f32 0.0, %v2663
        %v2665 = vpop.f32.mrf.mxu0
        %v2666 = vadd.f32 0.0, %v2665
        %2667 = vdwg.mxu0
        %v2668 = vadd.f32 %v2446, %v2589
        %v2669 = vadd.f32 %v2447, %v2591
        %v2670 = vadd.f32 %v2448, %v2594
        %v2671 = vadd.f32 %v2449, %v2596
        %v2672 = vadd.f32 %v2450, %v2599
        %v2673 = vadd.f32 %v2451, %v2601
        %v2674 = vadd.f32 %v2452, %v2604
        %v2675 = vadd.f32 %v2453, %v2606
        %v2676 = vadd.f32 %v2454, %v2609
        %v2677 = vadd.f32 %v2455, %v2611
        %v2678 = vadd.f32 %v2456, %v2614
        %v2679 = vadd.f32 %v2457, %v2616
        %v2680 = vadd.f32 %v2458, %v2619
        %v2681 = vadd.f32 %v2459, %v2621
        %v2682 = vadd.f32 %v2460, %v2624
        %v2683 = vadd.f32 %v2461, %v2626
        %v2684 = vadd.f32 %v2462, %v2629
        %v2685 = vadd.f32 %v2463, %v2631
        %v2686 = vadd.f32 %v2464, %v2634
        %v2687 = vadd.f32 %v2465, %v2636
        %v2688 = vadd.f32 %v2466, %v2639
        %v2689 = vadd.f32 %v2467, %v2641
        %v2690 = vadd.f32 %v2468, %v2644
        %v2691 = vadd.f32 %v2469, %v2646
        %v2692 = vadd.f32 %v2470, %v2649
        %v2693 = vadd.f32 %v2471, %v2651
        %v2694 = vadd.f32 %v2472, %v2654
        %v2695 = vadd.f32 %v2473, %v2656
        %v2696 = vadd.f32 %v2474, %v2659
        %v2697 = vadd.f32 %v2475, %v2661
        %v2698 = vadd.f32 %v2476, %v2664
        %v2699 = vadd.f32 %v2477, %v2666
        %v2700 = vld [vmem:[%s564 + $0x8] sm:$0xff]
        %v2701 = vld [vmem:[%s564 + $0x10] sm:$0xff]
        %v2702 = vld [vmem:[%s564 + $0x28] sm:$0xff]
        %v2703 = vld [vmem:[%s564 + $0x30] sm:$0xff]
        %v2704 = vld [vmem:[%s564 + $0x48] sm:$0xff]
        %v2705 = vld [vmem:[%s564 + $0x50] sm:$0xff]
        %v2706 = vld [vmem:[%s564 + $0x68] sm:$0xff]
        %v2707 = vld [vmem:[%s564 + $0x70] sm:$0xff]
        %v2708 = vld [vmem:[%s564 + $0x88] sm:$0xff]
        %v2709 = vld [vmem:[%s564 + $0x90] sm:$0xff]
        %v2710 = vld [vmem:[%s564 + $0xa8] sm:$0xff]
        %v2711 = vld [vmem:[%s564 + $0xb0] sm:$0xff]
        %v2712 = vld [vmem:[%s564 + $0xc8] sm:$0xff]
        %v2713 = vld [vmem:[%s564 + $0xd0] sm:$0xff]
        %v2714 = vld [vmem:[%s564 + $0xe8] sm:$0xff]
        %v2715 = vld [vmem:[%s564 + $0xf0] sm:$0xff]
        %v2716 = vld [vmem:[%s564 + $0x108] sm:$0xff]
        %v2717 = vld [vmem:[%s564 + $0x110] sm:$0xff]
        %v2718 = vld [vmem:[%s564 + $0x128] sm:$0xff]
        %v2719 = vld [vmem:[%s564 + $0x130] sm:$0xff]
        %v2720 = vld [vmem:[%s564 + $0x148] sm:$0xff]
        %v2721 = vld [vmem:[%s564 + $0x150] sm:$0xff]
        %v2722 = vld [vmem:[%s564 + $0x168] sm:$0xff]
        %v2723 = vld [vmem:[%s564 + $0x170] sm:$0xff]
        %v2724 = vld [vmem:[%s564 + $0x188] sm:$0xff]
        %v2725 = vld [vmem:[%s564 + $0x190] sm:$0xff]
        %v2726 = vld [vmem:[%s564 + $0x1a8] sm:$0xff]
        %v2727 = vld [vmem:[%s564 + $0x1b0] sm:$0xff]
        %v2728 = vld [vmem:[%s564 + $0x1c8] sm:$0xff]
        %v2729 = vld [vmem:[%s564 + $0x1d0] sm:$0xff]
        %v2730 = vld [vmem:[%s564 + $0x1e8] sm:$0xff]
        %v2731 = vld [vmem:[%s564 + $0x1f0] sm:$0xff]
        %v2732 = vpack.c.bf16 %v2701, %v2700
        %v2733 = vpack.c.bf16 %v2703, %v2702
        %v2734 = vpack.c.bf16 %v2705, %v2704
        %v2735 = vpack.c.bf16 %v2707, %v2706
        %v2736 = vpack.c.bf16 %v2709, %v2708
        %v2737 = vpack.c.bf16 %v2711, %v2710
        %v2738 = vpack.c.bf16 %v2713, %v2712
        %v2739 = vpack.c.bf16 %v2715, %v2714
        %v2740 = vpack.c.bf16 %v2717, %v2716
        %v2741 = vpack.c.bf16 %v2719, %v2718
        %v2742 = vpack.c.bf16 %v2721, %v2720
        %v2743 = vpack.c.bf16 %v2723, %v2722
        %v2744 = vpack.c.bf16 %v2725, %v2724
        %v2745 = vpack.c.bf16 %v2727, %v2726
        %v2746 = vpack.c.bf16 %v2729, %v2728
        %v2747 = vpack.c.bf16 %v2731, %v2730
        %s2748 = scalar_lea.vmem %s5, 8
        %v2749 = vld [vmem:[%s2748] sm:$0x3]
        %v2751 = vsel %vm331, %v2732, 0
        %v2754 = vsel %vm331, %v2733, 0
        %v2757 = vsel %vm331, %v2734, 0
        %v2760 = vsel %vm331, %v2735, 0
        %v2763 = vsel %vm331, %v2736, 0
        %v2766 = vsel %vm331, %v2737, 0
        %v2769 = vsel %vm331, %v2738, 0
        %v2772 = vsel %vm331, %v2739, 0
        %v2775 = vsel %vm331, %v2740, 0
        %v2778 = vsel %vm331, %v2741, 0
        %v2781 = vsel %vm331, %v2742, 0
        %v2784 = vsel %vm331, %v2743, 0
        %v2787 = vsel %vm331, %v2744, 0
        %v2790 = vsel %vm331, %v2745, 0
        %v2793 = vsel %vm331, %v2746, 0
        %v2796 = vsel %vm331, %v2747, 0
        %v2799 = vsel %vm443, %v2749, 0
        %2801 = vmatpush.bf16.msra.mxu0 0
        %2802 = vmatpush.bf16.msra.mxu0 0
        %2803 = vmatpush.bf16.msra.mxu0 0
        %2804 = vmatpush.bf16.msra.mxu0 0
        %2805 = vmatpush.bf16.msra.mxu0 0
        %2806 = vmatpush.bf16.msra.mxu0 0
        %2807 = vmatpush.bf16.msra.mxu0 0
        %2808 = vmatpush.bf16.msra.mxu0 %v2799
        %2809 = vmatmul.bf16.gmra.mxu0 %v2751
        %v2810 = vpop.f32.mrf.mxu0
        %v2811 = vadd.f32 0.0, %v2810
        %v2812 = vpop.f32.mrf.mxu0
        %v2813 = vadd.f32 0.0, %v2812
        %2814 = vmatmul.bf16.gmra.mxu0 %v2754
        %v2815 = vpop.f32.mrf.mxu0
        %v2816 = vadd.f32 0.0, %v2815
        %v2817 = vpop.f32.mrf.mxu0
        %v2818 = vadd.f32 0.0, %v2817
        %2819 = vmatmul.bf16.gmra.mxu0 %v2757
        %v2820 = vpop.f32.mrf.mxu0
        %v2821 = vadd.f32 0.0, %v2820
        %v2822 = vpop.f32.mrf.mxu0
        %v2823 = vadd.f32 0.0, %v2822
        %2824 = vmatmul.bf16.gmra.mxu0 %v2760
        %v2825 = vpop.f32.mrf.mxu0
        %v2826 = vadd.f32 0.0, %v2825
        %v2827 = vpop.f32.mrf.mxu0
        %v2828 = vadd.f32 0.0, %v2827
        %2829 = vmatmul.bf16.gmra.mxu0 %v2763
        %v2830 = vpop.f32.mrf.mxu0
        %v2831 = vadd.f32 0.0, %v2830
        %v2832 = vpop.f32.mrf.mxu0
        %v2833 = vadd.f32 0.0, %v2832
        %2834 = vmatmul.bf16.gmra.mxu0 %v2766
        %v2835 = vpop.f32.mrf.mxu0
        %v2836 = vadd.f32 0.0, %v2835
        %v2837 = vpop.f32.mrf.mxu0
        %v2838 = vadd.f32 0.0, %v2837
        %2839 = vmatmul.bf16.gmra.mxu0 %v2769
        %v2840 = vpop.f32.mrf.mxu0
        %v2841 = vadd.f32 0.0, %v2840
        %v2842 = vpop.f32.mrf.mxu0
        %v2843 = vadd.f32 0.0, %v2842
        %2844 = vmatmul.bf16.gmra.mxu0 %v2772
        %v2845 = vpop.f32.mrf.mxu0
        %v2846 = vadd.f32 0.0, %v2845
        %v2847 = vpop.f32.mrf.mxu0
        %v2848 = vadd.f32 0.0, %v2847
        %2849 = vmatmul.bf16.gmra.mxu0 %v2775
        %v2850 = vpop.f32.mrf.mxu0
        %v2851 = vadd.f32 0.0, %v2850
        %v2852 = vpop.f32.mrf.mxu0
        %v2853 = vadd.f32 0.0, %v2852
        %2854 = vmatmul.bf16.gmra.mxu0 %v2778
        %v2855 = vpop.f32.mrf.mxu0
        %v2856 = vadd.f32 0.0, %v2855
        %v2857 = vpop.f32.mrf.mxu0
        %v2858 = vadd.f32 0.0, %v2857
        %2859 = vmatmul.bf16.gmra.mxu0 %v2781
        %v2860 = vpop.f32.mrf.mxu0
        %v2861 = vadd.f32 0.0, %v2860
        %v2862 = vpop.f32.mrf.mxu0
        %v2863 = vadd.f32 0.0, %v2862
        %2864 = vmatmul.bf16.gmra.mxu0 %v2784
        %v2865 = vpop.f32.mrf.mxu0
        %v2866 = vadd.f32 0.0, %v2865
        %v2867 = vpop.f32.mrf.mxu0
        %v2868 = vadd.f32 0.0, %v2867
        %2869 = vmatmul.bf16.gmra.mxu0 %v2787
        %v2870 = vpop.f32.mrf.mxu0
        %v2871 = vadd.f32 0.0, %v2870
        %v2872 = vpop.f32.mrf.mxu0
        %v2873 = vadd.f32 0.0, %v2872
        %2874 = vmatmul.bf16.gmra.mxu0 %v2790
        %v2875 = vpop.f32.mrf.mxu0
        %v2876 = vadd.f32 0.0, %v2875
        %v2877 = vpop.f32.mrf.mxu0
        %v2878 = vadd.f32 0.0, %v2877
        %2879 = vmatmul.bf16.gmra.mxu0 %v2793
        %v2880 = vpop.f32.mrf.mxu0
        %v2881 = vadd.f32 0.0, %v2880
        %v2882 = vpop.f32.mrf.mxu0
        %v2883 = vadd.f32 0.0, %v2882
        %2884 = vmatmul.bf16.gmra.mxu0 %v2796
        %v2885 = vpop.f32.mrf.mxu0
        %v2886 = vadd.f32 0.0, %v2885
        %v2887 = vpop.f32.mrf.mxu0
        %v2888 = vadd.f32 0.0, %v2887
        %2889 = vdwg.mxu0
        %v2890 = vadd.f32 %v2668, %v2811
        %v2891 = vadd.f32 %v2669, %v2813
        %v2892 = vadd.f32 %v2670, %v2816
        %v2893 = vadd.f32 %v2671, %v2818
        %v2894 = vadd.f32 %v2672, %v2821
        %v2895 = vadd.f32 %v2673, %v2823
        %v2896 = vadd.f32 %v2674, %v2826
        %v2897 = vadd.f32 %v2675, %v2828
        %v2898 = vadd.f32 %v2676, %v2831
        %v2899 = vadd.f32 %v2677, %v2833
        %v2900 = vadd.f32 %v2678, %v2836
        %v2901 = vadd.f32 %v2679, %v2838
        %v2902 = vadd.f32 %v2680, %v2841
        %v2903 = vadd.f32 %v2681, %v2843
        %v2904 = vadd.f32 %v2682, %v2846
        %v2905 = vadd.f32 %v2683, %v2848
        %v2906 = vadd.f32 %v2684, %v2851
        %v2907 = vadd.f32 %v2685, %v2853
        %v2908 = vadd.f32 %v2686, %v2856
        %v2909 = vadd.f32 %v2687, %v2858
        %v2910 = vadd.f32 %v2688, %v2861
        %v2911 = vadd.f32 %v2689, %v2863
        %v2912 = vadd.f32 %v2690, %v2866
        %v2913 = vadd.f32 %v2691, %v2868
        %v2914 = vadd.f32 %v2692, %v2871
        %v2915 = vadd.f32 %v2693, %v2873
        %v2916 = vadd.f32 %v2694, %v2876
        %v2917 = vadd.f32 %v2695, %v2878
        %v2918 = vadd.f32 %v2696, %v2881
        %v2919 = vadd.f32 %v2697, %v2883
        %v2920 = vadd.f32 %v2698, %v2886
        %v2921 = vadd.f32 %v2699, %v2888
        %s2922 = scalar_lea.vmem [#allocation2], 64
        %v2923 = vld [vmem:[%s2922 + $0x8] sm:$0xff]
        %v2924 = vld [vmem:[%s2922 + $0x10] sm:$0xff]
        %v2925 = vld [vmem:[%s2922 + $0x28] sm:$0xff]
        %v2926 = vld [vmem:[%s2922 + $0x30] sm:$0xff]
        %v2927 = vld [vmem:[%s2922 + $0x48] sm:$0xff]
        %v2928 = vld [vmem:[%s2922 + $0x50] sm:$0xff]
        %v2929 = vld [vmem:[%s2922 + $0x68] sm:$0xff]
        %v2930 = vld [vmem:[%s2922 + $0x70] sm:$0xff]
        %v2931 = vld [vmem:[%s2922 + $0x88] sm:$0xff]
        %v2932 = vld [vmem:[%s2922 + $0x90] sm:$0xff]
        %v2933 = vld [vmem:[%s2922 + $0xa8] sm:$0xff]
        %v2934 = vld [vmem:[%s2922 + $0xb0] sm:$0xff]
        %v2935 = vld [vmem:[%s2922 + $0xc8] sm:$0xff]
        %v2936 = vld [vmem:[%s2922 + $0xd0] sm:$0xff]
        %v2937 = vld [vmem:[%s2922 + $0xe8] sm:$0xff]
        %v2938 = vld [vmem:[%s2922 + $0xf0] sm:$0xff]
        %v2939 = vld [vmem:[%s2922 + $0x108] sm:$0xff]
        %v2940 = vld [vmem:[%s2922 + $0x110] sm:$0xff]
        %v2941 = vld [vmem:[%s2922 + $0x128] sm:$0xff]
        %v2942 = vld [vmem:[%s2922 + $0x130] sm:$0xff]
        %v2943 = vld [vmem:[%s2922 + $0x148] sm:$0xff]
        %v2944 = vld [vmem:[%s2922 + $0x150] sm:$0xff]
        %v2945 = vld [vmem:[%s2922 + $0x168] sm:$0xff]
        %v2946 = vld [vmem:[%s2922 + $0x170] sm:$0xff]
        %v2947 = vld [vmem:[%s2922 + $0x188] sm:$0xff]
        %v2948 = vld [vmem:[%s2922 + $0x190] sm:$0xff]
        %v2949 = vld [vmem:[%s2922 + $0x1a8] sm:$0xff]
        %v2950 = vld [vmem:[%s2922 + $0x1b0] sm:$0xff]
        %v2951 = vld [vmem:[%s2922 + $0x1c8] sm:$0xff]
        %v2952 = vld [vmem:[%s2922 + $0x1d0] sm:$0xff]
        %v2953 = vld [vmem:[%s2922 + $0x1e8] sm:$0xff]
        %v2954 = vld [vmem:[%s2922 + $0x1f0] sm:$0xff]
        %v2955 = vpack.c.bf16 %v2924, %v2923
        %v2956 = vpack.c.bf16 %v2926, %v2925
        %v2957 = vpack.c.bf16 %v2928, %v2927
        %v2958 = vpack.c.bf16 %v2930, %v2929
        %v2959 = vpack.c.bf16 %v2932, %v2931
        %v2960 = vpack.c.bf16 %v2934, %v2933
        %v2961 = vpack.c.bf16 %v2936, %v2935
        %v2962 = vpack.c.bf16 %v2938, %v2937
        %v2963 = vpack.c.bf16 %v2940, %v2939
        %v2964 = vpack.c.bf16 %v2942, %v2941
        %v2965 = vpack.c.bf16 %v2944, %v2943
        %v2966 = vpack.c.bf16 %v2946, %v2945
        %v2967 = vpack.c.bf16 %v2948, %v2947
        %v2968 = vpack.c.bf16 %v2950, %v2949
        %v2969 = vpack.c.bf16 %v2952, %v2951
        %v2970 = vpack.c.bf16 %v2954, %v2953
        %s2971 = scalar_lea.vmem %s5, 14
        %v2972 = vld [vmem:[%s2971] sm:$0x3]
        %v2974 = vsel %vm331, %v2955, 0
        %v2977 = vsel %vm331, %v2956, 0
        %v2980 = vsel %vm331, %v2957, 0
        %v2983 = vsel %vm331, %v2958, 0
        %v2986 = vsel %vm331, %v2959, 0
        %v2989 = vsel %vm331, %v2960, 0
        %v2992 = vsel %vm331, %v2961, 0
        %v2995 = vsel %vm331, %v2962, 0
        %v2998 = vsel %vm331, %v2963, 0
        %v3001 = vsel %vm331, %v2964, 0
        %v3004 = vsel %vm331, %v2965, 0
        %v3007 = vsel %vm331, %v2966, 0
        %v3010 = vsel %vm331, %v2967, 0
        %v3013 = vsel %vm331, %v2968, 0
        %v3016 = vsel %vm331, %v2969, 0
        %v3019 = vsel %vm331, %v2970, 0
        %v3022 = vsel %vm443, %v2972, 0
        %3024 = vmatpush.bf16.msra.mxu0 0
        %3025 = vmatpush.bf16.msra.mxu0 0
        %3026 = vmatpush.bf16.msra.mxu0 0
        %3027 = vmatpush.bf16.msra.mxu0 0
        %3028 = vmatpush.bf16.msra.mxu0 0
        %3029 = vmatpush.bf16.msra.mxu0 0
        %3030 = vmatpush.bf16.msra.mxu0 0
        %3031 = vmatpush.bf16.msra.mxu0 %v3022
        %3032 = vmatmul.bf16.gmra.mxu0 %v2974
        %v3033 = vpop.f32.mrf.mxu0
        %v3034 = vadd.f32 0.0, %v3033
        %v3035 = vpop.f32.mrf.mxu0
        %v3036 = vadd.f32 0.0, %v3035
        %3037 = vmatmul.bf16.gmra.mxu0 %v2977
        %v3038 = vpop.f32.mrf.mxu0
        %v3039 = vadd.f32 0.0, %v3038
        %v3040 = vpop.f32.mrf.mxu0
        %v3041 = vadd.f32 0.0, %v3040
        %3042 = vmatmul.bf16.gmra.mxu0 %v2980
        %v3043 = vpop.f32.mrf.mxu0
        %v3044 = vadd.f32 0.0, %v3043
        %v3045 = vpop.f32.mrf.mxu0
        %v3046 = vadd.f32 0.0, %v3045
        %3047 = vmatmul.bf16.gmra.mxu0 %v2983
        %v3048 = vpop.f32.mrf.mxu0
        %v3049 = vadd.f32 0.0, %v3048
        %v3050 = vpop.f32.mrf.mxu0
        %v3051 = vadd.f32 0.0, %v3050
        %3052 = vmatmul.bf16.gmra.mxu0 %v2986
        %v3053 = vpop.f32.mrf.mxu0
        %v3054 = vadd.f32 0.0, %v3053
        %v3055 = vpop.f32.mrf.mxu0
        %v3056 = vadd.f32 0.0, %v3055
        %3057 = vmatmul.bf16.gmra.mxu0 %v2989
        %v3058 = vpop.f32.mrf.mxu0
        %v3059 = vadd.f32 0.0, %v3058
        %v3060 = vpop.f32.mrf.mxu0
        %v3061 = vadd.f32 0.0, %v3060
        %3062 = vmatmul.bf16.gmra.mxu0 %v2992
        %v3063 = vpop.f32.mrf.mxu0
        %v3064 = vadd.f32 0.0, %v3063
        %v3065 = vpop.f32.mrf.mxu0
        %v3066 = vadd.f32 0.0, %v3065
        %3067 = vmatmul.bf16.gmra.mxu0 %v2995
        %v3068 = vpop.f32.mrf.mxu0
        %v3069 = vadd.f32 0.0, %v3068
        %v3070 = vpop.f32.mrf.mxu0
        %v3071 = vadd.f32 0.0, %v3070
        %3072 = vmatmul.bf16.gmra.mxu0 %v2998
        %v3073 = vpop.f32.mrf.mxu0
        %v3074 = vadd.f32 0.0, %v3073
        %v3075 = vpop.f32.mrf.mxu0
        %v3076 = vadd.f32 0.0, %v3075
        %3077 = vmatmul.bf16.gmra.mxu0 %v3001
        %v3078 = vpop.f32.mrf.mxu0
        %v3079 = vadd.f32 0.0, %v3078
        %v3080 = vpop.f32.mrf.mxu0
        %v3081 = vadd.f32 0.0, %v3080
        %3082 = vmatmul.bf16.gmra.mxu0 %v3004
        %v3083 = vpop.f32.mrf.mxu0
        %v3084 = vadd.f32 0.0, %v3083
        %v3085 = vpop.f32.mrf.mxu0
        %v3086 = vadd.f32 0.0, %v3085
        %3087 = vmatmul.bf16.gmra.mxu0 %v3007
        %v3088 = vpop.f32.mrf.mxu0
        %v3089 = vadd.f32 0.0, %v3088
        %v3090 = vpop.f32.mrf.mxu0
        %v3091 = vadd.f32 0.0, %v3090
        %3092 = vmatmul.bf16.gmra.mxu0 %v3010
        %v3093 = vpop.f32.mrf.mxu0
        %v3094 = vadd.f32 0.0, %v3093
        %v3095 = vpop.f32.mrf.mxu0
        %v3096 = vadd.f32 0.0, %v3095
        %3097 = vmatmul.bf16.gmra.mxu0 %v3013
        %v3098 = vpop.f32.mrf.mxu0
        %v3099 = vadd.f32 0.0, %v3098
        %v3100 = vpop.f32.mrf.mxu0
        %v3101 = vadd.f32 0.0, %v3100
        %3102 = vmatmul.bf16.gmra.mxu0 %v3016
        %v3103 = vpop.f32.mrf.mxu0
        %v3104 = vadd.f32 0.0, %v3103
        %v3105 = vpop.f32.mrf.mxu0
        %v3106 = vadd.f32 0.0, %v3105
        %3107 = vmatmul.bf16.gmra.mxu0 %v3019
        %v3108 = vpop.f32.mrf.mxu0
        %v3109 = vadd.f32 0.0, %v3108
        %v3110 = vpop.f32.mrf.mxu0
        %v3111 = vadd.f32 0.0, %v3110
        %3112 = vdwg.mxu0
        %v3113 = vadd.f32 %v2890, %v3034
        %v3114 = vadd.f32 %v2891, %v3036
        %v3115 = vadd.f32 %v2892, %v3039
        %v3116 = vadd.f32 %v2893, %v3041
        %v3117 = vadd.f32 %v2894, %v3044
        %v3118 = vadd.f32 %v2895, %v3046
        %v3119 = vadd.f32 %v2896, %v3049
        %v3120 = vadd.f32 %v2897, %v3051
        %v3121 = vadd.f32 %v2898, %v3054
        %v3122 = vadd.f32 %v2899, %v3056
        %v3123 = vadd.f32 %v2900, %v3059
        %v3124 = vadd.f32 %v2901, %v3061
        %v3125 = vadd.f32 %v2902, %v3064
        %v3126 = vadd.f32 %v2903, %v3066
        %v3127 = vadd.f32 %v2904, %v3069
        %v3128 = vadd.f32 %v2905, %v3071
        %v3129 = vadd.f32 %v2906, %v3074
        %v3130 = vadd.f32 %v2907, %v3076
        %v3131 = vadd.f32 %v2908, %v3079
        %v3132 = vadd.f32 %v2909, %v3081
        %v3133 = vadd.f32 %v2910, %v3084
        %v3134 = vadd.f32 %v2911, %v3086
        %v3135 = vadd.f32 %v2912, %v3089
        %v3136 = vadd.f32 %v2913, %v3091
        %v3137 = vadd.f32 %v2914, %v3094
        %v3138 = vadd.f32 %v2915, %v3096
        %v3139 = vadd.f32 %v2916, %v3099
        %v3140 = vadd.f32 %v2917, %v3101
        %v3141 = vadd.f32 %v2918, %v3104
        %v3142 = vadd.f32 %v2919, %v3106
        %v3143 = vadd.f32 %v2920, %v3109
        %v3144 = vadd.f32 %v2921, %v3111
        %v3145 = vrot.slane %v1929, 1
        %v3146 = vrot.slane %v1933, 1
        %v3147 = vrot.slane %v1937, 1
        %v3148 = vrot.slane %v1941, 1
        %v3149 = vrot.slane %v1945, 1
        %v3150 = vrot.slane %v1949, 1
        %v3151 = vrot.slane %v1953, 1
        %v3152 = vrot.slane %v1957, 1
        %v3153 = vrot.slane %v1961, 1
        %v3154 = vrot.slane %v1965, 1
        %v3155 = vrot.slane %v1969, 1
        %v3156 = vrot.slane %v1973, 1
        %v3157 = vrot.slane %v1977, 1
        %v3158 = vrot.slane %v1981, 1
        %v3159 = vrot.slane %v1985, 1
        %v3160 = vrot.slane %v1989, 1
        %v3161 = vrot.slane %v1993, 1
        %v3162 = vrot.slane %v1997, 1
        %v3163 = vrot.slane %v1930, 1
        %v3164 = vrot.slane %v1934, 1
        %v3165 = vrot.slane %v1938, 1
        %v3166 = vrot.slane %v1942, 1
        %v3167 = vrot.slane %v1946, 1
        %v3168 = vrot.slane %v1950, 1
        %v3169 = vrot.slane %v1954, 1
        %v3170 = vrot.slane %v1958, 1
        %v3171 = vrot.slane %v1962, 1
        %v3172 = vrot.slane %v1966, 1
        %v3173 = vrot.slane %v1970, 1
        %v3174 = vrot.slane %v1974, 1
        %v3175 = vrot.slane %v1978, 1
        %v3176 = vrot.slane %v1982, 1
        %v3177 = vrot.slane %v1986, 1
        %v3178 = vrot.slane %v1990, 1
        %v3179 = vrot.slane %v1994, 1
        %v3180 = vrot.slane %v1998, 1
        %v3181 = vrot.slane %v1931, 1
        %v3182 = vrot.slane %v1935, 1
        %v3183 = vrot.slane %v1939, 1
        %v3184 = vrot.slane %v1943, 1
        %v3185 = vrot.slane %v1947, 1
        %v3186 = vrot.slane %v1951, 1
        %v3187 = vrot.slane %v1955, 1
        %v3188 = vrot.slane %v1959, 1
        %v3189 = vrot.slane %v1963, 1
        %v3190 = vrot.slane %v1967, 1
        %v3191 = vrot.slane %v1971, 1
        %v3192 = vrot.slane %v1975, 1
        %v3193 = vrot.slane %v1979, 1
        %v3194 = vrot.slane %v1983, 1
        %v3195 = vrot.slane %v1987, 1
        %v3196 = vrot.slane %v1991, 1
        %v3197 = vrot.slane %v1995, 1
        %v3198 = vrot.slane %v1999, 1
        %vm3199 = vcmp.lt.s32.totalorder %v2055, 7
        %v3200 = vsel %vm3199, %v3163, %v3181
        %v3201 = vsel %vm3199, %v3164, %v3182
        %v3202 = vsel %vm3199, %v3165, %v3183
        %v3203 = vsel %vm3199, %v3166, %v3184
        %v3204 = vsel %vm3199, %v3167, %v3185
        %v3205 = vsel %vm3199, %v3168, %v3186
        %v3206 = vsel %vm3199, %v3169, %v3187
        %v3207 = vsel %vm3199, %v3170, %v3188
        %v3208 = vsel %vm3199, %v3171, %v3189
        %v3209 = vsel %vm3199, %v3172, %v3190
        %v3210 = vsel %vm3199, %v3173, %v3191
        %v3211 = vsel %vm3199, %v3174, %v3192
        %v3212 = vsel %vm3199, %v3175, %v3193
        %v3213 = vsel %vm3199, %v3176, %v3194
        %v3214 = vsel %vm3199, %v3177, %v3195
        %v3215 = vsel %vm3199, %v3178, %v3196
        %v3216 = vsel %vm3199, %v3179, %v3197
        %v3217 = vsel %vm3199, %v3180, %v3198
        %v3218 = vsel %vm3199, %v3145, %v3163
        %v3219 = vsel %vm3199, %v3146, %v3164
        %v3220 = vsel %vm3199, %v3147, %v3165
        %v3221 = vsel %vm3199, %v3148, %v3166
        %v3222 = vsel %vm3199, %v3149, %v3167
        %v3223 = vsel %vm3199, %v3150, %v3168
        %v3224 = vsel %vm3199, %v3151, %v3169
        %v3225 = vsel %vm3199, %v3152, %v3170
        %v3226 = vsel %vm3199, %v3153, %v3171
        %v3227 = vsel %vm3199, %v3154, %v3172
        %v3228 = vsel %vm3199, %v3155, %v3173
        %v3229 = vsel %vm3199, %v3156, %v3174
        %v3230 = vsel %vm3199, %v3157, %v3175
        %v3231 = vsel %vm3199, %v3158, %v3176
        %v3232 = vsel %vm3199, %v3159, %v3177
        %v3233 = vsel %vm3199, %v3160, %v3178
        %v3234 = vsel %vm3199, %v3161, %v3179
        %v3235 = vsel %vm3199, %v3162, %v3180
        %v3236 = vpack.c.bf16 %v3200, %v3218
        %v3237 = vpack.c.bf16 %v3201, %v3219
        %v3238 = vpack.c.bf16 %v3202, %v3220
        %v3239 = vpack.c.bf16 %v3203, %v3221
        %v3240 = vpack.c.bf16 %v3204, %v3222
        %v3241 = vpack.c.bf16 %v3205, %v3223
        %v3242 = vpack.c.bf16 %v3206, %v3224
        %v3243 = vpack.c.bf16 %v3207, %v3225
        %v3244 = vpack.c.bf16 %v3208, %v3226
        %v3245 = vpack.c.bf16 %v3209, %v3227
        %v3246 = vpack.c.bf16 %v3210, %v3228
        %v3247 = vpack.c.bf16 %v3211, %v3229
        %v3248 = vpack.c.bf16 %v3212, %v3230
        %v3249 = vpack.c.bf16 %v3213, %v3231
        %v3250 = vpack.c.bf16 %v3214, %v3232
        %v3251 = vpack.c.bf16 %v3215, %v3233
        %s3252 = scalar_lea.vmem %s5, 4
        %v3253 = vld [vmem:[%s3252] sm:$0x3]
        %v3255 = vsel %vm331, %v3236, 0
        %v3258 = vsel %vm331, %v3237, 0
        %v3261 = vsel %vm331, %v3238, 0
        %v3264 = vsel %vm331, %v3239, 0
        %v3267 = vsel %vm331, %v3240, 0
        %v3270 = vsel %vm331, %v3241, 0
        %v3273 = vsel %vm331, %v3242, 0
        %v3276 = vsel %vm331, %v3243, 0
        %v3279 = vsel %vm331, %v3244, 0
        %v3282 = vsel %vm331, %v3245, 0
        %v3285 = vsel %vm331, %v3246, 0
        %v3288 = vsel %vm331, %v3247, 0
        %v3291 = vsel %vm331, %v3248, 0
        %v3294 = vsel %vm331, %v3249, 0
        %v3297 = vsel %vm331, %v3250, 0
        %v3300 = vsel %vm331, %v3251, 0
        %v3303 = vsel %vm443, %v3253, 0
        %3305 = vmatpush.bf16.msra.mxu0 0
        %3306 = vmatpush.bf16.msra.mxu0 0
        %3307 = vmatpush.bf16.msra.mxu0 0
        %3308 = vmatpush.bf16.msra.mxu0 0
        %3309 = vmatpush.bf16.msra.mxu0 0
        %3310 = vmatpush.bf16.msra.mxu0 0
        %3311 = vmatpush.bf16.msra.mxu0 0
        %3312 = vmatpush.bf16.msra.mxu0 %v3303
        %3313 = vmatmul.bf16.gmra.mxu0 %v3255
        %v3314 = vpop.f32.mrf.mxu0
        %v3315 = vadd.f32 0.0, %v3314
        %v3316 = vpop.f32.mrf.mxu0
        %v3317 = vadd.f32 0.0, %v3316
        %3318 = vmatmul.bf16.gmra.mxu0 %v3258
        %v3319 = vpop.f32.mrf.mxu0
        %v3320 = vadd.f32 0.0, %v3319
        %v3321 = vpop.f32.mrf.mxu0
        %v3322 = vadd.f32 0.0, %v3321
        %3323 = vmatmul.bf16.gmra.mxu0 %v3261
        %v3324 = vpop.f32.mrf.mxu0
        %v3325 = vadd.f32 0.0, %v3324
        %v3326 = vpop.f32.mrf.mxu0
        %v3327 = vadd.f32 0.0, %v3326
        %3328 = vmatmul.bf16.gmra.mxu0 %v3264
        %v3329 = vpop.f32.mrf.mxu0
        %v3330 = vadd.f32 0.0, %v3329
        %v3331 = vpop.f32.mrf.mxu0
        %v3332 = vadd.f32 0.0, %v3331
        %3333 = vmatmul.bf16.gmra.mxu0 %v3267
        %v3334 = vpop.f32.mrf.mxu0
        %v3335 = vadd.f32 0.0, %v3334
        %v3336 = vpop.f32.mrf.mxu0
        %v3337 = vadd.f32 0.0, %v3336
        %3338 = vmatmul.bf16.gmra.mxu0 %v3270
        %v3339 = vpop.f32.mrf.mxu0
        %v3340 = vadd.f32 0.0, %v3339
        %v3341 = vpop.f32.mrf.mxu0
        %v3342 = vadd.f32 0.0, %v3341
        %3343 = vmatmul.bf16.gmra.mxu0 %v3273
        %v3344 = vpop.f32.mrf.mxu0
        %v3345 = vadd.f32 0.0, %v3344
        %v3346 = vpop.f32.mrf.mxu0
        %v3347 = vadd.f32 0.0, %v3346
        %3348 = vmatmul.bf16.gmra.mxu0 %v3276
        %v3349 = vpop.f32.mrf.mxu0
        %v3350 = vadd.f32 0.0, %v3349
        %v3351 = vpop.f32.mrf.mxu0
        %v3352 = vadd.f32 0.0, %v3351
        %3353 = vmatmul.bf16.gmra.mxu0 %v3279
        %v3354 = vpop.f32.mrf.mxu0
        %v3355 = vadd.f32 0.0, %v3354
        %v3356 = vpop.f32.mrf.mxu0
        %v3357 = vadd.f32 0.0, %v3356
        %3358 = vmatmul.bf16.gmra.mxu0 %v3282
        %v3359 = vpop.f32.mrf.mxu0
        %v3360 = vadd.f32 0.0, %v3359
        %v3361 = vpop.f32.mrf.mxu0
        %v3362 = vadd.f32 0.0, %v3361
        %3363 = vmatmul.bf16.gmra.mxu0 %v3285
        %v3364 = vpop.f32.mrf.mxu0
        %v3365 = vadd.f32 0.0, %v3364
        %v3366 = vpop.f32.mrf.mxu0
        %v3367 = vadd.f32 0.0, %v3366
        %3368 = vmatmul.bf16.gmra.mxu0 %v3288
        %v3369 = vpop.f32.mrf.mxu0
        %v3370 = vadd.f32 0.0, %v3369
        %v3371 = vpop.f32.mrf.mxu0
        %v3372 = vadd.f32 0.0, %v3371
        %3373 = vmatmul.bf16.gmra.mxu0 %v3291
        %v3374 = vpop.f32.mrf.mxu0
        %v3375 = vadd.f32 0.0, %v3374
        %v3376 = vpop.f32.mrf.mxu0
        %v3377 = vadd.f32 0.0, %v3376
        %3378 = vmatmul.bf16.gmra.mxu0 %v3294
        %v3379 = vpop.f32.mrf.mxu0
        %v3380 = vadd.f32 0.0, %v3379
        %v3381 = vpop.f32.mrf.mxu0
        %v3382 = vadd.f32 0.0, %v3381
        %3383 = vmatmul.bf16.gmra.mxu0 %v3297
        %v3384 = vpop.f32.mrf.mxu0
        %v3385 = vadd.f32 0.0, %v3384
        %v3386 = vpop.f32.mrf.mxu0
        %v3387 = vadd.f32 0.0, %v3386
        %3388 = vmatmul.bf16.gmra.mxu0 %v3300
        %v3389 = vpop.f32.mrf.mxu0
        %v3390 = vadd.f32 0.0, %v3389
        %v3391 = vpop.f32.mrf.mxu0
        %v3392 = vadd.f32 0.0, %v3391
        %3393 = vdwg.mxu0
        %v3394 = vadd.f32 %v3113, %v3315
        %v3395 = vadd.f32 %v3114, %v3317
        %v3396 = vadd.f32 %v3115, %v3320
        %v3397 = vadd.f32 %v3116, %v3322
        %v3398 = vadd.f32 %v3117, %v3325
        %v3399 = vadd.f32 %v3118, %v3327
        %v3400 = vadd.f32 %v3119, %v3330
        %v3401 = vadd.f32 %v3120, %v3332
        %v3402 = vadd.f32 %v3121, %v3335
        %v3403 = vadd.f32 %v3122, %v3337
        %v3404 = vadd.f32 %v3123, %v3340
        %v3405 = vadd.f32 %v3124, %v3342
        %v3406 = vadd.f32 %v3125, %v3345
        %v3407 = vadd.f32 %v3126, %v3347
        %v3408 = vadd.f32 %v3127, %v3350
        %v3409 = vadd.f32 %v3128, %v3352
        %v3410 = vadd.f32 %v3129, %v3355
        %v3411 = vadd.f32 %v3130, %v3357
        %v3412 = vadd.f32 %v3131, %v3360
        %v3413 = vadd.f32 %v3132, %v3362
        %v3414 = vadd.f32 %v3133, %v3365
        %v3415 = vadd.f32 %v3134, %v3367
        %v3416 = vadd.f32 %v3135, %v3370
        %v3417 = vadd.f32 %v3136, %v3372
        %v3418 = vadd.f32 %v3137, %v3375
        %v3419 = vadd.f32 %v3138, %v3377
        %v3420 = vadd.f32 %v3139, %v3380
        %v3421 = vadd.f32 %v3140, %v3382
        %v3422 = vadd.f32 %v3141, %v3385
        %v3423 = vadd.f32 %v3142, %v3387
        %v3424 = vadd.f32 %v3143, %v3390
        %v3425 = vadd.f32 %v3144, %v3392
        %v3426 = vpack.c.bf16 %v3216, %v3234
        %s3427 = scalar_lea.vmem %s5, 10
        %v3428 = vld [vmem:[%s3427] sm:$0x3]
        %v3430 = vsel %vm331, %v3426, 0
        %v3433 = vsel %vm443, %v3428, 0
        %3435 = vmatpush.bf16.msra.mxu0 0
        %3436 = vmatpush.bf16.msra.mxu0 0
        %3437 = vmatpush.bf16.msra.mxu0 0
        %3438 = vmatpush.bf16.msra.mxu0 0
        %3439 = vmatpush.bf16.msra.mxu0 0
        %3440 = vmatpush.bf16.msra.mxu0 0
        %3441 = vmatpush.bf16.msra.mxu0 0
        %3442 = vmatpush.bf16.msra.mxu0 %v3433
        %3443 = vmatmul.bf16.gmra.mxu0 %v3258
        %v3444 = vpop.f32.mrf.mxu0
        %v3445 = vadd.f32 0.0, %v3444
        %v3446 = vpop.f32.mrf.mxu0
        %v3447 = vadd.f32 0.0, %v3446
        %3448 = vmatmul.bf16.gmra.mxu0 %v3261
        %v3449 = vpop.f32.mrf.mxu0
        %v3450 = vadd.f32 0.0, %v3449
        %v3451 = vpop.f32.mrf.mxu0
        %v3452 = vadd.f32 0.0, %v3451
        %3453 = vmatmul.bf16.gmra.mxu0 %v3264
        %v3454 = vpop.f32.mrf.mxu0
        %v3455 = vadd.f32 0.0, %v3454
        %v3456 = vpop.f32.mrf.mxu0
        %v3457 = vadd.f32 0.0, %v3456
        %3458 = vmatmul.bf16.gmra.mxu0 %v3267
        %v3459 = vpop.f32.mrf.mxu0
        %v3460 = vadd.f32 0.0, %v3459
        %v3461 = vpop.f32.mrf.mxu0
        %v3462 = vadd.f32 0.0, %v3461
        %3463 = vmatmul.bf16.gmra.mxu0 %v3270
        %v3464 = vpop.f32.mrf.mxu0
        %v3465 = vadd.f32 0.0, %v3464
        %v3466 = vpop.f32.mrf.mxu0
        %v3467 = vadd.f32 0.0, %v3466
        %3468 = vmatmul.bf16.gmra.mxu0 %v3273
        %v3469 = vpop.f32.mrf.mxu0
        %v3470 = vadd.f32 0.0, %v3469
        %v3471 = vpop.f32.mrf.mxu0
        %v3472 = vadd.f32 0.0, %v3471
        %3473 = vmatmul.bf16.gmra.mxu0 %v3276
        %v3474 = vpop.f32.mrf.mxu0
        %v3475 = vadd.f32 0.0, %v3474
        %v3476 = vpop.f32.mrf.mxu0
        %v3477 = vadd.f32 0.0, %v3476
        %3478 = vmatmul.bf16.gmra.mxu0 %v3279
        %v3479 = vpop.f32.mrf.mxu0
        %v3480 = vadd.f32 0.0, %v3479
        %v3481 = vpop.f32.mrf.mxu0
        %v3482 = vadd.f32 0.0, %v3481
        %3483 = vmatmul.bf16.gmra.mxu0 %v3282
        %v3484 = vpop.f32.mrf.mxu0
        %v3485 = vadd.f32 0.0, %v3484
        %v3486 = vpop.f32.mrf.mxu0
        %v3487 = vadd.f32 0.0, %v3486
        %3488 = vmatmul.bf16.gmra.mxu0 %v3285
        %v3489 = vpop.f32.mrf.mxu0
        %v3490 = vadd.f32 0.0, %v3489
        %v3491 = vpop.f32.mrf.mxu0
        %v3492 = vadd.f32 0.0, %v3491
        %3493 = vmatmul.bf16.gmra.mxu0 %v3288
        %v3494 = vpop.f32.mrf.mxu0
        %v3495 = vadd.f32 0.0, %v3494
        %v3496 = vpop.f32.mrf.mxu0
        %v3497 = vadd.f32 0.0, %v3496
        %3498 = vmatmul.bf16.gmra.mxu0 %v3291
        %v3499 = vpop.f32.mrf.mxu0
        %v3500 = vadd.f32 0.0, %v3499
        %v3501 = vpop.f32.mrf.mxu0
        %v3502 = vadd.f32 0.0, %v3501
        %3503 = vmatmul.bf16.gmra.mxu0 %v3294
        %v3504 = vpop.f32.mrf.mxu0
        %v3505 = vadd.f32 0.0, %v3504
        %v3506 = vpop.f32.mrf.mxu0
        %v3507 = vadd.f32 0.0, %v3506
        %3508 = vmatmul.bf16.gmra.mxu0 %v3297
        %v3509 = vpop.f32.mrf.mxu0
        %v3510 = vadd.f32 0.0, %v3509
        %v3511 = vpop.f32.mrf.mxu0
        %v3512 = vadd.f32 0.0, %v3511
        %3513 = vmatmul.bf16.gmra.mxu0 %v3300
        %v3514 = vpop.f32.mrf.mxu0
        %v3515 = vadd.f32 0.0, %v3514
        %v3516 = vpop.f32.mrf.mxu0
        %v3517 = vadd.f32 0.0, %v3516
        %3518 = vmatmul.bf16.gmra.mxu0 %v3430
        %v3519 = vpop.f32.mrf.mxu0
        %v3520 = vadd.f32 0.0, %v3519
        %v3521 = vpop.f32.mrf.mxu0
        %v3522 = vadd.f32 0.0, %v3521
        %3523 = vdwg.mxu0
        %v3524 = vadd.f32 %v3394, %v3445
        %v3525 = vadd.f32 %v3395, %v3447
        %v3526 = vadd.f32 %v3396, %v3450
        %v3527 = vadd.f32 %v3397, %v3452
        %v3528 = vadd.f32 %v3398, %v3455
        %v3529 = vadd.f32 %v3399, %v3457
        %v3530 = vadd.f32 %v3400, %v3460
        %v3531 = vadd.f32 %v3401, %v3462
        %v3532 = vadd.f32 %v3402, %v3465
        %v3533 = vadd.f32 %v3403, %v3467
        %v3534 = vadd.f32 %v3404, %v3470
        %v3535 = vadd.f32 %v3405, %v3472
        %v3536 = vadd.f32 %v3406, %v3475
        %v3537 = vadd.f32 %v3407, %v3477
        %v3538 = vadd.f32 %v3408, %v3480
        %v3539 = vadd.f32 %v3409, %v3482
        %v3540 = vadd.f32 %v3410, %v3485
        %v3541 = vadd.f32 %v3411, %v3487
        %v3542 = vadd.f32 %v3412, %v3490
        %v3543 = vadd.f32 %v3413, %v3492
        %v3544 = vadd.f32 %v3414, %v3495
        %v3545 = vadd.f32 %v3415, %v3497
        %v3546 = vadd.f32 %v3416, %v3500
        %v3547 = vadd.f32 %v3417, %v3502
        %v3548 = vadd.f32 %v3418, %v3505
        %v3549 = vadd.f32 %v3419, %v3507
        %v3550 = vadd.f32 %v3420, %v3510
        %v3551 = vadd.f32 %v3421, %v3512
        %v3552 = vadd.f32 %v3422, %v3515
        %v3553 = vadd.f32 %v3423, %v3517
        %v3554 = vadd.f32 %v3424, %v3520
        %v3555 = vadd.f32 %v3425, %v3522
        %v3556 = vpack.c.bf16 %v3217, %v3235
        %s3557 = scalar_lea.vmem %s5, 16
        %v3558 = vld [vmem:[%s3557] sm:$0x3]
        %v3560 = vsel %vm331, %v3556, 0
        %v3563 = vsel %vm443, %v3558, 0
        %3565 = vmatpush.bf16.msra.mxu0 0
        %3566 = vmatpush.bf16.msra.mxu0 0
        %3567 = vmatpush.bf16.msra.mxu0 0
        %3568 = vmatpush.bf16.msra.mxu0 0
        %3569 = vmatpush.bf16.msra.mxu0 0
        %3570 = vmatpush.bf16.msra.mxu0 0
        %3571 = vmatpush.bf16.msra.mxu0 0
        %3572 = vmatpush.bf16.msra.mxu0 %v3563
        %3573 = vmatmul.bf16.gmra.mxu0 %v3261
        %v3574 = vpop.f32.mrf.mxu0
        %v3575 = vadd.f32 0.0, %v3574
        %v3576 = vpop.f32.mrf.mxu0
        %v3577 = vadd.f32 0.0, %v3576
        %3578 = vmatmul.bf16.gmra.mxu0 %v3264
        %v3579 = vpop.f32.mrf.mxu0
        %v3580 = vadd.f32 0.0, %v3579
        %v3581 = vpop.f32.mrf.mxu0
        %v3582 = vadd.f32 0.0, %v3581
        %3583 = vmatmul.bf16.gmra.mxu0 %v3267
        %v3584 = vpop.f32.mrf.mxu0
        %v3585 = vadd.f32 0.0, %v3584
        %v3586 = vpop.f32.mrf.mxu0
        %v3587 = vadd.f32 0.0, %v3586
        %3588 = vmatmul.bf16.gmra.mxu0 %v3270
        %v3589 = vpop.f32.mrf.mxu0
        %v3590 = vadd.f32 0.0, %v3589
        %v3591 = vpop.f32.mrf.mxu0
        %v3592 = vadd.f32 0.0, %v3591
        %3593 = vmatmul.bf16.gmra.mxu0 %v3273
        %v3594 = vpop.f32.mrf.mxu0
        %v3595 = vadd.f32 0.0, %v3594
        %v3596 = vpop.f32.mrf.mxu0
        %v3597 = vadd.f32 0.0, %v3596
        %3598 = vmatmul.bf16.gmra.mxu0 %v3276
        %v3599 = vpop.f32.mrf.mxu0
        %v3600 = vadd.f32 0.0, %v3599
        %v3601 = vpop.f32.mrf.mxu0
        %v3602 = vadd.f32 0.0, %v3601
        %3603 = vmatmul.bf16.gmra.mxu0 %v3279
        %v3604 = vpop.f32.mrf.mxu0
        %v3605 = vadd.f32 0.0, %v3604
        %v3606 = vpop.f32.mrf.mxu0
        %v3607 = vadd.f32 0.0, %v3606
        %3608 = vmatmul.bf16.gmra.mxu0 %v3282
        %v3609 = vpop.f32.mrf.mxu0
        %v3610 = vadd.f32 0.0, %v3609
        %v3611 = vpop.f32.mrf.mxu0
        %v3612 = vadd.f32 0.0, %v3611
        %3613 = vmatmul.bf16.gmra.mxu0 %v3285
        %v3614 = vpop.f32.mrf.mxu0
        %v3615 = vadd.f32 0.0, %v3614
        %v3616 = vpop.f32.mrf.mxu0
        %v3617 = vadd.f32 0.0, %v3616
        %3618 = vmatmul.bf16.gmra.mxu0 %v3288
        %v3619 = vpop.f32.mrf.mxu0
        %v3620 = vadd.f32 0.0, %v3619
        %v3621 = vpop.f32.mrf.mxu0
        %v3622 = vadd.f32 0.0, %v3621
        %3623 = vmatmul.bf16.gmra.mxu0 %v3291
        %v3624 = vpop.f32.mrf.mxu0
        %v3625 = vadd.f32 0.0, %v3624
        %v3626 = vpop.f32.mrf.mxu0
        %v3627 = vadd.f32 0.0, %v3626
        %3628 = vmatmul.bf16.gmra.mxu0 %v3294
        %v3629 = vpop.f32.mrf.mxu0
        %v3630 = vadd.f32 0.0, %v3629
        %v3631 = vpop.f32.mrf.mxu0
        %v3632 = vadd.f32 0.0, %v3631
        %3633 = vmatmul.bf16.gmra.mxu0 %v3297
        %v3634 = vpop.f32.mrf.mxu0
        %v3635 = vadd.f32 0.0, %v3634
        %v3636 = vpop.f32.mrf.mxu0
        %v3637 = vadd.f32 0.0, %v3636
        %3638 = vmatmul.bf16.gmra.mxu0 %v3300
        %v3639 = vpop.f32.mrf.mxu0
        %v3640 = vadd.f32 0.0, %v3639
        %v3641 = vpop.f32.mrf.mxu0
        %v3642 = vadd.f32 0.0, %v3641
        %3643 = vmatmul.bf16.gmra.mxu0 %v3430
        %v3644 = vpop.f32.mrf.mxu0
        %v3645 = vadd.f32 0.0, %v3644
        %v3646 = vpop.f32.mrf.mxu0
        %v3647 = vadd.f32 0.0, %v3646
        %3648 = vmatmul.bf16.gmra.mxu0 %v3560
        %v3649 = vpop.f32.mrf.mxu0
        %v3650 = vadd.f32 0.0, %v3649
        %v3651 = vpop.f32.mrf.mxu0
        %v3652 = vadd.f32 0.0, %v3651
        %3653 = vdwg.mxu0
        %v3654 = vadd.f32 %v3524, %v3575
        %v3655 = vadd.f32 %v3525, %v3577
        %v3656 = vadd.f32 %v3526, %v3580
        %v3657 = vadd.f32 %v3527, %v3582
        %v3658 = vadd.f32 %v3528, %v3585
        %v3659 = vadd.f32 %v3529, %v3587
        %v3660 = vadd.f32 %v3530, %v3590
        %v3661 = vadd.f32 %v3531, %v3592
        %v3662 = vadd.f32 %v3532, %v3595
        %v3663 = vadd.f32 %v3533, %v3597
        %v3664 = vadd.f32 %v3534, %v3600
        %v3665 = vadd.f32 %v3535, %v3602
        %v3666 = vadd.f32 %v3536, %v3605
        %v3667 = vadd.f32 %v3537, %v3607
        %v3668 = vadd.f32 %v3538, %v3610
        %v3669 = vadd.f32 %v3539, %v3612
        %v3670 = vadd.f32 %v3540, %v3615
        %v3671 = vadd.f32 %v3541, %v3617
        %v3672 = vadd.f32 %v3542, %v3620
        %v3673 = vadd.f32 %v3543, %v3622
        %v3674 = vadd.f32 %v3544, %v3625
        %v3675 = vadd.f32 %v3545, %v3627
        %v3676 = vadd.f32 %v3546, %v3630
        %v3677 = vadd.f32 %v3547, %v3632
        %v3678 = vadd.f32 %v3548, %v3635
        %v3679 = vadd.f32 %v3549, %v3637
        %v3680 = vadd.f32 %v3550, %v3640
        %v3681 = vadd.f32 %v3551, %v3642
        %v3682 = vadd.f32 %v3552, %v3645
        %v3683 = vadd.f32 %v3553, %v3647
        %v3684 = vadd.f32 %v3554, %v3650
        %v3685 = vadd.f32 %v3555, %v3652
        %v3686 = vld [vmem:[%s314] sm:$0xff]
        %v3687 = vld [vmem:[%s314 + $0x8] sm:$0xff]
        %v3688 = vld [vmem:[%s314 + $0x10] sm:$0xff]
        %v3689 = vld [vmem:[%s314 + $0x18] sm:$0xff]
        %v3690 = vld [vmem:[%s314 + $0x20] sm:$0xff]
        %v3691 = vld [vmem:[%s314 + $0x28] sm:$0xff]
        %v3692 = vld [vmem:[%s314 + $0x30] sm:$0xff]
        %v3693 = vld [vmem:[%s314 + $0x38] sm:$0xff]
        %v3694 = vld [vmem:[%s314 + $0x40] sm:$0xff]
        %v3695 = vld [vmem:[%s314 + $0x48] sm:$0xff]
        %v3696 = vld [vmem:[%s314 + $0x50] sm:$0xff]
        %v3697 = vld [vmem:[%s314 + $0x58] sm:$0xff]
        %v3698 = vld [vmem:[%s314 + $0x60] sm:$0xff]
        %v3699 = vld [vmem:[%s314 + $0x68] sm:$0xff]
        %v3700 = vld [vmem:[%s314 + $0x70] sm:$0xff]
        %v3701 = vld [vmem:[%s314 + $0x78] sm:$0xff]
        %v3702 = vld [vmem:[%s314 + $0x80] sm:$0xff]
        %v3703 = vld [vmem:[%s314 + $0x88] sm:$0xff]
        %v3704 = vld [vmem:[%s314 + $0x90] sm:$0xff]
        %v3705 = vld [vmem:[%s314 + $0x98] sm:$0xff]
        %v3706 = vld [vmem:[%s314 + $0xa0] sm:$0xff]
        %v3707 = vld [vmem:[%s314 + $0xa8] sm:$0xff]
        %v3708 = vld [vmem:[%s314 + $0xb0] sm:$0xff]
        %v3709 = vld [vmem:[%s314 + $0xb8] sm:$0xff]
        %v3710 = vld [vmem:[%s314 + $0xc0] sm:$0xff]
        %v3711 = vld [vmem:[%s314 + $0xc8] sm:$0xff]
        %v3712 = vld [vmem:[%s314 + $0xd0] sm:$0xff]
        %v3713 = vld [vmem:[%s314 + $0xd8] sm:$0xff]
        %v3714 = vld [vmem:[%s314 + $0xe0] sm:$0xff]
        %v3715 = vld [vmem:[%s314 + $0xe8] sm:$0xff]
        %v3716 = vld [vmem:[%s314 + $0xf0] sm:$0xff]
        %v3717 = vld [vmem:[%s314 + $0xf8] sm:$0xff]
        %v3718 = vld [vmem:[%s6] sm:$0x1]
        %v3720 = vperm.slane %v3718, 0
        %v3722 = vadd.f32 %v3654, %v3720
        %v3723 = vadd.f32 %v3655, %v3720
        %v3724 = vadd.f32 %v3656, %v3720
        %v3725 = vadd.f32 %v3657, %v3720
        %v3726 = vadd.f32 %v3658, %v3720
        %v3727 = vadd.f32 %v3659, %v3720
        %v3728 = vadd.f32 %v3660, %v3720
        %v3729 = vadd.f32 %v3661, %v3720
        %v3730 = vadd.f32 %v3662, %v3720
        %v3731 = vadd.f32 %v3663, %v3720
        %v3732 = vadd.f32 %v3664, %v3720
        %v3733 = vadd.f32 %v3665, %v3720
        %v3734 = vadd.f32 %v3666, %v3720
        %v3735 = vadd.f32 %v3667, %v3720
        %v3736 = vadd.f32 %v3668, %v3720
        %v3737 = vadd.f32 %v3669, %v3720
        %v3738 = vadd.f32 %v3670, %v3720
        %v3739 = vadd.f32 %v3671, %v3720
        %v3740 = vadd.f32 %v3672, %v3720
        %v3741 = vadd.f32 %v3673, %v3720
        %v3742 = vadd.f32 %v3674, %v3720
        %v3743 = vadd.f32 %v3675, %v3720
        %v3744 = vadd.f32 %v3676, %v3720
        %v3745 = vadd.f32 %v3677, %v3720
        %v3746 = vadd.f32 %v3678, %v3720
        %v3747 = vadd.f32 %v3679, %v3720
        %v3748 = vadd.f32 %v3680, %v3720
        %v3749 = vadd.f32 %v3681, %v3720
        %v3750 = vadd.f32 %v3682, %v3720
        %v3751 = vadd.f32 %v3683, %v3720
        %v3752 = vadd.f32 %v3684, %v3720
        %v3753 = vadd.f32 %v3685, %v3720
        %v3754 = vadd.f32 %v3722, %v3686
        %v3755 = vadd.f32 %v3723, %v3687
        %v3756 = vadd.f32 %v3724, %v3688
        %v3757 = vadd.f32 %v3725, %v3689
        %v3758 = vadd.f32 %v3726, %v3690
        %v3759 = vadd.f32 %v3727, %v3691
        %v3760 = vadd.f32 %v3728, %v3692
        %v3761 = vadd.f32 %v3729, %v3693
        %v3762 = vadd.f32 %v3730, %v3694
        %v3763 = vadd.f32 %v3731, %v3695
        %v3764 = vadd.f32 %v3732, %v3696
        %v3765 = vadd.f32 %v3733, %v3697
        %v3766 = vadd.f32 %v3734, %v3698
        %v3767 = vadd.f32 %v3735, %v3699
        %v3768 = vadd.f32 %v3736, %v3700
        %v3769 = vadd.f32 %v3737, %v3701
        %v3770 = vadd.f32 %v3738, %v3702
        %v3771 = vadd.f32 %v3739, %v3703
        %v3772 = vadd.f32 %v3740, %v3704
        %v3773 = vadd.f32 %v3741, %v3705
        %v3774 = vadd.f32 %v3742, %v3706
        %v3775 = vadd.f32 %v3743, %v3707
        %v3776 = vadd.f32 %v3744, %v3708
        %v3777 = vadd.f32 %v3745, %v3709
        %v3778 = vadd.f32 %v3746, %v3710
        %v3779 = vadd.f32 %v3747, %v3711
        %v3780 = vadd.f32 %v3748, %v3712
        %v3781 = vadd.f32 %v3749, %v3713
        %v3782 = vadd.f32 %v3750, %v3714
        %v3783 = vadd.f32 %v3751, %v3715
        %v3784 = vadd.f32 %v3752, %v3716
        %v3785 = vadd.f32 %v3753, %v3717
        %v3786 = vmax.f32 %v3754, 0.0
        %v3787 = vmax.f32 %v3755, 0.0
        %v3788 = vmax.f32 %v3756, 0.0
        %v3789 = vmax.f32 %v3757, 0.0
        %v3790 = vmax.f32 %v3758, 0.0
        %v3791 = vmax.f32 %v3759, 0.0
        %v3792 = vmax.f32 %v3760, 0.0
        %v3793 = vmax.f32 %v3761, 0.0
        %v3794 = vmax.f32 %v3762, 0.0
        %v3795 = vmax.f32 %v3763, 0.0
        %v3796 = vmax.f32 %v3764, 0.0
        %v3797 = vmax.f32 %v3765, 0.0
        %v3798 = vmax.f32 %v3766, 0.0
        %v3799 = vmax.f32 %v3767, 0.0
        %v3800 = vmax.f32 %v3768, 0.0
        %v3801 = vmax.f32 %v3769, 0.0
        %v3802 = vmax.f32 %v3770, 0.0
        %v3803 = vmax.f32 %v3771, 0.0
        %v3804 = vmax.f32 %v3772, 0.0
        %v3805 = vmax.f32 %v3773, 0.0
        %v3806 = vmax.f32 %v3774, 0.0
        %v3807 = vmax.f32 %v3775, 0.0
        %v3808 = vmax.f32 %v3776, 0.0
        %v3809 = vmax.f32 %v3777, 0.0
        %v3810 = vmax.f32 %v3778, 0.0
        %v3811 = vmax.f32 %v3779, 0.0
        %v3812 = vmax.f32 %v3780, 0.0
        %v3813 = vmax.f32 %v3781, 0.0
        %v3814 = vmax.f32 %v3782, 0.0
        %v3815 = vmax.f32 %v3783, 0.0
        %v3816 = vmax.f32 %v3784, 0.0
        %v3817 = vmax.f32 %v3785, 0.0
        %3818 = vst.msk [vmem:[%s319] sm:$0xff] %vm331, %v3786
        %3819 = vst.msk [vmem:[%s319 + $0x8] sm:$0xff] %vm331, %v3787
        %3820 = vst.msk [vmem:[%s319 + $0x10] sm:$0xff] %vm331, %v3788
        %3821 = vst.msk [vmem:[%s319 + $0x18] sm:$0xff] %vm331, %v3789
        %3822 = vst.msk [vmem:[%s319 + $0x20] sm:$0xff] %vm331, %v3790
        %3823 = vst.msk [vmem:[%s319 + $0x28] sm:$0xff] %vm331, %v3791
        %3824 = vst.msk [vmem:[%s319 + $0x30] sm:$0xff] %vm331, %v3792
        %3825 = vst.msk [vmem:[%s319 + $0x38] sm:$0xff] %vm331, %v3793
        %3826 = vst.msk [vmem:[%s319 + $0x40] sm:$0xff] %vm331, %v3794
        %3827 = vst.msk [vmem:[%s319 + $0x48] sm:$0xff] %vm331, %v3795
        %3828 = vst.msk [vmem:[%s319 + $0x50] sm:$0xff] %vm331, %v3796
        %3829 = vst.msk [vmem:[%s319 + $0x58] sm:$0xff] %vm331, %v3797
        %3830 = vst.msk [vmem:[%s319 + $0x60] sm:$0xff] %vm331, %v3798
        %3831 = vst.msk [vmem:[%s319 + $0x68] sm:$0xff] %vm331, %v3799
        %3832 = vst.msk [vmem:[%s319 + $0x70] sm:$0xff] %vm331, %v3800
        %3833 = vst.msk [vmem:[%s319 + $0x78] sm:$0xff] %vm331, %v3801
        %3834 = vst.msk [vmem:[%s319 + $0x80] sm:$0xff] %vm331, %v3802
        %3835 = vst.msk [vmem:[%s319 + $0x88] sm:$0xff] %vm331, %v3803
        %3836 = vst.msk [vmem:[%s319 + $0x90] sm:$0xff] %vm331, %v3804
        %3837 = vst.msk [vmem:[%s319 + $0x98] sm:$0xff] %vm331, %v3805
        %3838 = vst.msk [vmem:[%s319 + $0xa0] sm:$0xff] %vm331, %v3806
        %3839 = vst.msk [vmem:[%s319 + $0xa8] sm:$0xff] %vm331, %v3807
        %3840 = vst.msk [vmem:[%s319 + $0xb0] sm:$0xff] %vm331, %v3808
        %3841 = vst.msk [vmem:[%s319 + $0xb8] sm:$0xff] %vm331, %v3809
        %3842 = vst.msk [vmem:[%s319 + $0xc0] sm:$0xff] %vm331, %v3810
        %3843 = vst.msk [vmem:[%s319 + $0xc8] sm:$0xff] %vm331, %v3811
        %3844 = vst.msk [vmem:[%s319 + $0xd0] sm:$0xff] %vm331, %v3812
        %3845 = vst.msk [vmem:[%s319 + $0xd8] sm:$0xff] %vm331, %v3813
        %3846 = vst.msk [vmem:[%s319 + $0xe0] sm:$0xff] %vm331, %v3814
        %3847 = vst.msk [vmem:[%s319 + $0xe8] sm:$0xff] %vm331, %v3815
        %3848 = vst.msk [vmem:[%s319 + $0xf0] sm:$0xff] %vm331, %v3816
        %3849 = vst.msk [vmem:[%s319 + $0xf8] sm:$0xff] %vm331, %v3817
        %p3850 = scmp.lt.s32.totalorder %s20, 1
        %s3851 = scalar_select %p3850, %s20, 1
        %s3852 = smul.addr %s3851, 32
        %s3853 = smul.addr %s3852, 8
        %s3854 = scalar_lea.vmem %s8, %s3853
        // Predicated region
        $region57: #{agcb_patch_forward.1} parent=51 // pred_check
          %p3855 = pneg %p211
        $region58: #{agcb_patch_forward.1} parent=51 // pred_check_branch
          %3857 = sbr.rel (%p3855) target = $region60
        $region59: #{agcb_patch_forward.1} parent=51 // pred_region
          _
        $region60: #{agcb_patch_forward.1} parent=51 // pred_fallthru
          _
      $region52: #{agcb_patch_forward.1} parent=5 // pred_fallthru
        _
      %p3858 = scmp.le.s32.totalorder 2, %s15
      // Predicated region
      $region61: #{agcb_patch_forward.1} parent=5 // pred_check
        %p3859 = pneg %p3858
      $region62: #{agcb_patch_forward.1} parent=5 // pred_check_branch
        %3861 = sbr.rel (%p3859) target = $region64
      $region63: #{agcb_patch_forward.1} parent=5 // pred_region
        %s3862 = ssub.s32 %s15, 2
        // Predicated region
        $region65: #{agcb_patch_forward.1} parent=63 // pred_check
          %p3863 = pneg %p217
        $region66: #{agcb_patch_forward.1} parent=63 // pred_check_branch
          %3865 = sbr.rel (%p3863) target = $region68
        $region67: #{agcb_patch_forward.1} parent=63 // pred_region
          %p3866 = scmp.lt.s32.totalorder %s21, 1
          %s3867 = scalar_select %p3866, %s21, 1
          %s3868 = smul.addr %s3867, 32
          %s3869 = smul.addr %s3868, 8
          %s3870 = scalar_lea.vmem %s8, %s3869
        $region68: #{agcb_patch_forward.1} parent=63 // pred_fallthru
          _
      $region64: #{agcb_patch_forward.1} parent=5 // pred_fallthru
        _
    $region6: #{agcb_patch_forward.1} parent=1 // loop_footer
      %s19 = sadd.s32 1, %s15
    $region7: #{agcb_patch_forward.1} parent=1 // loop_footer_branch
      %14 = sbr.rel target = $region3
    $region8: #{agcb_patch_forward.1} parent=1 // loop_exit
      _
    %3871 = vsyncpa [#allocation4], 1
    %s3872 = scalar_lea.sflag [#allocation4], 1
    %3873 = vsyncpa %s3872, 1

</llo_original>
